<compile_context>
chip_gen: v5e
topology: v5e:2x2
jax: 0.10.0
libtpu: 0.0.40
codegen_flags: <defaults>
</compile_context>

<pallas_src>
import functools
import math

import jax
import jax.numpy as jnp
from jax import lax
from jax.experimental import pallas as pl
from jax.experimental.pallas import tpu as pltpu


def _round_up(x, m):
    return ((x + m - 1) // m) * m


def _conv_stats_kernel(x_ref, mask_ref, w_ref, conv_ref, sum_ref, sq_ref, acc_ref,
                       *, tap_offsets, cinp, tm, img_rows):
    """Implicit-im2col conv tile + fused per-channel sum / sum-of-squares.

    Grid: (N, Hh).  Axis 0 ("parallel") = image, axis 1 ("arbitrary") = h-tile.
      x_ref    : (Rx, Cinp)      f32  whole padded input, VMEM-resident (constant block)
      mask_ref : (tm, 1)         f32  1.0 on valid output rows of this tile
      w_ref    : (T*Cinp, Cout)  f32  per-tap weights, VMEM-resident
      conv_ref : (Cout, tm)      bf16 channel-major conv tile (lane-dense store)
      sum_ref  : (8, Cout)       f32  per-image partial channel sums (sublane partials)
      sq_ref   : (8, Cout)       f32  per-image partial channel sum of squares
      acc_ref  : (tm, Cout)      f32  scratch accumulator
    """
    n = pl.program_id(0)
    j = pl.program_id(1)
    # img_rows % 8 == 0 and tm % 128 == 0, so the base row offset is 8-aligned.
    base = pl.multiple_of(n * img_rows + j * tm, 8)

    acc_ref[...] = jnp.zeros_like(acc_ref)
    for t, off in enumerate(tap_offsets):                    # static unroll over KH*KW taps
        xs = x_ref[pl.ds(base + off, tm), :]                  # (tm, Cinp) f32
        wt = w_ref[pl.ds(t * cinp, cinp), :]                  # (Cinp, Cout) f32
        acc_ref[...] += jnp.dot(xs, wt, preferred_element_type=jnp.float32)

    acc = acc_ref[...]                                        # (tm, Cout) f32
    conv_ref[...] = acc.T.astype(conv_ref.dtype)              # channel-major, lane-dense

    @pl.when(j == 0)
    def _():
        sum_ref[...] = jnp.zeros_like(sum_ref)
        sq_ref[...] = jnp.zeros_like(sq_ref)

    masked = acc * mask_ref[...]                              # zero out garbage rows
    mr = masked.reshape(tm // 8, 8, masked.shape[-1])         # sublane-shaped partials
    sum_ref[...] += jnp.sum(mr, axis=0)
    sq_ref[...] += jnp.sum(mr * mr, axis=0)


def _bn_act_kernel(y_ref, scale_ref, shift_ref, o_ref, *, oh, ow, activation):
    """Per image: strip padded rows/cols, y*scale + shift (+ ReLU), write NCHW block."""
    v = y_ref[...]                                            # (Cout, 1, Hop, Wq) bf16
    v = v[:, 0, :oh, :ow].astype(jnp.float32)                 # (Cout, OH, OW)
    v = v * scale_ref[...] + shift_ref[...]                   # per-channel affine
    if activation:
        v = jnp.maximum(v, 0.0)
    o_ref[0] = v.astype(o_ref.dtype)


def bn_conv2d_forward(x, weight, gamma, beta, *, stride, padding, dilation=1,
                      eps=1e-5, activation=True, out_dtype=jnp.bfloat16):
    """Forward of BN_Conv2d (bias=False, groups=1) in training mode (batch stats)."""
    # TODO(synk): groups > 1 and conv bias are not implemented (module defaults used).
    # TODO(synk): BatchNorm2d running_mean / running_var side effects are not updated.
    # TODO(synk): the fused implicit-im2col path requires stride == 1.
    assert stride == 1, "fused implicit-im2col kernel currently supports stride == 1 only"
    N, Cin, H, W = x.shape
    Cout, w_cin, KH, KW = weight.shape
    assert w_cin == Cin, "groups != 1 not supported"
    OH = (H + 2 * padding - dilation * (KH - 1) - 1) // stride + 1
    OW = (W + 2 * padding - dilation * (KW - 1) - 1) // stride + 1

    # --- padded geometry: a shared "virtual" row width Wq for input and output rows ---
    Wq = _round_up(W + 2 * padding, 8)           # virtual row width (extra cols = garbage)
    assert dilation * (KW - 1) < Wq
    th0 = 128 // math.gcd(Wq, 128)               # smallest h-tile giving tm % 128 == 0
    k = max(1, min(1024 // (th0 * Wq) if th0 * Wq > 0 else 1, (OH + th0 - 1) // th0))
    th = th0 * k                                 # output rows per tile
    Hop = _round_up(OH, th)                      # padded output height (garbage rows masked)
    Hh = Hop // th
    tm = th * Wq                                 # flat rows per conv tile (multiple of 128)
    Hin = Hop + dilation * (KH - 1)              # input rows needed per image
    img_rows = Hin * Wq                          # flat input rows per image (multiple of 8)
    Cinp = _round_up(Cin, 8)

    # --- glue (plain JAX, ~input-sized traffic): NHWC + zero pad + flatten rows ---
    x_nhwc = jnp.transpose(x, (0, 2, 3, 1)).astype(jnp.float32)
    x_pad = jnp.pad(x_nhwc, ((0, 0),
                             (padding, Hin - H - padding),
                             (padding, Wq - W - padding),
                             (0, Cinp - Cin)))
    Rx = N * img_rows + Wq                       # tail slop so tap reads never go OOB
    x_flat = jnp.pad(x_pad.reshape(N * img_rows, Cinp), ((0, Rx - N * img_rows), (0, 0)))

    # per-tap weights, tap t = kh*KW + kw, laid out as (KH*KW*Cinp, Cout)
    w_taps = jnp.transpose(weight, (2, 3, 1, 0)).astype(jnp.float32)   # (KH, KW, Cin, Cout)
    w_taps = jnp.pad(w_taps, ((0, 0), (0, 0), (0, Cinp - Cin), (0, 0)))
    w_taps = w_taps.reshape(KH * KW * Cinp, Cout)

    # validity mask over one image's (Hop, Wq) virtual output grid (garbage rows -> 0)
    valid_h = jnp.arange(Hop) < OH
    valid_w = jnp.arange(Wq) < OW
    mask = (valid_h[:, None] & valid_w[None, :]).astype(jnp.float32).reshape(Hop * Wq, 1)

    tap_offsets = tuple(kh * dilation * Wq + kw * dilation
                        for kh in range(KH) for kw in range(KW))
    Rout = N * Hop * Wq

    # --- Pallas kernel 1: fused implicit-im2col conv + per-channel stats ---
    kern1 = functools.partial(_conv_stats_kernel, tap_offsets=tap_offsets,
                              cinp=Cinp, tm=tm, img_rows=img_rows)
    conv_cm, csum, csq = pl.pallas_call(
        kern1,
        out_shape=(jax.ShapeDtypeStruct((Cout, Rout), jnp.bfloat16),
                   jax.ShapeDtypeStruct((N * 8, Cout), jnp.float32),
                   jax.ShapeDtypeStruct((N * 8, Cout), jnp.float32)),
        grid_spec=pltpu.PrefetchScalarGridSpec(
            num_scalar_prefetch=0,
            grid=(N, Hh),
            in_specs=[pl.BlockSpec((Rx, Cinp), lambda n, j: (0, 0)),                # resident input
                      pl.BlockSpec((tm, 1), lambda n, j: (j, 0)),                    # validity mask
                      pl.BlockSpec((KH * KW * Cinp, Cout), lambda n, j: (0, 0))],    # resident weights
            out_specs=(pl.BlockSpec((Cout, tm), lambda n, j: (0, n * Hh + j)),
                       pl.BlockSpec((8, Cout), lambda n, j: (n, 0)),
                       pl.BlockSpec((8, Cout), lambda n, j: (n, 0))),
            scratch_shapes=[pltpu.VMEM((tm, Cout), jnp.float32)]),
        compiler_params=pltpu.CompilerParams(
            dimension_semantics=("parallel", "arbitrary"),
            vmem_limit_bytes=32 * 1024 * 1024),
    )(x_flat, mask, w_taps)

    # --- BN coefficients from accumulated stats (tiny per-channel math, plain JAX) ---
    m_count = float(N * OH * OW)                       # garbage rows contributed zero
    total_sum = jnp.sum(csum, axis=0)
    total_sq = jnp.sum(csq, axis=0)
    mean = total_sum / m_count
    # NOTE: E[x^2] - E[x]^2 in f32; fine at 5e-2 tolerances, Welford if this ever tightens.
    var = jnp.maximum(total_sq / m_count - mean * mean, 0.0)
    scale = gamma.astype(jnp.float32) * lax.rsqrt(var + eps)
    shift = beta.astype(jnp.float32) - mean * scale
    scale3 = scale.reshape(Cout, 1, 1)
    shift3 = shift.reshape(Cout, 1, 1)

    # --- Pallas kernel 2: normalize + ReLU, emit NCHW blocks directly (no XLA epilogue) ---
    conv4 = conv_cm.reshape(Cout, N, Hop, Wq)          # free reshape (channel-major layout)
    kern2 = functools.partial(_bn_act_kernel, oh=OH, ow=OW, activation=activation)
    out = pl.pallas_call(
        kern2,
        out_shape=jax.ShapeDtypeStruct((N, Cout, OH, OW), out_dtype),
        grid_spec=pltpu.PrefetchScalarGridSpec(
            num_scalar_prefetch=0,
            grid=(N,),
            in_specs=[pl.BlockSpec((Cout, 1, Hop, Wq), lambda n: (0, n, 0, 0)),
                      pl.BlockSpec((Cout, 1, 1), lambda n: (0, 0, 0)),
                      pl.BlockSpec((Cout, 1, 1), lambda n: (0, 0, 0))],
            out_specs=pl.BlockSpec((1, Cout, OH, OW), lambda n: (n, 0, 0, 0))),
        compiler_params=pltpu.CompilerParams(
            dimension_semantics=("parallel",),
            vmem_limit_bytes=32 * 1024 * 1024),
    )(conv4, scale3, shift3)
    return out


if __name__ == "__main__":
    key = jax.random.PRNGKey(0)
    k_x, k_w = jax.random.split(key)

    # Module config: BN_Conv2d(in_channels=4, out_channels=8, kernel_size=3,
    #                          stride=1, padding=1, bias=False, activation=True)
    N, Cin, H, W = 2, 4, 16, 16
    Cout, KH, KW = 8, 3, 3
    stride, padding = 1, 1

    x = jax.random.normal(k_x, (N, Cin, H, W), jnp.float32)

    # Deterministic parameter init (shapes per nn.Conv2d / nn.BatchNorm2d defaults).
    fan_in = Cin * KH * KW
    bound = 1.0 / (fan_in ** 0.5)
    weight = jax.random.uniform(k_w, (Cout, Cin, KH, KW), jnp.float32, -bound, bound)
    gamma = jnp.ones((Cout,), jnp.float32)    # BatchNorm2d.weight default
    beta = jnp.zeros((Cout,), jnp.float32)    # BatchNorm2d.bias default

    out = bn_conv2d_forward(x, weight, gamma, beta, stride=stride, padding=padding)
    out = jax.block_until_ready(out)
    assert out.shape == (N, Cout, H, W)

    # Pure-JAX reference (sanity check).
    ref_conv = jax.lax.conv_general_dilated(
        x, weight, window_strides=(stride, stride),
        padding=[(padding, padding), (padding, padding)],
        dimension_numbers=("NCHW", "OIHW", "NCHW"))
    m = ref_conv.mean(axis=(0, 2, 3), keepdims=True)
    v = ref_conv.var(axis=(0, 2, 3), keepdims=True)
    ref = (ref_conv - m) * jax.lax.rsqrt(v + 1e-5)
    ref = jnp.maximum(ref * gamma[None, :, None, None] + beta[None, :, None, None], 0.0)

    out_f32 = out.astype(jnp.float32)
    max_err = float(jnp.max(jnp.abs(out_f32 - ref)))
    assert jnp.allclose(out_f32, ref, atol=5e-2, rtol=5e-2), f"max abs err {max_err}"

    print("KERNEL_OK")
</pallas_src>

<mosaic_0001>
module attributes {stable_mosaic.version = 11 : i64} {
  func.func @_conv_stats_kernel(%arg0: i32, %arg1: i32, %arg2: memref<888x8xf32, #tpu.memory_space<vmem>>, %arg3: memref<384x1xf32, #tpu.memory_space<vmem>>, %arg4: memref<72x8xf32, #tpu.memory_space<vmem>>, %arg5: memref<8x384xbf16, #tpu.memory_space<vmem>>, %arg6: memref<8x8xf32, #tpu.memory_space<vmem>>, %arg7: memref<8x8xf32, #tpu.memory_space<vmem>>, %arg8: memref<384x8xf32, #tpu.memory_space<vmem>>) attributes {dimension_semantics = [#tpu.dimension_semantics<parallel>, #tpu.dimension_semantics<arbitrary>], iteration_bounds = array<i64: 2, 1>, scalar_prefetch = 0 : i64, scratch_operands = 1 : i64, tpu.core_type = #tpu.core_type<tc>, window_params = [{pipeline_mode = #tpu.pipeline_mode<synchronous>, transform_indices = @transform_0, window_bounds = array<i64: 888, 8>}, {transform_indices = @transform_1, window_bounds = array<i64: 384, 1>}, {pipeline_mode = #tpu.pipeline_mode<synchronous>, transform_indices = @transform_2, window_bounds = array<i64: 72, 8>}, {transform_indices = @transform_3, window_bounds = array<i64: 8, 384>}, {transform_indices = @transform_4, window_bounds = array<i64: 8, 8>}, {transform_indices = @transform_5, window_bounds = array<i64: 8, 8>}]} {
    %c432_i32 = arith.constant 432 : i32
    %0 = arith.muli %arg0, %c432_i32 : i32
    %c384_i32 = arith.constant 384 : i32
    %1 = arith.muli %arg1, %c384_i32 : i32
    %2 = arith.addi %0, %1 : i32
    %3 = tpu.assume_multiple %2, 8 : i32
    %cst = arith.constant 0.000000e+00 : f32
    %4 = vector.broadcast %cst : f32 to vector<384x8xf32>
    %c0 = arith.constant 0 : index
    %c0_0 = arith.constant 0 : index
    %5 = vector.load %arg8[%c0, %c0_0] : memref<384x8xf32, #tpu.memory_space<vmem>>, vector<384x8xf32>
    tpu.vector_store %arg8[%c0, %c0_0], %4 {strides = array<i32>} : memref<384x8xf32, #tpu.memory_space<vmem>>, vector<384x8xf32>,
    %c0_i32 = arith.constant 0 : i32
    %6 = arith.addi %3, %c0_i32 : i32
    %7 = arith.index_cast %6 : i32 to index
    %c0_1 = arith.constant 0 : index
    %8 = vector.load %arg2[%7, %c0_1] : memref<888x8xf32, #tpu.memory_space<vmem>>, vector<384x8xf32>
    %c0_2 = arith.constant 0 : index
    %c0_3 = arith.constant 0 : index
    %9 = vector.load %arg4[%c0_2, %c0_3] : memref<72x8xf32, #tpu.memory_space<vmem>>, vector<8x8xf32>
    %c0_4 = arith.constant 0 : index
    %c0_5 = arith.constant 0 : index
    %10 = vector.load %arg8[%c0_4, %c0_5] : memref<384x8xf32, #tpu.memory_space<vmem>>, vector<384x8xf32>
    %cst_6 = arith.constant dense<0.000000e+00> : vector<384x8xf32>
    %11 = tpu.matmul %8, %9, %cst_6 {dimension_numbers = #tpu.dot_dimension_numbers<[1], [0], [0], [1], [0, 0, 1, 1], [], []>} : vector<384x8xf32>, vector<8x8xf32>, vector<384x8xf32> -> vector<384x8xf32>
    %12 = arith.addf %10, %11 : vector<384x8xf32>
    %c0_7 = arith.constant 0 : index
    %c0_8 = arith.constant 0 : index
    %13 = vector.load %arg8[%c0_7, %c0_8] : memref<384x8xf32, #tpu.memory_space<vmem>>, vector<384x8xf32>
    tpu.vector_store %arg8[%c0_7, %c0_8], %12 {strides = array<i32>} : memref<384x8xf32, #tpu.memory_space<vmem>>, vector<384x8xf32>,
    %c1_i32 = arith.constant 1 : i32
    %14 = arith.addi %3, %c1_i32 : i32
    %15 = arith.index_cast %14 : i32 to index
    %c0_9 = arith.constant 0 : index
    %16 = vector.load %arg2[%15, %c0_9] : memref<888x8xf32, #tpu.memory_space<vmem>>, vector<384x8xf32>
    %c8 = arith.constant 8 : index
    %c0_10 = arith.constant 0 : index
    %17 = vector.load %arg4[%c8, %c0_10] : memref<72x8xf32, #tpu.memory_space<vmem>>, vector<8x8xf32>
    %c0_11 = arith.constant 0 : index
    %c0_12 = arith.constant 0 : index
    %18 = vector.load %arg8[%c0_11, %c0_12] : memref<384x8xf32, #tpu.memory_space<vmem>>, vector<384x8xf32>
    %cst_13 = arith.constant dense<0.000000e+00> : vector<384x8xf32>
    %19 = tpu.matmul %16, %17, %cst_13 {dimension_numbers = #tpu.dot_dimension_numbers<[1], [0], [0], [1], [0, 0, 1, 1], [], []>} : vector<384x8xf32>, vector<8x8xf32>, vector<384x8xf32> -> vector<384x8xf32>
    %20 = arith.addf %18, %19 : vector<384x8xf32>
    %c0_14 = arith.constant 0 : index
    %c0_15 = arith.constant 0 : index
    %21 = vector.load %arg8[%c0_14, %c0_15] : memref<384x8xf32, #tpu.memory_space<vmem>>, vector<384x8xf32>
    tpu.vector_store %arg8[%c0_14, %c0_15], %20 {strides = array<i32>} : memref<384x8xf32, #tpu.memory_space<vmem>>, vector<384x8xf32>,
    %c2_i32 = arith.constant 2 : i32
    %22 = arith.addi %3, %c2_i32 : i32
    %23 = arith.index_cast %22 : i32 to index
    %c0_16 = arith.constant 0 : index
    %24 = vector.load %arg2[%23, %c0_16] : memref<888x8xf32, #tpu.memory_space<vmem>>, vector<384x8xf32>
    %c16 = arith.constant 16 : index
    %c0_17 = arith.constant 0 : index
    %25 = vector.load %arg4[%c16, %c0_17] : memref<72x8xf32, #tpu.memory_space<vmem>>, vector<8x8xf32>
    %c0_18 = arith.constant 0 : index
    %c0_19 = arith.constant 0 : index
    %26 = vector.load %arg8[%c0_18, %c0_19] : memref<384x8xf32, #tpu.memory_space<vmem>>, vector<384x8xf32>
    %cst_20 = arith.constant dense<0.000000e+00> : vector<384x8xf32>
    %27 = tpu.matmul %24, %25, %cst_20 {dimension_numbers = #tpu.dot_dimension_numbers<[1], [0], [0], [1], [0, 0, 1, 1], [], []>} : vector<384x8xf32>, vector<8x8xf32>, vector<384x8xf32> -> vector<384x8xf32>
    %28 = arith.addf %26, %27 : vector<384x8xf32>
    %c0_21 = arith.constant 0 : index
    %c0_22 = arith.constant 0 : index
    %29 = vector.load %arg8[%c0_21, %c0_22] : memref<384x8xf32, #tpu.memory_space<vmem>>, vector<384x8xf32>
    tpu.vector_store %arg8[%c0_21, %c0_22], %28 {strides = array<i32>} : memref<384x8xf32, #tpu.memory_space<vmem>>, vector<384x8xf32>,
    %c24_i32 = arith.constant 24 : i32
    %30 = arith.addi %3, %c24_i32 : i32
    %31 = arith.index_cast %30 : i32 to index
    %c0_23 = arith.constant 0 : index
    %32 = vector.load %arg2[%31, %c0_23] : memref<888x8xf32, #tpu.memory_space<vmem>>, vector<384x8xf32>
    %c24 = arith.constant 24 : index
    %c0_24 = arith.constant 0 : index
    %33 = vector.load %arg4[%c24, %c0_24] : memref<72x8xf32, #tpu.memory_space<vmem>>, vector<8x8xf32>
    %c0_25 = arith.constant 0 : index
    %c0_26 = arith.constant 0 : index
    %34 = vector.load %arg8[%c0_25, %c0_26] : memref<384x8xf32, #tpu.memory_space<vmem>>, vector<384x8xf32>
    %cst_27 = arith.constant dense<0.000000e+00> : vector<384x8xf32>
    %35 = tpu.matmul %32, %33, %cst_27 {dimension_numbers = #tpu.dot_dimension_numbers<[1], [0], [0], [1], [0, 0, 1, 1], [], []>} : vector<384x8xf32>, vector<8x8xf32>, vector<384x8xf32> -> vector<384x8xf32>
    %36 = arith.addf %34, %35 : vector<384x8xf32>
    %c0_28 = arith.constant 0 : index
    %c0_29 = arith.constant 0 : index
    %37 = vector.load %arg8[%c0_28, %c0_29] : memref<384x8xf32, #tpu.memory_space<vmem>>, vector<384x8xf32>
    tpu.vector_store %arg8[%c0_28, %c0_29], %36 {strides = array<i32>} : memref<384x8xf32, #tpu.memory_space<vmem>>, vector<384x8xf32>,
    %c25_i32 = arith.constant 25 : i32
    %38 = arith.addi %3, %c25_i32 : i32
    %39 = arith.index_cast %38 : i32 to index
    %c0_30 = arith.constant 0 : index
    %40 = vector.load %arg2[%39, %c0_30] : memref<888x8xf32, #tpu.memory_space<vmem>>, vector<384x8xf32>
    %c32 = arith.constant 32 : index
    %c0_31 = arith.constant 0 : index
    %41 = vector.load %arg4[%c32, %c0_31] : memref<72x8xf32, #tpu.memory_space<vmem>>, vector<8x8xf32>
    %c0_32 = arith.constant 0 : index
    %c0_33 = arith.constant 0 : index
    %42 = vector.load %arg8[%c0_32, %c0_33] : memref<384x8xf32, #tpu.memory_space<vmem>>, vector<384x8xf32>
    %cst_34 = arith.constant dense<0.000000e+00> : vector<384x8xf32>
    %43 = tpu.matmul %40, %41, %cst_34 {dimension_numbers = #tpu.dot_dimension_numbers<[1], [0], [0], [1], [0, 0, 1, 1], [], []>} : vector<384x8xf32>, vector<8x8xf32>, vector<384x8xf32> -> vector<384x8xf32>
    %44 = arith.addf %42, %43 : vector<384x8xf32>
    %c0_35 = arith.constant 0 : index
    %c0_36 = arith.constant 0 : index
    %45 = vector.load %arg8[%c0_35, %c0_36] : memref<384x8xf32, #tpu.memory_space<vmem>>, vector<384x8xf32>
    tpu.vector_store %arg8[%c0_35, %c0_36], %44 {strides = array<i32>} : memref<384x8xf32, #tpu.memory_space<vmem>>, vector<384x8xf32>,
    %c26_i32 = arith.constant 26 : i32
    %46 = arith.addi %3, %c26_i32 : i32
    %47 = arith.index_cast %46 : i32 to index
    %c0_37 = arith.constant 0 : index
    %48 = vector.load %arg2[%47, %c0_37] : memref<888x8xf32, #tpu.memory_space<vmem>>, vector<384x8xf32>
    %c40 = arith.constant 40 : index
    %c0_38 = arith.constant 0 : index
    %49 = vector.load %arg4[%c40, %c0_38] : memref<72x8xf32, #tpu.memory_space<vmem>>, vector<8x8xf32>
    %c0_39 = arith.constant 0 : index
    %c0_40 = arith.constant 0 : index
    %50 = vector.load %arg8[%c0_39, %c0_40] : memref<384x8xf32, #tpu.memory_space<vmem>>, vector<384x8xf32>
    %cst_41 = arith.constant dense<0.000000e+00> : vector<384x8xf32>
    %51 = tpu.matmul %48, %49, %cst_41 {dimension_numbers = #tpu.dot_dimension_numbers<[1], [0], [0], [1], [0, 0, 1, 1], [], []>} : vector<384x8xf32>, vector<8x8xf32>, vector<384x8xf32> -> vector<384x8xf32>
    %52 = arith.addf %50, %51 : vector<384x8xf32>
    %c0_42 = arith.constant 0 : index
    %c0_43 = arith.constant 0 : index
    %53 = vector.load %arg8[%c0_42, %c0_43] : memref<384x8xf32, #tpu.memory_space<vmem>>, vector<384x8xf32>
    tpu.vector_store %arg8[%c0_42, %c0_43], %52 {strides = array<i32>} : memref<384x8xf32, #tpu.memory_space<vmem>>, vector<384x8xf32>,
    %c48_i32 = arith.constant 48 : i32
    %54 = arith.addi %3, %c48_i32 : i32
    %55 = arith.index_cast %54 : i32 to index
    %c0_44 = arith.constant 0 : index
    %56 = vector.load %arg2[%55, %c0_44] : memref<888x8xf32, #tpu.memory_space<vmem>>, vector<384x8xf32>
    %c48 = arith.constant 48 : index
    %c0_45 = arith.constant 0 : index
    %57 = vector.load %arg4[%c48, %c0_45] : memref<72x8xf32, #tpu.memory_space<vmem>>, vector<8x8xf32>
    %c0_46 = arith.constant 0 : index
    %c0_47 = arith.constant 0 : index
    %58 = vector.load %arg8[%c0_46, %c0_47] : memref<384x8xf32, #tpu.memory_space<vmem>>, vector<384x8xf32>
    %cst_48 = arith.constant dense<0.000000e+00> : vector<384x8xf32>
    %59 = tpu.matmul %56, %57, %cst_48 {dimension_numbers = #tpu.dot_dimension_numbers<[1], [0], [0], [1], [0, 0, 1, 1], [], []>} : vector<384x8xf32>, vector<8x8xf32>, vector<384x8xf32> -> vector<384x8xf32>
    %60 = arith.addf %58, %59 : vector<384x8xf32>
    %c0_49 = arith.constant 0 : index
    %c0_50 = arith.constant 0 : index
    %61 = vector.load %arg8[%c0_49, %c0_50] : memref<384x8xf32, #tpu.memory_space<vmem>>, vector<384x8xf32>
    tpu.vector_store %arg8[%c0_49, %c0_50], %60 {strides = array<i32>} : memref<384x8xf32, #tpu.memory_space<vmem>>, vector<384x8xf32>,
    %c49_i32 = arith.constant 49 : i32
    %62 = arith.addi %3, %c49_i32 : i32
    %63 = arith.index_cast %62 : i32 to index
    %c0_51 = arith.constant 0 : index
    %64 = vector.load %arg2[%63, %c0_51] : memref<888x8xf32, #tpu.memory_space<vmem>>, vector<384x8xf32>
    %c56 = arith.constant 56 : index
    %c0_52 = arith.constant 0 : index
    %65 = vector.load %arg4[%c56, %c0_52] : memref<72x8xf32, #tpu.memory_space<vmem>>, vector<8x8xf32>
    %c0_53 = arith.constant 0 : index
    %c0_54 = arith.constant 0 : index
    %66 = vector.load %arg8[%c0_53, %c0_54] : memref<384x8xf32, #tpu.memory_space<vmem>>, vector<384x8xf32>
    %cst_55 = arith.constant dense<0.000000e+00> : vector<384x8xf32>
    %67 = tpu.matmul %64, %65, %cst_55 {dimension_numbers = #tpu.dot_dimension_numbers<[1], [0], [0], [1], [0, 0, 1, 1], [], []>} : vector<384x8xf32>, vector<8x8xf32>, vector<384x8xf32> -> vector<384x8xf32>
    %68 = arith.addf %66, %67 : vector<384x8xf32>
    %c0_56 = arith.constant 0 : index
    %c0_57 = arith.constant 0 : index
    %69 = vector.load %arg8[%c0_56, %c0_57] : memref<384x8xf32, #tpu.memory_space<vmem>>, vector<384x8xf32>
    tpu.vector_store %arg8[%c0_56, %c0_57], %68 {strides = array<i32>} : memref<384x8xf32, #tpu.memory_space<vmem>>, vector<384x8xf32>,
    %c50_i32 = arith.constant 50 : i32
    %70 = arith.addi %3, %c50_i32 : i32
    %71 = arith.index_cast %70 : i32 to index
    %c0_58 = arith.constant 0 : index
    %72 = vector.load %arg2[%71, %c0_58] : memref<888x8xf32, #tpu.memory_space<vmem>>, vector<384x8xf32>
    %c64 = arith.constant 64 : index
    %c0_59 = arith.constant 0 : index
    %73 = vector.load %arg4[%c64, %c0_59] : memref<72x8xf32, #tpu.memory_space<vmem>>, vector<8x8xf32>
    %c0_60 = arith.constant 0 : index
    %c0_61 = arith.constant 0 : index
    %74 = vector.load %arg8[%c0_60, %c0_61] : memref<384x8xf32, #tpu.memory_space<vmem>>, vector<384x8xf32>
    %cst_62 = arith.constant dense<0.000000e+00> : vector<384x8xf32>
    %75 = tpu.matmul %72, %73, %cst_62 {dimension_numbers = #tpu.dot_dimension_numbers<[1], [0], [0], [1], [0, 0, 1, 1], [], []>} : vector<384x8xf32>, vector<8x8xf32>, vector<384x8xf32> -> vector<384x8xf32>
    %76 = arith.addf %74, %75 : vector<384x8xf32>
    %c0_63 = arith.constant 0 : index
    %c0_64 = arith.constant 0 : index
    %77 = vector.load %arg8[%c0_63, %c0_64] : memref<384x8xf32, #tpu.memory_space<vmem>>, vector<384x8xf32>
    tpu.vector_store %arg8[%c0_63, %c0_64], %76 {strides = array<i32>} : memref<384x8xf32, #tpu.memory_space<vmem>>, vector<384x8xf32>,
    %c0_65 = arith.constant 0 : index
    %c0_66 = arith.constant 0 : index
    %78 = vector.load %arg8[%c0_65, %c0_66] : memref<384x8xf32, #tpu.memory_space<vmem>>, vector<384x8xf32>
    %79 = tpu.transpose %78, [1, 0] : vector<384x8xf32> -> vector<8x384xf32>
    %80 = arith.truncf %79 : vector<8x384xf32> to vector<8x384xbf16>
    %c0_67 = arith.constant 0 : index
    %c0_68 = arith.constant 0 : index
    %81 = vector.load %arg5[%c0_67, %c0_68] : memref<8x384xbf16, #tpu.memory_space<vmem>>, vector<8x384xbf16>
    tpu.vector_store %arg5[%c0_67, %c0_68], %80 {strides = array<i32>} : memref<8x384xbf16, #tpu.memory_space<vmem>>, vector<8x384xbf16>,
    %c0_i32_69 = arith.constant 0 : i32
    %82 = arith.cmpi eq, %arg1, %c0_i32_69 : i32
    %83 = arith.extui %82 : i1 to i32
    %c0_i32_70 = arith.constant 0 : i32
    %84 = arith.cmpi ne, %83, %c0_i32_70 : i32
    scf.if %84 {
      %cst_83 = arith.constant 0.000000e+00 : f32
      %98 = vector.broadcast %cst_83 : f32 to vector<8x8xf32>
      %c0_84 = arith.constant 0 : index
      %c0_85 = arith.constant 0 : index
      %99 = vector.load %arg6[%c0_84, %c0_85] : memref<8x8xf32, #tpu.memory_space<vmem>>, vector<8x8xf32>
      tpu.vector_store %arg6[%c0_84, %c0_85], %98 {strides = array<i32>} : memref<8x8xf32, #tpu.memory_space<vmem>>, vector<8x8xf32>,
      %cst_86 = arith.constant 0.000000e+00 : f32
      %100 = vector.broadcast %cst_86 : f32 to vector<8x8xf32>
      %c0_87 = arith.constant 0 : index
      %c0_88 = arith.constant 0 : index
      %101 = vector.load %arg7[%c0_87, %c0_88] : memref<8x8xf32, #tpu.memory_space<vmem>>, vector<8x8xf32>
      tpu.vector_store %arg7[%c0_87, %c0_88], %100 {strides = array<i32>} : memref<8x8xf32, #tpu.memory_space<vmem>>, vector<8x8xf32>,
    } else {
    }
    %c0_71 = arith.constant 0 : index
    %c0_72 = arith.constant 0 : index
    %85 = vector.load %arg3[%c0_71, %c0_72] : memref<384x1xf32, #tpu.memory_space<vmem>>, vector<384x1xf32>
    %86 = vector.broadcast %85 : vector<384x1xf32> to vector<384x8xf32>
    %87 = arith.mulf %78, %86 : vector<384x8xf32>
    %88 = vector.shape_cast %87 : vector<384x8xf32> to vector<48x8x8xf32>
    %c0_73 = arith.constant 0 : index
    %c0_74 = arith.constant 0 : index
    %89 = vector.load %arg6[%c0_73, %c0_74] : memref<8x8xf32, #tpu.memory_space<vmem>>, vector<8x8xf32>
    %cst_75 = arith.constant dense<0.000000e+00> : vector<8x8xf32>
    %90 = vector.multi_reduction <add>, %88, %cst_75 [0] : vector<48x8x8xf32> to vector<8x8xf32>
    %91 = arith.addf %89, %90 : vector<8x8xf32>
    %c0_76 = arith.constant 0 : index
    %c0_77 = arith.constant 0 : index
    %92 = vector.load %arg6[%c0_76, %c0_77] : memref<8x8xf32, #tpu.memory_space<vmem>>, vector<8x8xf32>
    tpu.vector_store %arg6[%c0_76, %c0_77], %91 {strides = array<i32>} : memref<8x8xf32, #tpu.memory_space<vmem>>, vector<8x8xf32>,
    %c0_78 = arith.constant 0 : index
    %c0_79 = arith.constant 0 : index
    %93 = vector.load %arg7[%c0_78, %c0_79] : memref<8x8xf32, #tpu.memory_space<vmem>>, vector<8x8xf32>
    %94 = arith.mulf %88, %88 : vector<48x8x8xf32>
    %cst_80 = arith.constant dense<0.000000e+00> : vector<8x8xf32>
    %95 = vector.multi_reduction <add>, %94, %cst_80 [0] : vector<48x8x8xf32> to vector<8x8xf32>
    %96 = arith.addf %93, %95 : vector<8x8xf32>
    %c0_81 = arith.constant 0 : index
    %c0_82 = arith.constant 0 : index
    %97 = vector.load %arg7[%c0_81, %c0_82] : memref<8x8xf32, #tpu.memory_space<vmem>>, vector<8x8xf32>
    tpu.vector_store %arg7[%c0_81, %c0_82], %96 {strides = array<i32>} : memref<8x8xf32, #tpu.memory_space<vmem>>, vector<8x8xf32>,
    return
  }
  func.func @transform_0(%arg0: i32, %arg1: i32) -> (i32, i32) {
    %c0_i32 = arith.constant 0 : i32
    %c0_i32_0 = arith.constant 0 : i32
    %c0_i32_1 = arith.constant 0 : i32
    return %c0_i32, %c0_i32_0 : i32, i32
  }
  func.func @transform_1(%arg0: i32, %arg1: i32) -> (i32, i32) {
    %c0_i32 = arith.constant 0 : i32
    %c0_i32_0 = arith.constant 0 : i32
    return %arg1, %c0_i32 : i32, i32
  }
  func.func @transform_2(%arg0: i32, %arg1: i32) -> (i32, i32) {
    %c0_i32 = arith.constant 0 : i32
    %c0_i32_0 = arith.constant 0 : i32
    %c0_i32_1 = arith.constant 0 : i32
    return %c0_i32, %c0_i32_0 : i32, i32
  }
  func.func @transform_3(%arg0: i32, %arg1: i32) -> (i32, i32) {
    %c1_i32 = arith.constant 1 : i32
    %0 = arith.muli %arg0, %c1_i32 : i32
    %1 = arith.addi %0, %arg1 : i32
    %c0_i32 = arith.constant 0 : i32
    %c0_i32_0 = arith.constant 0 : i32
    return %c0_i32, %1 : i32, i32
  }
  func.func @transform_4(%arg0: i32, %arg1: i32) -> (i32, i32) {
    %c0_i32 = arith.constant 0 : i32
    %c0_i32_0 = arith.constant 0 : i32
    return %arg0, %c0_i32 : i32, i32
  }
  func.func @transform_5(%arg0: i32, %arg1: i32) -> (i32, i32) {
    %c0_i32 = arith.constant 0 : i32
    %c0_i32_0 = arith.constant 0 : i32
    return %arg0, %c0_i32 : i32, i32
  }
}

</mosaic_0001>

<llo_original>
// kernel: tpu_custom_call.1
$region0: #{tpu_custom_call.1}
  #allocation0 [shape = 'u32[]', space=smem, size = 0x4, offset = 0x4, fixed_abs, tag = 'smem constant byte address 0x4 - core index']
  #allocation1 [shape = 'u32[72,128]{1,0:T(1,128)}', space=vmem, size = 0x9000, scoped, tag = 'internal scratch']
  #allocation2 [shape = 'f32[384,8]{1,0:T(8,128)}', space=vmem, size = 0x30000, scoped, tag = 'scratch operand']
  %s0 = inlined_call_operand.vmem [shape: f32[888,8], index: 0, kind: input, shape index: {}]
  %s1 = inlined_call_operand.vmem [shape: f32[384,1], index: 1, kind: input, shape index: {}]
  %s2 = inlined_call_operand.vmem [shape: f32[72,8], index: 2, kind: input, shape index: {}]
  %s3 = inlined_call_operand.hbm [shape: bf16[8,768], index: 3, kind: output, shape index: {0}]
  %s4 = inlined_call_operand.vmem [shape: f32[16,8], index: 4, kind: output, shape index: {1}]
  %s5 = inlined_call_operand.vmem [shape: f32[16,8], index: 5, kind: output, shape index: {2}]
  %6 = xla_tuple %s3, %s4, %s5
  %s7 = sld [smem:[#allocation0]]
  $region65: #{tpu_custom_call.1} parent=0
    _
  %s9 = ssub.s32 1, %s7
  %s10 = scalar_select 0, %s9, %s7
  $region1: #{tpu_custom_call.1} parent=0
    #allocation3 [shape = 'u8[12288]{0}', space=vmem, size = 0x3000, scoped, tag = 'output window, operand 0']
    #allocation4 [shape = 's32[2]{0}', space=sflag, size = 0x8, scoped, tag = 'scoped memory for tpu_custom_call.1']
    %11 = vsyncpa [#allocation4], 0
    %s12 = scalar_lea.sflag [#allocation4], 1
    %13 = vsyncpa %s12, 0
    loop: start=0, step=1, limit=4
    $region2: #{tpu_custom_call.1} parent=1 // loop_pre_header
      _
    $region3: #{tpu_custom_call.1} parent=1 // loop_header
      %s15 = sphi 0, %s19
      %p16 = scmp.ge.s32.totalorder %s15, 4
      %s22 = sphi 0, %s34
      %s23 = sphi 0, %s30
      %s24 = sphi 0, %s22
      %s25 = sphi 0, %s23
      %s26 = sphi 0, %s24
      %s27 = sphi 0, %s25
      %s35 = sphi 0, %s35
      %s37 = sphi 0, %s35
      %s38 = sphi 0, %s37
      %s52 = sphi 0, %s38
      %s58 = sphi 0, %s60
      %s61 = sphi 0, %s58
      %s62 = sphi 0, %s61
      %s78 = sphi 0, %s62
      %s82 = sphi 0, %s82
      %s84 = sphi 0, %s82
      %s85 = sphi 0, %s84
      %s99 = sphi 0, %s85
      %s107 = sphi 0, %s109
      %s110 = sphi 0, %s107
      %s111 = sphi 0, %s110
      %s127 = sphi 0, %s111
      %s133 = sphi 0, %s135
      %s136 = sphi 0, %s133
      %s137 = sphi 0, %s136
      %s153 = sphi 0, %s137
      %s159 = sphi 0, %s161
      %s162 = sphi 0, %s159
      %s163 = sphi 0, %s162
      %s179 = sphi 0, %s163
    $region4: #{tpu_custom_call.1} parent=1 // loop_header_branch
      %18 = sbr.rel (%p16) target = $region8
    $region5: #{tpu_custom_call.1} parent=1 // loop_body
      %s20 = ssub.s32 %s15, 1
      %s21 = ssub.s32 %s15, 2
      %s28 = sadd.s32 1, %s23
      %p29 = scmp.ge.s32.totalorder %s28, 1
      %s30 = scalar_select %p29, 0, %s28
      %s31 = sadd.s32 1, %s22
      %s32 = scalar_select %p29, %s31, %s22
      %p33 = scmp.ge.s32.totalorder %s32, 2
      %s34 = scalar_select %p33, 0, %s32
      %s36 = sadd.s32 %s35, 1
      %p39 = scmp.eq.s32.totalorder %s15, 1
      %p40 = scmp.ne.s32.totalorder %s35, %s37
      %p41 = scmp.eq.s32.totalorder %s15, 0
      %p42 = por %p40, %p41
      %p43 = scmp.ne.s32.totalorder %s35, %s37
      %p44 = scmp.eq.s32.totalorder %s20, 1
      %p45 = por %p43, %p44
      %p46 = scmp.ne.s32.totalorder %s37, %s38
      %p47 = scmp.eq.s32.totalorder %s20, 0
      %p48 = por %p46, %p47
      %p49 = scmp.ne.s32.totalorder %s37, %s38
      %p50 = scmp.eq.s32.totalorder %s21, 1
      %p51 = por %p49, %p50
      %p53 = scmp.ne.s32.totalorder %s38, %s52
      %p54 = scmp.eq.s32.totalorder %s21, 0
      %p55 = por %p53, %p54
      %s56 = ssub.s32 %s23, %s30
      %p57 = scmp.eq.s32.totalorder %s56, 0
      %s59 = sadd.s32 %s58, 1
      %s60 = scalar_select %p57, %s58, %s59
      %p63 = pneg %p57
      %p64 = scmp.eq.s32.totalorder %s15, 1
      %p65 = por %p63, %p64
      %p66 = scmp.ne.s32.totalorder %s58, %s61
      %p67 = scmp.eq.s32.totalorder %s15, 0
      %p68 = por %p66, %p67
      %p69 = scmp.ne.s32.totalorder %s58, %s61
      %p70 = scmp.eq.s32.totalorder %s20, 1
      %p71 = por %p69, %p70
      %p72 = scmp.ne.s32.totalorder %s61, %s62
      %p73 = scmp.eq.s32.totalorder %s20, 0
      %p74 = por %p72, %p73
      %p75 = scmp.ne.s32.totalorder %s61, %s62
      %p76 = scmp.eq.s32.totalorder %s21, 1
      %p77 = por %p75, %p76
      %p79 = scmp.ne.s32.totalorder %s62, %s78
      %p80 = scmp.eq.s32.totalorder %s21, 0
      %p81 = por %p79, %p80
      %s83 = sadd.s32 %s82, 1
      %p86 = scmp.eq.s32.totalorder %s15, 1
      %p87 = scmp.ne.s32.totalorder %s82, %s84
      %p88 = scmp.eq.s32.totalorder %s15, 0
      %p89 = por %p87, %p88
      %p90 = scmp.ne.s32.totalorder %s82, %s84
      %p91 = scmp.eq.s32.totalorder %s20, 1
      %p92 = por %p90, %p91
      %p93 = scmp.ne.s32.totalorder %s84, %s85
      %p94 = scmp.eq.s32.totalorder %s20, 0
      %p95 = por %p93, %p94
      %p96 = scmp.ne.s32.totalorder %s84, %s85
      %p97 = scmp.eq.s32.totalorder %s21, 1
      %p98 = por %p96, %p97
      %p100 = scmp.ne.s32.totalorder %s85, %s99
      %p101 = scmp.eq.s32.totalorder %s21, 0
      %p102 = por %p100, %p101
      %s103 = sadd.s32 %s22, %s23
      %s104 = sadd.s32 %s34, %s30
      %s105 = ssub.s32 %s103, %s104
      %p106 = scmp.eq.s32.totalorder %s105, 0
      %s108 = sadd.s32 %s107, 1
      %s109 = scalar_select %p106, %s107, %s108
      %p112 = pneg %p106
      %p113 = scmp.eq.s32.totalorder %s15, 1
      %p114 = por %p112, %p113
      %p115 = scmp.ne.s32.totalorder %s107, %s110
      %p116 = scmp.eq.s32.totalorder %s15, 0
      %p117 = por %p115, %p116
      %p118 = scmp.ne.s32.totalorder %s107, %s110
      %p119 = scmp.eq.s32.totalorder %s20, 1
      %p120 = por %p118, %p119
      %p121 = scmp.ne.s32.totalorder %s110, %s111
      %p122 = scmp.eq.s32.totalorder %s20, 0
      %p123 = por %p121, %p122
      %p124 = scmp.ne.s32.totalorder %s110, %s111
      %p125 = scmp.eq.s32.totalorder %s21, 1
      %p126 = por %p124, %p125
      %p128 = scmp.ne.s32.totalorder %s111, %s127
      %p129 = scmp.eq.s32.totalorder %s21, 0
      %p130 = por %p128, %p129
      %s131 = ssub.s32 %s22, %s34
      %p132 = scmp.eq.s32.totalorder %s131, 0
      %s134 = sadd.s32 %s133, 1
      %s135 = scalar_select %p132, %s133, %s134
      %p138 = pneg %p132
      %p139 = scmp.eq.s32.totalorder %s15, 1
      %p140 = por %p138, %p139
      %p141 = scmp.ne.s32.totalorder %s133, %s136
      %p142 = scmp.eq.s32.totalorder %s15, 0
      %p143 = por %p141, %p142
      %p144 = scmp.ne.s32.totalorder %s133, %s136
      %p145 = scmp.eq.s32.totalorder %s20, 1
      %p146 = por %p144, %p145
      %p147 = scmp.ne.s32.totalorder %s136, %s137
      %p148 = scmp.eq.s32.totalorder %s20, 0
      %p149 = por %p147, %p148
      %p150 = scmp.ne.s32.totalorder %s136, %s137
      %p151 = scmp.eq.s32.totalorder %s21, 1
      %p152 = por %p150, %p151
      %p154 = scmp.ne.s32.totalorder %s137, %s153
      %p155 = scmp.eq.s32.totalorder %s21, 0
      %p156 = por %p154, %p155
      %s157 = ssub.s32 %s22, %s34
      %p158 = scmp.eq.s32.totalorder %s157, 0
      %s160 = sadd.s32 %s159, 1
      %s161 = scalar_select %p158, %s159, %s160
      %p164 = pneg %p158
      %p165 = scmp.eq.s32.totalorder %s15, 1
      %p166 = por %p164, %p165
      %p167 = scmp.ne.s32.totalorder %s159, %s162
      %p168 = scmp.eq.s32.totalorder %s15, 0
      %p169 = por %p167, %p168
      %p170 = scmp.ne.s32.totalorder %s159, %s162
      %p171 = scmp.eq.s32.totalorder %s20, 1
      %p172 = por %p170, %p171
      %p173 = scmp.ne.s32.totalorder %s162, %s163
      %p174 = scmp.eq.s32.totalorder %s20, 0
      %p175 = por %p173, %p174
      %p176 = scmp.ne.s32.totalorder %s162, %s163
      %p177 = scmp.eq.s32.totalorder %s21, 1
      %p178 = por %p176, %p177
      %p180 = scmp.ne.s32.totalorder %s163, %s179
      %p181 = scmp.eq.s32.totalorder %s21, 0
      %p182 = por %p180, %p181
      %p183 = scmp.le.s32.totalorder 1, %s15
      %p184 = scmp.lt.s32.totalorder %s15, 3
      %p185 = pnand %p183, %p184
      %p186 = pneg %p185
      // Predicated region
      $region9: #{tpu_custom_call.1} parent=5 // pred_check
        _
      $region10: #{tpu_custom_call.1} parent=5 // pred_check_branch
        %188 = sbr.rel (%p185) target = $region12
      $region11: #{tpu_custom_call.1} parent=5 // pred_region
        %s189 = ssub.s32 %s15, 1
        // Predicated region
        $region13: #{tpu_custom_call.1} parent=11 // pred_check
          %p190 = pneg %p48
        $region14: #{tpu_custom_call.1} parent=11 // pred_check_branch
          %192 = sbr.rel (%p190) target = $region16
        $region15: #{tpu_custom_call.1} parent=11 // pred_region
          _
        $region16: #{tpu_custom_call.1} parent=11 // pred_fallthru
          _
        // Predicated region
        $region17: #{tpu_custom_call.1} parent=11 // pred_check
          %p193 = pneg %p74
        $region18: #{tpu_custom_call.1} parent=11 // pred_check_branch
          %195 = sbr.rel (%p193) target = $region20
        $region19: #{tpu_custom_call.1} parent=11 // pred_region
          %s196 = smul.u32 48, %s25
          %p197 = scmp.lt.s32.totalorder %s196, 47
          %s198 = scalar_select %p197, %s196, 47
          %s199 = smul.addr %s198, 8
          %s200 = scalar_lea.vmem %s1, %s199
          %s201 = smul.u32 48, %s25
        $region20: #{tpu_custom_call.1} parent=11 // pred_fallthru
          _
        // Predicated region
        $region21: #{tpu_custom_call.1} parent=11 // pred_check
          %p202 = pneg %p95
        $region22: #{tpu_custom_call.1} parent=11 // pred_check_branch
          %204 = sbr.rel (%p202) target = $region24
        $region23: #{tpu_custom_call.1} parent=11 // pred_region
          _
        $region24: #{tpu_custom_call.1} parent=11 // pred_fallthru
          _
      $region12: #{tpu_custom_call.1} parent=5 // pred_fallthru
        _
      %p205 = scmp.lt.s32.totalorder %s15, 2
      // Predicated region
      $region25: #{tpu_custom_call.1} parent=5 // pred_check
        %p206 = pneg %p205
      $region26: #{tpu_custom_call.1} parent=5 // pred_check_branch
        %208 = sbr.rel (%p206) target = $region28
      $region27: #{tpu_custom_call.1} parent=5 // pred_region
        _
      $region28: #{tpu_custom_call.1} parent=5 // pred_fallthru
        _
      %p209 = scmp.le.s32.totalorder 1, %s15
      %p210 = scmp.lt.s32.totalorder %s15, 3
      %p211 = pnand %p209, %p210
      %p212 = pneg %p211
      // Predicated region
      $region29: #{tpu_custom_call.1} parent=5 // pred_check
        _
      $region30: #{tpu_custom_call.1} parent=5 // pred_check_branch
        %214 = sbr.rel (%p211) target = $region32
      $region31: #{tpu_custom_call.1} parent=5 // pred_region
        %s215 = ssub.s32 %s15, 1
        %p216 = pneg %p48
        %p217 = pneg %p45
        %s218 = smul.u32 48, %s25
        %p219 = scmp.lt.s32.totalorder %s218, 47
        %s220 = scalar_select %p219, %s218, 47
        %s221 = smul.addr %s220, 8
        %s222 = scalar_lea.vmem %s1, %s221
        %p223 = pneg %p74
        %p224 = pneg %p71
        %p225 = pneg %p95
        %p226 = pneg %p92
        %p227 = pneg %p123
        %p228 = pneg %p120
        %s229 = sand.u32 %s110, 1
        %s230 = scalar_lea.sflag [#allocation4], %s229
        %s231 = sand.u32 %s110, 1
        %s232 = smul.addr %s231, 12
        %s233 = scalar_lea.vmem [#allocation3], %s232
        %p234 = pneg %p149
        %p235 = pneg %p146
        %p236 = scmp.lt.s32.totalorder %s24, 1
        %s237 = scalar_select %p236, %s24, 1
        %s238 = smul.addr %s237, 8
        %s239 = scalar_lea.vmem %s4, %s238
        %p240 = pneg %p175
        %p241 = pneg %p172
        %p242 = scmp.lt.s32.totalorder %s24, 1
        %s243 = scalar_select %p242, %s24, 1
        %s244 = smul.addr %s243, 8
        %s245 = scalar_lea.vmem %s5, %s244
        %s246 = smul.u32 48, %s25
        %p247 = scmp.lt.s32.totalorder %s246, 47
        %s248 = scalar_select %p247, %s246, 47
        %s249 = smul.addr %s248, 8
        %s250 = scalar_lea.vmem %s1, %s249
        %s251 = smul.u32 48, %s25
        %s252 = sadd.s32 %s24, %s25
        %s253 = smul.u32 3, %s252
        %p254 = scmp.lt.s32.totalorder %s24, 1
        %s255 = scalar_select %p254, %s24, 1
        %s256 = smul.addr %s255, 8
        %s257 = scalar_lea.vmem %s4, %s256
        %p258 = scmp.lt.s32.totalorder %s24, 1
        %s259 = scalar_select %p258, %s24, 1
        %s260 = smul.addr %s259, 8
        %s261 = scalar_lea.vmem %s5, %s260
        %s262 = smul.u32 %s24, 432
        %s263 = smul.u32 %s25, 384
        %s264 = sadd.s32 %s262, %s263
        %vm265 = vcmask 64512
        %266 = vst.msk [vmem:[#allocation2] sm:$0xff] %vm265, 0.0
        %267 = vst.msk [vmem:[#allocation2 + $0x8] sm:$0xff] %vm265, 0.0
        %268 = vst.msk [vmem:[#allocation2 + $0x10] sm:$0xff] %vm265, 0.0
        %269 = vst.msk [vmem:[#allocation2 + $0x18] sm:$0xff] %vm265, 0.0
        %270 = vst.msk [vmem:[#allocation2 + $0x20] sm:$0xff] %vm265, 0.0
        %271 = vst.msk [vmem:[#allocation2 + $0x28] sm:$0xff] %vm265, 0.0
        %272 = vst.msk [vmem:[#allocation2 + $0x30] sm:$0xff] %vm265, 0.0
        %273 = vst.msk [vmem:[#allocation2 + $0x38] sm:$0xff] %vm265, 0.0
        %274 = vst.msk [vmem:[#allocation2 + $0x40] sm:$0xff] %vm265, 0.0
        %275 = vst.msk [vmem:[#allocation2 + $0x48] sm:$0xff] %vm265, 0.0
        %276 = vst.msk [vmem:[#allocation2 + $0x50] sm:$0xff] %vm265, 0.0
        %277 = vst.msk [vmem:[#allocation2 + $0x58] sm:$0xff] %vm265, 0.0
        %278 = vst.msk [vmem:[#allocation2 + $0x60] sm:$0xff] %vm265, 0.0
        %279 = vst.msk [vmem:[#allocation2 + $0x68] sm:$0xff] %vm265, 0.0
        %280 = vst.msk [vmem:[#allocation2 + $0x70] sm:$0xff] %vm265, 0.0
        %281 = vst.msk [vmem:[#allocation2 + $0x78] sm:$0xff] %vm265, 0.0
        %282 = vst.msk [vmem:[#allocation2 + $0x80] sm:$0xff] %vm265, 0.0
        %283 = vst.msk [vmem:[#allocation2 + $0x88] sm:$0xff] %vm265, 0.0
        %284 = vst.msk [vmem:[#allocation2 + $0x90] sm:$0xff] %vm265, 0.0
        %285 = vst.msk [vmem:[#allocation2 + $0x98] sm:$0xff] %vm265, 0.0
        %286 = vst.msk [vmem:[#allocation2 + $0xa0] sm:$0xff] %vm265, 0.0
        %287 = vst.msk [vmem:[#allocation2 + $0xa8] sm:$0xff] %vm265, 0.0
        %288 = vst.msk [vmem:[#allocation2 + $0xb0] sm:$0xff] %vm265, 0.0
        %289 = vst.msk [vmem:[#allocation2 + $0xb8] sm:$0xff] %vm265, 0.0
        %290 = vst.msk [vmem:[#allocation2 + $0xc0] sm:$0xff] %vm265, 0.0
        %291 = vst.msk [vmem:[#allocation2 + $0xc8] sm:$0xff] %vm265, 0.0
        %292 = vst.msk [vmem:[#allocation2 + $0xd0] sm:$0xff] %vm265, 0.0
        %293 = vst.msk [vmem:[#allocation2 + $0xd8] sm:$0xff] %vm265, 0.0
        %294 = vst.msk [vmem:[#allocation2 + $0xe0] sm:$0xff] %vm265, 0.0
        %295 = vst.msk [vmem:[#allocation2 + $0xe8] sm:$0xff] %vm265, 0.0
        %296 = vst.msk [vmem:[#allocation2 + $0xf0] sm:$0xff] %vm265, 0.0
        %297 = vst.msk [vmem:[#allocation2 + $0xf8] sm:$0xff] %vm265, 0.0
        %298 = vst.msk [vmem:[#allocation2 + $0x100] sm:$0xff] %vm265, 0.0
        %299 = vst.msk [vmem:[#allocation2 + $0x108] sm:$0xff] %vm265, 0.0
        %300 = vst.msk [vmem:[#allocation2 + $0x110] sm:$0xff] %vm265, 0.0
        %301 = vst.msk [vmem:[#allocation2 + $0x118] sm:$0xff] %vm265, 0.0
        %302 = vst.msk [vmem:[#allocation2 + $0x120] sm:$0xff] %vm265, 0.0
        %303 = vst.msk [vmem:[#allocation2 + $0x128] sm:$0xff] %vm265, 0.0
        %304 = vst.msk [vmem:[#allocation2 + $0x130] sm:$0xff] %vm265, 0.0
        %305 = vst.msk [vmem:[#allocation2 + $0x138] sm:$0xff] %vm265, 0.0
        %306 = vst.msk [vmem:[#allocation2 + $0x140] sm:$0xff] %vm265, 0.0
        %307 = vst.msk [vmem:[#allocation2 + $0x148] sm:$0xff] %vm265, 0.0
        %308 = vst.msk [vmem:[#allocation2 + $0x150] sm:$0xff] %vm265, 0.0
        %309 = vst.msk [vmem:[#allocation2 + $0x158] sm:$0xff] %vm265, 0.0
        %310 = vst.msk [vmem:[#allocation2 + $0x160] sm:$0xff] %vm265, 0.0
        %311 = vst.msk [vmem:[#allocation2 + $0x168] sm:$0xff] %vm265, 0.0
        %312 = vst.msk [vmem:[#allocation2 + $0x170] sm:$0xff] %vm265, 0.0
        %313 = vst.msk [vmem:[#allocation2 + $0x178] sm:$0xff] %vm265, 0.0
        %s314 = scalar_lea.vmem %s0, %s264
        %v315 = vld [vmem:[%s314] sm:$0xff]
        %v316 = vld [vmem:[%s314 + $0x8] sm:$0xff]
        %v317 = vld [vmem:[%s314 + $0x10] sm:$0xff]
        %v318 = vld [vmem:[%s314 + $0x18] sm:$0xff]
        %v319 = vld [vmem:[%s314 + $0x20] sm:$0xff]
        %v320 = vld [vmem:[%s314 + $0x28] sm:$0xff]
        %v321 = vld [vmem:[%s314 + $0x30] sm:$0xff]
        %v322 = vld [vmem:[%s314 + $0x38] sm:$0xff]
        %v323 = vld [vmem:[%s314 + $0x40] sm:$0xff]
        %v324 = vld [vmem:[%s314 + $0x48] sm:$0xff]
        %v325 = vld [vmem:[%s314 + $0x50] sm:$0xff]
        %v326 = vld [vmem:[%s314 + $0x58] sm:$0xff]
        %v327 = vld [vmem:[%s314 + $0x60] sm:$0xff]
        %v328 = vld [vmem:[%s314 + $0x68] sm:$0xff]
        %v329 = vld [vmem:[%s314 + $0x70] sm:$0xff]
        %v330 = vld [vmem:[%s314 + $0x78] sm:$0xff]
        %v331 = vld [vmem:[%s314 + $0x80] sm:$0xff]
        %v332 = vld [vmem:[%s314 + $0x88] sm:$0xff]
        %v333 = vld [vmem:[%s314 + $0x90] sm:$0xff]
        %v334 = vld [vmem:[%s314 + $0x98] sm:$0xff]
        %v335 = vld [vmem:[%s314 + $0xa0] sm:$0xff]
        %v336 = vld [vmem:[%s314 + $0xa8] sm:$0xff]
        %v337 = vld [vmem:[%s314 + $0xb0] sm:$0xff]
        %v338 = vld [vmem:[%s314 + $0xb8] sm:$0xff]
        %v339 = vld [vmem:[%s314 + $0xc0] sm:$0xff]
        %v340 = vld [vmem:[%s314 + $0xc8] sm:$0xff]
        %v341 = vld [vmem:[%s314 + $0xd0] sm:$0xff]
        %v342 = vld [vmem:[%s314 + $0xd8] sm:$0xff]
        %v343 = vld [vmem:[%s314 + $0xe0] sm:$0xff]
        %v344 = vld [vmem:[%s314 + $0xe8] sm:$0xff]
        %v345 = vld [vmem:[%s314 + $0xf0] sm:$0xff]
        %v346 = vld [vmem:[%s314 + $0xf8] sm:$0xff]
        %v347 = vld [vmem:[%s314 + $0x100] sm:$0xff]
        %v348 = vld [vmem:[%s314 + $0x108] sm:$0xff]
        %v349 = vld [vmem:[%s314 + $0x110] sm:$0xff]
        %v350 = vld [vmem:[%s314 + $0x118] sm:$0xff]
        %v351 = vld [vmem:[%s314 + $0x120] sm:$0xff]
        %v352 = vld [vmem:[%s314 + $0x128] sm:$0xff]
        %v353 = vld [vmem:[%s314 + $0x130] sm:$0xff]
        %v354 = vld [vmem:[%s314 + $0x138] sm:$0xff]
        %v355 = vld [vmem:[%s314 + $0x140] sm:$0xff]
        %v356 = vld [vmem:[%s314 + $0x148] sm:$0xff]
        %v357 = vld [vmem:[%s314 + $0x150] sm:$0xff]
        %v358 = vld [vmem:[%s314 + $0x158] sm:$0xff]
        %v359 = vld [vmem:[%s314 + $0x160] sm:$0xff]
        %v360 = vld [vmem:[%s314 + $0x168] sm:$0xff]
        %v361 = vld [vmem:[%s314 + $0x170] sm:$0xff]
        %v362 = vld [vmem:[%s314 + $0x178] sm:$0xff]
        %v363 = vld [vmem:[%s2] sm:$0xff]
        %v364 = vld [vmem:[#allocation2] sm:$0xff]
        %v365 = vld [vmem:[#allocation2 + $0x8] sm:$0xff]
        %v366 = vld [vmem:[#allocation2 + $0x10] sm:$0xff]
        %v367 = vld [vmem:[#allocation2 + $0x18] sm:$0xff]
        %v368 = vld [vmem:[#allocation2 + $0x20] sm:$0xff]
        %v369 = vld [vmem:[#allocation2 + $0x28] sm:$0xff]
        %v370 = vld [vmem:[#allocation2 + $0x30] sm:$0xff]
        %v371 = vld [vmem:[#allocation2 + $0x38] sm:$0xff]
        %v372 = vld [vmem:[#allocation2 + $0x40] sm:$0xff]
        %v373 = vld [vmem:[#allocation2 + $0x48] sm:$0xff]
        %v374 = vld [vmem:[#allocation2 + $0x50] sm:$0xff]
        %v375 = vld [vmem:[#allocation2 + $0x58] sm:$0xff]
        %v376 = vld [vmem:[#allocation2 + $0x60] sm:$0xff]
        %v377 = vld [vmem:[#allocation2 + $0x68] sm:$0xff]
        %v378 = vld [vmem:[#allocation2 + $0x70] sm:$0xff]
        %v379 = vld [vmem:[#allocation2 + $0x78] sm:$0xff]
        %v380 = vld [vmem:[#allocation2 + $0x80] sm:$0xff]
        %v381 = vld [vmem:[#allocation2 + $0x88] sm:$0xff]
        %v382 = vld [vmem:[#allocation2 + $0x90] sm:$0xff]
        %v383 = vld [vmem:[#allocation2 + $0x98] sm:$0xff]
        %v384 = vld [vmem:[#allocation2 + $0xa0] sm:$0xff]
        %v385 = vld [vmem:[#allocation2 + $0xa8] sm:$0xff]
        %v386 = vld [vmem:[#allocation2 + $0xb0] sm:$0xff]
        %v387 = vld [vmem:[#allocation2 + $0xb8] sm:$0xff]
        %v388 = vld [vmem:[#allocation2 + $0xc0] sm:$0xff]
        %v389 = vld [vmem:[#allocation2 + $0xc8] sm:$0xff]
        %v390 = vld [vmem:[#allocation2 + $0xd0] sm:$0xff]
        %v391 = vld [vmem:[#allocation2 + $0xd8] sm:$0xff]
        %v392 = vld [vmem:[#allocation2 + $0xe0] sm:$0xff]
        %v393 = vld [vmem:[#allocation2 + $0xe8] sm:$0xff]
        %v394 = vld [vmem:[#allocation2 + $0xf0] sm:$0xff]
        %v395 = vld [vmem:[#allocation2 + $0xf8] sm:$0xff]
        %v396 = vld [vmem:[#allocation2 + $0x100] sm:$0xff]
        %v397 = vld [vmem:[#allocation2 + $0x108] sm:$0xff]
        %v398 = vld [vmem:[#allocation2 + $0x110] sm:$0xff]
        %v399 = vld [vmem:[#allocation2 + $0x118] sm:$0xff]
        %v400 = vld [vmem:[#allocation2 + $0x120] sm:$0xff]
        %v401 = vld [vmem:[#allocation2 + $0x128] sm:$0xff]
        %v402 = vld [vmem:[#allocation2 + $0x130] sm:$0xff]
        %v403 = vld [vmem:[#allocation2 + $0x138] sm:$0xff]
        %v404 = vld [vmem:[#allocation2 + $0x140] sm:$0xff]
        %v405 = vld [vmem:[#allocation2 + $0x148] sm:$0xff]
        %v406 = vld [vmem:[#allocation2 + $0x150] sm:$0xff]
        %v407 = vld [vmem:[#allocation2 + $0x158] sm:$0xff]
        %v408 = vld [vmem:[#allocation2 + $0x160] sm:$0xff]
        %v409 = vld [vmem:[#allocation2 + $0x168] sm:$0xff]
        %v410 = vld [vmem:[#allocation2 + $0x170] sm:$0xff]
        %v411 = vld [vmem:[#allocation2 + $0x178] sm:$0xff]
        %v413 = vsel %vm265, %v315, 0
        %v416 = vsel %vm265, %v316, 0
        %v419 = vsel %vm265, %v317, 0
        %v422 = vsel %vm265, %v318, 0
        %v425 = vsel %vm265, %v319, 0
        %v428 = vsel %vm265, %v320, 0
        %v431 = vsel %vm265, %v321, 0
        %v434 = vsel %vm265, %v322, 0
        %v437 = vsel %vm265, %v323, 0
        %v440 = vsel %vm265, %v324, 0
        %v443 = vsel %vm265, %v325, 0
        %v446 = vsel %vm265, %v326, 0
        %v449 = vsel %vm265, %v327, 0
        %v452 = vsel %vm265, %v328, 0
        %v455 = vsel %vm265, %v329, 0
        %v458 = vsel %vm265, %v330, 0
        %v461 = vsel %vm265, %v331, 0
        %v464 = vsel %vm265, %v332, 0
        %v467 = vsel %vm265, %v333, 0
        %v470 = vsel %vm265, %v334, 0
        %v473 = vsel %vm265, %v335, 0
        %v476 = vsel %vm265, %v336, 0
        %v479 = vsel %vm265, %v337, 0
        %v482 = vsel %vm265, %v338, 0
        %v485 = vsel %vm265, %v339, 0
        %v488 = vsel %vm265, %v340, 0
        %v491 = vsel %vm265, %v341, 0
        %v494 = vsel %vm265, %v342, 0
        %v497 = vsel %vm265, %v343, 0
        %v500 = vsel %vm265, %v344, 0
        %v503 = vsel %vm265, %v345, 0
        %v506 = vsel %vm265, %v346, 0
        %v509 = vsel %vm265, %v347, 0
        %v512 = vsel %vm265, %v348, 0
        %v515 = vsel %vm265, %v349, 0
        %v518 = vsel %vm265, %v350, 0
        %v521 = vsel %vm265, %v351, 0
        %v524 = vsel %vm265, %v352, 0
        %v527 = vsel %vm265, %v353, 0
        %v530 = vsel %vm265, %v354, 0
        %v533 = vsel %vm265, %v355, 0
        %v536 = vsel %vm265, %v356, 0
        %v539 = vsel %vm265, %v357, 0
        %v542 = vsel %vm265, %v358, 0
        %v545 = vsel %vm265, %v359, 0
        %v548 = vsel %vm265, %v360, 0
        %v551 = vsel %vm265, %v361, 0
        %v554 = vsel %vm265, %v362, 0
        %556 = vmatpush.msra.mxu0 0.0
        %557 = vmatpush.msra.mxu0 0.0
        %558 = vmatpush.msra.mxu0 0.0
        %559 = vmatpush.msra.mxu0 0.0
        %560 = vmatpush.msra.mxu0 0.0
        %561 = vmatpush.msra.mxu0 0.0
        %562 = vmatpush.msra.mxu0 0.0
        %563 = vmatpush.msra.mxu0 0.0
        %564 = vmatpush.msra.mxu0 0.0
        %565 = vmatpush.msra.mxu0 0.0
        %566 = vmatpush.msra.mxu0 0.0
        %567 = vmatpush.msra.mxu0 0.0
        %568 = vmatpush.msra.mxu0 0.0
        %569 = vmatpush.msra.mxu0 0.0
        %570 = vmatpush.msra.mxu0 0.0
        %571 = vmatpush.msra.mxu0 %v363
        %572 = vmatmul.f32.gmra.mxu0 %v413
        %v573 = vpop.f32.mrf.mxu0
        %v574 = vadd.f32 0.0, %v573
        %575 = vmatmul.f32.gmra.mxu0 %v416
        %v576 = vpop.f32.mrf.mxu0
        %v577 = vadd.f32 0.0, %v576
        %578 = vmatmul.f32.gmra.mxu0 %v419
        %v579 = vpop.f32.mrf.mxu0
        %v580 = vadd.f32 0.0, %v579
        %581 = vmatmul.f32.gmra.mxu0 %v422
        %v582 = vpop.f32.mrf.mxu0
        %v583 = vadd.f32 0.0, %v582
        %584 = vmatmul.f32.gmra.mxu0 %v425
        %v585 = vpop.f32.mrf.mxu0
        %v586 = vadd.f32 0.0, %v585
        %587 = vmatmul.f32.gmra.mxu0 %v428
        %v588 = vpop.f32.mrf.mxu0
        %v589 = vadd.f32 0.0, %v588
        %590 = vmatmul.f32.gmra.mxu0 %v431
        %v591 = vpop.f32.mrf.mxu0
        %v592 = vadd.f32 0.0, %v591
        %593 = vmatmul.f32.gmra.mxu0 %v434
        %v594 = vpop.f32.mrf.mxu0
        %v595 = vadd.f32 0.0, %v594
        %596 = vmatmul.f32.gmra.mxu0 %v437
        %v597 = vpop.f32.mrf.mxu0
        %v598 = vadd.f32 0.0, %v597
        %599 = vmatmul.f32.gmra.mxu0 %v440
        %v600 = vpop.f32.mrf.mxu0
        %v601 = vadd.f32 0.0, %v600
        %602 = vmatmul.f32.gmra.mxu0 %v443
        %v603 = vpop.f32.mrf.mxu0
        %v604 = vadd.f32 0.0, %v603
        %605 = vmatmul.f32.gmra.mxu0 %v446
        %v606 = vpop.f32.mrf.mxu0
        %v607 = vadd.f32 0.0, %v606
        %608 = vmatmul.f32.gmra.mxu0 %v449
        %v609 = vpop.f32.mrf.mxu0
        %v610 = vadd.f32 0.0, %v609
        %611 = vmatmul.f32.gmra.mxu0 %v452
        %v612 = vpop.f32.mrf.mxu0
        %v613 = vadd.f32 0.0, %v612
        %614 = vmatmul.f32.gmra.mxu0 %v455
        %v615 = vpop.f32.mrf.mxu0
        %v616 = vadd.f32 0.0, %v615
        %617 = vmatmul.f32.gmra.mxu0 %v458
        %v618 = vpop.f32.mrf.mxu0
        %v619 = vadd.f32 0.0, %v618
        %620 = vmatmul.f32.gmra.mxu0 %v461
        %v621 = vpop.f32.mrf.mxu0
        %v622 = vadd.f32 0.0, %v621
        %623 = vmatmul.f32.gmra.mxu0 %v464
        %v624 = vpop.f32.mrf.mxu0
        %v625 = vadd.f32 0.0, %v624
        %626 = vmatmul.f32.gmra.mxu0 %v467
        %v627 = vpop.f32.mrf.mxu0
        %v628 = vadd.f32 0.0, %v627
        %629 = vmatmul.f32.gmra.mxu0 %v470
        %v630 = vpop.f32.mrf.mxu0
        %v631 = vadd.f32 0.0, %v630
        %632 = vmatmul.f32.gmra.mxu0 %v473
        %v633 = vpop.f32.mrf.mxu0
        %v634 = vadd.f32 0.0, %v633
        %635 = vmatmul.f32.gmra.mxu0 %v476
        %v636 = vpop.f32.mrf.mxu0
        %v637 = vadd.f32 0.0, %v636
        %638 = vmatmul.f32.gmra.mxu0 %v479
        %v639 = vpop.f32.mrf.mxu0
        %v640 = vadd.f32 0.0, %v639
        %641 = vmatmul.f32.gmra.mxu0 %v482
        %v642 = vpop.f32.mrf.mxu0
        %v643 = vadd.f32 0.0, %v642
        %644 = vmatmul.f32.gmra.mxu0 %v485
        %v645 = vpop.f32.mrf.mxu0
        %v646 = vadd.f32 0.0, %v645
        %647 = vmatmul.f32.gmra.mxu0 %v488
        %v648 = vpop.f32.mrf.mxu0
        %v649 = vadd.f32 0.0, %v648
        %650 = vmatmul.f32.gmra.mxu0 %v491
        %v651 = vpop.f32.mrf.mxu0
        %v652 = vadd.f32 0.0, %v651
        %653 = vmatmul.f32.gmra.mxu0 %v494
        %v654 = vpop.f32.mrf.mxu0
        %v655 = vadd.f32 0.0, %v654
        %656 = vmatmul.f32.gmra.mxu0 %v497
        %v657 = vpop.f32.mrf.mxu0
        %v658 = vadd.f32 0.0, %v657
        %659 = vmatmul.f32.gmra.mxu0 %v500
        %v660 = vpop.f32.mrf.mxu0
        %v661 = vadd.f32 0.0, %v660
        %662 = vmatmul.f32.gmra.mxu0 %v503
        %v663 = vpop.f32.mrf.mxu0
        %v664 = vadd.f32 0.0, %v663
        %665 = vmatmul.f32.gmra.mxu0 %v506
        %v666 = vpop.f32.mrf.mxu0
        %v667 = vadd.f32 0.0, %v666
        %668 = vmatmul.f32.gmra.mxu0 %v509
        %v669 = vpop.f32.mrf.mxu0
        %v670 = vadd.f32 0.0, %v669
        %671 = vmatmul.f32.gmra.mxu0 %v512
        %v672 = vpop.f32.mrf.mxu0
        %v673 = vadd.f32 0.0, %v672
        %674 = vmatmul.f32.gmra.mxu0 %v515
        %v675 = vpop.f32.mrf.mxu0
        %v676 = vadd.f32 0.0, %v675
        %677 = vmatmul.f32.gmra.mxu0 %v518
        %v678 = vpop.f32.mrf.mxu0
        %v679 = vadd.f32 0.0, %v678
        %680 = vmatmul.f32.gmra.mxu0 %v521
        %v681 = vpop.f32.mrf.mxu0
        %v682 = vadd.f32 0.0, %v681
        %683 = vmatmul.f32.gmra.mxu0 %v524
        %v684 = vpop.f32.mrf.mxu0
        %v685 = vadd.f32 0.0, %v684
        %686 = vmatmul.f32.gmra.mxu0 %v527
        %v687 = vpop.f32.mrf.mxu0
        %v688 = vadd.f32 0.0, %v687
        %689 = vmatmul.f32.gmra.mxu0 %v530
        %v690 = vpop.f32.mrf.mxu0
        %v691 = vadd.f32 0.0, %v690
        %692 = vmatmul.f32.gmra.mxu0 %v533
        %v693 = vpop.f32.mrf.mxu0
        %v694 = vadd.f32 0.0, %v693
        %695 = vmatmul.f32.gmra.mxu0 %v536
        %v696 = vpop.f32.mrf.mxu0
        %v697 = vadd.f32 0.0, %v696
        %698 = vmatmul.f32.gmra.mxu0 %v539
        %v699 = vpop.f32.mrf.mxu0
        %v700 = vadd.f32 0.0, %v699
        %701 = vmatmul.f32.gmra.mxu0 %v542
        %v702 = vpop.f32.mrf.mxu0
        %v703 = vadd.f32 0.0, %v702
        %704 = vmatmul.f32.gmra.mxu0 %v545
        %v705 = vpop.f32.mrf.mxu0
        %v706 = vadd.f32 0.0, %v705
        %707 = vmatmul.f32.gmra.mxu0 %v548
        %v708 = vpop.f32.mrf.mxu0
        %v709 = vadd.f32 0.0, %v708
        %710 = vmatmul.f32.gmra.mxu0 %v551
        %v711 = vpop.f32.mrf.mxu0
        %v712 = vadd.f32 0.0, %v711
        %713 = vmatmul.f32.gmra.mxu0 %v554
        %v714 = vpop.f32.mrf.mxu0
        %v715 = vadd.f32 0.0, %v714
        %716 = vdwg.mxu0
        %v717 = vadd.f32 %v364, %v574
        %v718 = vadd.f32 %v365, %v577
        %v719 = vadd.f32 %v366, %v580
        %v720 = vadd.f32 %v367, %v583
        %v721 = vadd.f32 %v368, %v586
        %v722 = vadd.f32 %v369, %v589
        %v723 = vadd.f32 %v370, %v592
        %v724 = vadd.f32 %v371, %v595
        %v725 = vadd.f32 %v372, %v598
        %v726 = vadd.f32 %v373, %v601
        %v727 = vadd.f32 %v374, %v604
        %v728 = vadd.f32 %v375, %v607
        %v729 = vadd.f32 %v376, %v610
        %v730 = vadd.f32 %v377, %v613
        %v731 = vadd.f32 %v378, %v616
        %v732 = vadd.f32 %v379, %v619
        %v733 = vadd.f32 %v380, %v622
        %v734 = vadd.f32 %v381, %v625
        %v735 = vadd.f32 %v382, %v628
        %v736 = vadd.f32 %v383, %v631
        %v737 = vadd.f32 %v384, %v634
        %v738 = vadd.f32 %v385, %v637
        %v739 = vadd.f32 %v386, %v640
        %v740 = vadd.f32 %v387, %v643
        %v741 = vadd.f32 %v388, %v646
        %v742 = vadd.f32 %v389, %v649
        %v743 = vadd.f32 %v390, %v652
        %v744 = vadd.f32 %v391, %v655
        %v745 = vadd.f32 %v392, %v658
        %v746 = vadd.f32 %v393, %v661
        %v747 = vadd.f32 %v394, %v664
        %v748 = vadd.f32 %v395, %v667
        %v749 = vadd.f32 %v396, %v670
        %v750 = vadd.f32 %v397, %v673
        %v751 = vadd.f32 %v398, %v676
        %v752 = vadd.f32 %v399, %v679
        %v753 = vadd.f32 %v400, %v682
        %v754 = vadd.f32 %v401, %v685
        %v755 = vadd.f32 %v402, %v688
        %v756 = vadd.f32 %v403, %v691
        %v757 = vadd.f32 %v404, %v694
        %v758 = vadd.f32 %v405, %v697
        %v759 = vadd.f32 %v406, %v700
        %v760 = vadd.f32 %v407, %v703
        %v761 = vadd.f32 %v408, %v706
        %v762 = vadd.f32 %v409, %v709
        %v763 = vadd.f32 %v410, %v712
        %v764 = vadd.f32 %v411, %v715
        %765 = vst.msk [vmem:[#allocation2] sm:$0xff] %vm265, %v717
        %766 = vst.msk [vmem:[#allocation2 + $0x8] sm:$0xff] %vm265, %v718
        %767 = vst.msk [vmem:[#allocation2 + $0x10] sm:$0xff] %vm265, %v719
        %768 = vst.msk [vmem:[#allocation2 + $0x18] sm:$0xff] %vm265, %v720
        %769 = vst.msk [vmem:[#allocation2 + $0x20] sm:$0xff] %vm265, %v721
        %770 = vst.msk [vmem:[#allocation2 + $0x28] sm:$0xff] %vm265, %v722
        %771 = vst.msk [vmem:[#allocation2 + $0x30] sm:$0xff] %vm265, %v723
        %772 = vst.msk [vmem:[#allocation2 + $0x38] sm:$0xff] %vm265, %v724
        %773 = vst.msk [vmem:[#allocation2 + $0x40] sm:$0xff] %vm265, %v725
        %774 = vst.msk [vmem:[#allocation2 + $0x48] sm:$0xff] %vm265, %v726
        %775 = vst.msk [vmem:[#allocation2 + $0x50] sm:$0xff] %vm265, %v727
        %776 = vst.msk [vmem:[#allocation2 + $0x58] sm:$0xff] %vm265, %v728
        %777 = vst.msk [vmem:[#allocation2 + $0x60] sm:$0xff] %vm265, %v729
        %778 = vst.msk [vmem:[#allocation2 + $0x68] sm:$0xff] %vm265, %v730
        %779 = vst.msk [vmem:[#allocation2 + $0x70] sm:$0xff] %vm265, %v731
        %780 = vst.msk [vmem:[#allocation2 + $0x78] sm:$0xff] %vm265, %v732
        %781 = vst.msk [vmem:[#allocation2 + $0x80] sm:$0xff] %vm265, %v733
        %782 = vst.msk [vmem:[#allocation2 + $0x88] sm:$0xff] %vm265, %v734
        %783 = vst.msk [vmem:[#allocation2 + $0x90] sm:$0xff] %vm265, %v735
        %784 = vst.msk [vmem:[#allocation2 + $0x98] sm:$0xff] %vm265, %v736
        %785 = vst.msk [vmem:[#allocation2 + $0xa0] sm:$0xff] %vm265, %v737
        %786 = vst.msk [vmem:[#allocation2 + $0xa8] sm:$0xff] %vm265, %v738
        %787 = vst.msk [vmem:[#allocation2 + $0xb0] sm:$0xff] %vm265, %v739
        %788 = vst.msk [vmem:[#allocation2 + $0xb8] sm:$0xff] %vm265, %v740
        %789 = vst.msk [vmem:[#allocation2 + $0xc0] sm:$0xff] %vm265, %v741
        %790 = vst.msk [vmem:[#allocation2 + $0xc8] sm:$0xff] %vm265, %v742
        %791 = vst.msk [vmem:[#allocation2 + $0xd0] sm:$0xff] %vm265, %v743
        %792 = vst.msk [vmem:[#allocation2 + $0xd8] sm:$0xff] %vm265, %v744
        %793 = vst.msk [vmem:[#allocation2 + $0xe0] sm:$0xff] %vm265, %v745
        %794 = vst.msk [vmem:[#allocation2 + $0xe8] sm:$0xff] %vm265, %v746
        %795 = vst.msk [vmem:[#allocation2 + $0xf0] sm:$0xff] %vm265, %v747
        %796 = vst.msk [vmem:[#allocation2 + $0xf8] sm:$0xff] %vm265, %v748
        %797 = vst.msk [vmem:[#allocation2 + $0x100] sm:$0xff] %vm265, %v749
        %798 = vst.msk [vmem:[#allocation2 + $0x108] sm:$0xff] %vm265, %v750
        %799 = vst.msk [vmem:[#allocation2 + $0x110] sm:$0xff] %vm265, %v751
        %800 = vst.msk [vmem:[#allocation2 + $0x118] sm:$0xff] %vm265, %v752
        %801 = vst.msk [vmem:[#allocation2 + $0x120] sm:$0xff] %vm265, %v753
        %802 = vst.msk [vmem:[#allocation2 + $0x128] sm:$0xff] %vm265, %v754
        %803 = vst.msk [vmem:[#allocation2 + $0x130] sm:$0xff] %vm265, %v755
        %804 = vst.msk [vmem:[#allocation2 + $0x138] sm:$0xff] %vm265, %v756
        %805 = vst.msk [vmem:[#allocation2 + $0x140] sm:$0xff] %vm265, %v757
        %806 = vst.msk [vmem:[#allocation2 + $0x148] sm:$0xff] %vm265, %v758
        %807 = vst.msk [vmem:[#allocation2 + $0x150] sm:$0xff] %vm265, %v759
        %808 = vst.msk [vmem:[#allocation2 + $0x158] sm:$0xff] %vm265, %v760
        %809 = vst.msk [vmem:[#allocation2 + $0x160] sm:$0xff] %vm265, %v761
        %810 = vst.msk [vmem:[#allocation2 + $0x168] sm:$0xff] %vm265, %v762
        %811 = vst.msk [vmem:[#allocation2 + $0x170] sm:$0xff] %vm265, %v763
        %812 = vst.msk [vmem:[#allocation2 + $0x178] sm:$0xff] %vm265, %v764
        %s813 = sadd.s32 %s264, 1
        %s814 = scalar_lea.vmem %s0, %s813
        %v815 = vld [vmem:[%s814] sm:$0xff]
        %v816 = vld [vmem:[%s814 + $0x8] sm:$0xff]
        %v817 = vld [vmem:[%s814 + $0x10] sm:$0xff]
        %v818 = vld [vmem:[%s814 + $0x18] sm:$0xff]
        %v819 = vld [vmem:[%s814 + $0x20] sm:$0xff]
        %v820 = vld [vmem:[%s814 + $0x28] sm:$0xff]
        %v821 = vld [vmem:[%s814 + $0x30] sm:$0xff]
        %v822 = vld [vmem:[%s814 + $0x38] sm:$0xff]
        %v823 = vld [vmem:[%s814 + $0x40] sm:$0xff]
        %v824 = vld [vmem:[%s814 + $0x48] sm:$0xff]
        %v825 = vld [vmem:[%s814 + $0x50] sm:$0xff]
        %v826 = vld [vmem:[%s814 + $0x58] sm:$0xff]
        %v827 = vld [vmem:[%s814 + $0x60] sm:$0xff]
        %v828 = vld [vmem:[%s814 + $0x68] sm:$0xff]
        %v829 = vld [vmem:[%s814 + $0x70] sm:$0xff]
        %v830 = vld [vmem:[%s814 + $0x78] sm:$0xff]
        %v831 = vld [vmem:[%s814 + $0x80] sm:$0xff]
        %v832 = vld [vmem:[%s814 + $0x88] sm:$0xff]
        %v833 = vld [vmem:[%s814 + $0x90] sm:$0xff]
        %v834 = vld [vmem:[%s814 + $0x98] sm:$0xff]
        %v835 = vld [vmem:[%s814 + $0xa0] sm:$0xff]
        %v836 = vld [vmem:[%s814 + $0xa8] sm:$0xff]
        %v837 = vld [vmem:[%s814 + $0xb0] sm:$0xff]
        %v838 = vld [vmem:[%s814 + $0xb8] sm:$0xff]
        %v839 = vld [vmem:[%s814 + $0xc0] sm:$0xff]
        %v840 = vld [vmem:[%s814 + $0xc8] sm:$0xff]
        %v841 = vld [vmem:[%s814 + $0xd0] sm:$0xff]
        %v842 = vld [vmem:[%s814 + $0xd8] sm:$0xff]
        %v843 = vld [vmem:[%s814 + $0xe0] sm:$0xff]
        %v844 = vld [vmem:[%s814 + $0xe8] sm:$0xff]
        %v845 = vld [vmem:[%s814 + $0xf0] sm:$0xff]
        %v846 = vld [vmem:[%s814 + $0xf8] sm:$0xff]
        %v847 = vld [vmem:[%s814 + $0x100] sm:$0xff]
        %v848 = vld [vmem:[%s814 + $0x108] sm:$0xff]
        %v849 = vld [vmem:[%s814 + $0x110] sm:$0xff]
        %v850 = vld [vmem:[%s814 + $0x118] sm:$0xff]
        %v851 = vld [vmem:[%s814 + $0x120] sm:$0xff]
        %v852 = vld [vmem:[%s814 + $0x128] sm:$0xff]
        %v853 = vld [vmem:[%s814 + $0x130] sm:$0xff]
        %v854 = vld [vmem:[%s814 + $0x138] sm:$0xff]
        %v855 = vld [vmem:[%s814 + $0x140] sm:$0xff]
        %v856 = vld [vmem:[%s814 + $0x148] sm:$0xff]
        %v857 = vld [vmem:[%s814 + $0x150] sm:$0xff]
        %v858 = vld [vmem:[%s814 + $0x158] sm:$0xff]
        %v859 = vld [vmem:[%s814 + $0x160] sm:$0xff]
        %v860 = vld [vmem:[%s814 + $0x168] sm:$0xff]
        %v861 = vld [vmem:[%s814 + $0x170] sm:$0xff]
        %v862 = vld [vmem:[%s814 + $0x178] sm:$0xff]
        %v863 = vld [vmem:[%s2 + $0x8] sm:$0xff]
        %v864 = vld [vmem:[#allocation2] sm:$0xff]
        %v865 = vld [vmem:[#allocation2 + $0x8] sm:$0xff]
        %v866 = vld [vmem:[#allocation2 + $0x10] sm:$0xff]
        %v867 = vld [vmem:[#allocation2 + $0x18] sm:$0xff]
        %v868 = vld [vmem:[#allocation2 + $0x20] sm:$0xff]
        %v869 = vld [vmem:[#allocation2 + $0x28] sm:$0xff]
        %v870 = vld [vmem:[#allocation2 + $0x30] sm:$0xff]
        %v871 = vld [vmem:[#allocation2 + $0x38] sm:$0xff]
        %v872 = vld [vmem:[#allocation2 + $0x40] sm:$0xff]
        %v873 = vld [vmem:[#allocation2 + $0x48] sm:$0xff]
        %v874 = vld [vmem:[#allocation2 + $0x50] sm:$0xff]
        %v875 = vld [vmem:[#allocation2 + $0x58] sm:$0xff]
        %v876 = vld [vmem:[#allocation2 + $0x60] sm:$0xff]
        %v877 = vld [vmem:[#allocation2 + $0x68] sm:$0xff]
        %v878 = vld [vmem:[#allocation2 + $0x70] sm:$0xff]
        %v879 = vld [vmem:[#allocation2 + $0x78] sm:$0xff]
        %v880 = vld [vmem:[#allocation2 + $0x80] sm:$0xff]
        %v881 = vld [vmem:[#allocation2 + $0x88] sm:$0xff]
        %v882 = vld [vmem:[#allocation2 + $0x90] sm:$0xff]
        %v883 = vld [vmem:[#allocation2 + $0x98] sm:$0xff]
        %v884 = vld [vmem:[#allocation2 + $0xa0] sm:$0xff]
        %v885 = vld [vmem:[#allocation2 + $0xa8] sm:$0xff]
        %v886 = vld [vmem:[#allocation2 + $0xb0] sm:$0xff]
        %v887 = vld [vmem:[#allocation2 + $0xb8] sm:$0xff]
        %v888 = vld [vmem:[#allocation2 + $0xc0] sm:$0xff]
        %v889 = vld [vmem:[#allocation2 + $0xc8] sm:$0xff]
        %v890 = vld [vmem:[#allocation2 + $0xd0] sm:$0xff]
        %v891 = vld [vmem:[#allocation2 + $0xd8] sm:$0xff]
        %v892 = vld [vmem:[#allocation2 + $0xe0] sm:$0xff]
        %v893 = vld [vmem:[#allocation2 + $0xe8] sm:$0xff]
        %v894 = vld [vmem:[#allocation2 + $0xf0] sm:$0xff]
        %v895 = vld [vmem:[#allocation2 + $0xf8] sm:$0xff]
        %v896 = vld [vmem:[#allocation2 + $0x100] sm:$0xff]
        %v897 = vld [vmem:[#allocation2 + $0x108] sm:$0xff]
        %v898 = vld [vmem:[#allocation2 + $0x110] sm:$0xff]
        %v899 = vld [vmem:[#allocation2 + $0x118] sm:$0xff]
        %v900 = vld [vmem:[#allocation2 + $0x120] sm:$0xff]
        %v901 = vld [vmem:[#allocation2 + $0x128] sm:$0xff]
        %v902 = vld [vmem:[#allocation2 + $0x130] sm:$0xff]
        %v903 = vld [vmem:[#allocation2 + $0x138] sm:$0xff]
        %v904 = vld [vmem:[#allocation2 + $0x140] sm:$0xff]
        %v905 = vld [vmem:[#allocation2 + $0x148] sm:$0xff]
        %v906 = vld [vmem:[#allocation2 + $0x150] sm:$0xff]
        %v907 = vld [vmem:[#allocation2 + $0x158] sm:$0xff]
        %v908 = vld [vmem:[#allocation2 + $0x160] sm:$0xff]
        %v909 = vld [vmem:[#allocation2 + $0x168] sm:$0xff]
        %v910 = vld [vmem:[#allocation2 + $0x170] sm:$0xff]
        %v911 = vld [vmem:[#allocation2 + $0x178] sm:$0xff]
        %v913 = vsel %vm265, %v815, 0
        %v916 = vsel %vm265, %v816, 0
        %v919 = vsel %vm265, %v817, 0
        %v922 = vsel %vm265, %v818, 0
        %v925 = vsel %vm265, %v819, 0
        %v928 = vsel %vm265, %v820, 0
        %v931 = vsel %vm265, %v821, 0
        %v934 = vsel %vm265, %v822, 0
        %v937 = vsel %vm265, %v823, 0
        %v940 = vsel %vm265, %v824, 0
        %v943 = vsel %vm265, %v825, 0
        %v946 = vsel %vm265, %v826, 0
        %v949 = vsel %vm265, %v827, 0
        %v952 = vsel %vm265, %v828, 0
        %v955 = vsel %vm265, %v829, 0
        %v958 = vsel %vm265, %v830, 0
        %v961 = vsel %vm265, %v831, 0
        %v964 = vsel %vm265, %v832, 0
        %v967 = vsel %vm265, %v833, 0
        %v970 = vsel %vm265, %v834, 0
        %v973 = vsel %vm265, %v835, 0
        %v976 = vsel %vm265, %v836, 0
        %v979 = vsel %vm265, %v837, 0
        %v982 = vsel %vm265, %v838, 0
        %v985 = vsel %vm265, %v839, 0
        %v988 = vsel %vm265, %v840, 0
        %v991 = vsel %vm265, %v841, 0
        %v994 = vsel %vm265, %v842, 0
        %v997 = vsel %vm265, %v843, 0
        %v1000 = vsel %vm265, %v844, 0
        %v1003 = vsel %vm265, %v845, 0
        %v1006 = vsel %vm265, %v846, 0
        %v1009 = vsel %vm265, %v847, 0
        %v1012 = vsel %vm265, %v848, 0
        %v1015 = vsel %vm265, %v849, 0
        %v1018 = vsel %vm265, %v850, 0
        %v1021 = vsel %vm265, %v851, 0
        %v1024 = vsel %vm265, %v852, 0
        %v1027 = vsel %vm265, %v853, 0
        %v1030 = vsel %vm265, %v854, 0
        %v1033 = vsel %vm265, %v855, 0
        %v1036 = vsel %vm265, %v856, 0
        %v1039 = vsel %vm265, %v857, 0
        %v1042 = vsel %vm265, %v858, 0
        %v1045 = vsel %vm265, %v859, 0
        %v1048 = vsel %vm265, %v860, 0
        %v1051 = vsel %vm265, %v861, 0
        %v1054 = vsel %vm265, %v862, 0
        %1056 = vmatpush.msra.mxu0 0.0
        %1057 = vmatpush.msra.mxu0 0.0
        %1058 = vmatpush.msra.mxu0 0.0
        %1059 = vmatpush.msra.mxu0 0.0
        %1060 = vmatpush.msra.mxu0 0.0
        %1061 = vmatpush.msra.mxu0 0.0
        %1062 = vmatpush.msra.mxu0 0.0
        %1063 = vmatpush.msra.mxu0 0.0
        %1064 = vmatpush.msra.mxu0 0.0
        %1065 = vmatpush.msra.mxu0 0.0
        %1066 = vmatpush.msra.mxu0 0.0
        %1067 = vmatpush.msra.mxu0 0.0
        %1068 = vmatpush.msra.mxu0 0.0
        %1069 = vmatpush.msra.mxu0 0.0
        %1070 = vmatpush.msra.mxu0 0.0
        %1071 = vmatpush.msra.mxu0 %v863
        %1072 = vmatmul.f32.gmra.mxu0 %v913
        %v1073 = vpop.f32.mrf.mxu0
        %v1074 = vadd.f32 0.0, %v1073
        %1075 = vmatmul.f32.gmra.mxu0 %v916
        %v1076 = vpop.f32.mrf.mxu0
        %v1077 = vadd.f32 0.0, %v1076
        %1078 = vmatmul.f32.gmra.mxu0 %v919
        %v1079 = vpop.f32.mrf.mxu0
        %v1080 = vadd.f32 0.0, %v1079
        %1081 = vmatmul.f32.gmra.mxu0 %v922
        %v1082 = vpop.f32.mrf.mxu0
        %v1083 = vadd.f32 0.0, %v1082
        %1084 = vmatmul.f32.gmra.mxu0 %v925
        %v1085 = vpop.f32.mrf.mxu0
        %v1086 = vadd.f32 0.0, %v1085
        %1087 = vmatmul.f32.gmra.mxu0 %v928
        %v1088 = vpop.f32.mrf.mxu0
        %v1089 = vadd.f32 0.0, %v1088
        %1090 = vmatmul.f32.gmra.mxu0 %v931
        %v1091 = vpop.f32.mrf.mxu0
        %v1092 = vadd.f32 0.0, %v1091
        %1093 = vmatmul.f32.gmra.mxu0 %v934
        %v1094 = vpop.f32.mrf.mxu0
        %v1095 = vadd.f32 0.0, %v1094
        %1096 = vmatmul.f32.gmra.mxu0 %v937
        %v1097 = vpop.f32.mrf.mxu0
        %v1098 = vadd.f32 0.0, %v1097
        %1099 = vmatmul.f32.gmra.mxu0 %v940
        %v1100 = vpop.f32.mrf.mxu0
        %v1101 = vadd.f32 0.0, %v1100
        %1102 = vmatmul.f32.gmra.mxu0 %v943
        %v1103 = vpop.f32.mrf.mxu0
        %v1104 = vadd.f32 0.0, %v1103
        %1105 = vmatmul.f32.gmra.mxu0 %v946
        %v1106 = vpop.f32.mrf.mxu0
        %v1107 = vadd.f32 0.0, %v1106
        %1108 = vmatmul.f32.gmra.mxu0 %v949
        %v1109 = vpop.f32.mrf.mxu0
        %v1110 = vadd.f32 0.0, %v1109
        %1111 = vmatmul.f32.gmra.mxu0 %v952
        %v1112 = vpop.f32.mrf.mxu0
        %v1113 = vadd.f32 0.0, %v1112
        %1114 = vmatmul.f32.gmra.mxu0 %v955
        %v1115 = vpop.f32.mrf.mxu0
        %v1116 = vadd.f32 0.0, %v1115
        %1117 = vmatmul.f32.gmra.mxu0 %v958
        %v1118 = vpop.f32.mrf.mxu0
        %v1119 = vadd.f32 0.0, %v1118
        %1120 = vmatmul.f32.gmra.mxu0 %v961
        %v1121 = vpop.f32.mrf.mxu0
        %v1122 = vadd.f32 0.0, %v1121
        %1123 = vmatmul.f32.gmra.mxu0 %v964
        %v1124 = vpop.f32.mrf.mxu0
        %v1125 = vadd.f32 0.0, %v1124
        %1126 = vmatmul.f32.gmra.mxu0 %v967
        %v1127 = vpop.f32.mrf.mxu0
        %v1128 = vadd.f32 0.0, %v1127
        %1129 = vmatmul.f32.gmra.mxu0 %v970
        %v1130 = vpop.f32.mrf.mxu0
        %v1131 = vadd.f32 0.0, %v1130
        %1132 = vmatmul.f32.gmra.mxu0 %v973
        %v1133 = vpop.f32.mrf.mxu0
        %v1134 = vadd.f32 0.0, %v1133
        %1135 = vmatmul.f32.gmra.mxu0 %v976
        %v1136 = vpop.f32.mrf.mxu0
        %v1137 = vadd.f32 0.0, %v1136
        %1138 = vmatmul.f32.gmra.mxu0 %v979
        %v1139 = vpop.f32.mrf.mxu0
        %v1140 = vadd.f32 0.0, %v1139
        %1141 = vmatmul.f32.gmra.mxu0 %v982
        %v1142 = vpop.f32.mrf.mxu0
        %v1143 = vadd.f32 0.0, %v1142
        %1144 = vmatmul.f32.gmra.mxu0 %v985
        %v1145 = vpop.f32.mrf.mxu0
        %v1146 = vadd.f32 0.0, %v1145
        %1147 = vmatmul.f32.gmra.mxu0 %v988
        %v1148 = vpop.f32.mrf.mxu0
        %v1149 = vadd.f32 0.0, %v1148
        %1150 = vmatmul.f32.gmra.mxu0 %v991
        %v1151 = vpop.f32.mrf.mxu0
        %v1152 = vadd.f32 0.0, %v1151
        %1153 = vmatmul.f32.gmra.mxu0 %v994
        %v1154 = vpop.f32.mrf.mxu0
        %v1155 = vadd.f32 0.0, %v1154
        %1156 = vmatmul.f32.gmra.mxu0 %v997
        %v1157 = vpop.f32.mrf.mxu0
        %v1158 = vadd.f32 0.0, %v1157
        %1159 = vmatmul.f32.gmra.mxu0 %v1000
        %v1160 = vpop.f32.mrf.mxu0
        %v1161 = vadd.f32 0.0, %v1160
        %1162 = vmatmul.f32.gmra.mxu0 %v1003
        %v1163 = vpop.f32.mrf.mxu0
        %v1164 = vadd.f32 0.0, %v1163
        %1165 = vmatmul.f32.gmra.mxu0 %v1006
        %v1166 = vpop.f32.mrf.mxu0
        %v1167 = vadd.f32 0.0, %v1166
        %1168 = vmatmul.f32.gmra.mxu0 %v1009
        %v1169 = vpop.f32.mrf.mxu0
        %v1170 = vadd.f32 0.0, %v1169
        %1171 = vmatmul.f32.gmra.mxu0 %v1012
        %v1172 = vpop.f32.mrf.mxu0
        %v1173 = vadd.f32 0.0, %v1172
        %1174 = vmatmul.f32.gmra.mxu0 %v1015
        %v1175 = vpop.f32.mrf.mxu0
        %v1176 = vadd.f32 0.0, %v1175
        %1177 = vmatmul.f32.gmra.mxu0 %v1018
        %v1178 = vpop.f32.mrf.mxu0
        %v1179 = vadd.f32 0.0, %v1178
        %1180 = vmatmul.f32.gmra.mxu0 %v1021
        %v1181 = vpop.f32.mrf.mxu0
        %v1182 = vadd.f32 0.0, %v1181
        %1183 = vmatmul.f32.gmra.mxu0 %v1024
        %v1184 = vpop.f32.mrf.mxu0
        %v1185 = vadd.f32 0.0, %v1184
        %1186 = vmatmul.f32.gmra.mxu0 %v1027
        %v1187 = vpop.f32.mrf.mxu0
        %v1188 = vadd.f32 0.0, %v1187
        %1189 = vmatmul.f32.gmra.mxu0 %v1030
        %v1190 = vpop.f32.mrf.mxu0
        %v1191 = vadd.f32 0.0, %v1190
        %1192 = vmatmul.f32.gmra.mxu0 %v1033
        %v1193 = vpop.f32.mrf.mxu0
        %v1194 = vadd.f32 0.0, %v1193
        %1195 = vmatmul.f32.gmra.mxu0 %v1036
        %v1196 = vpop.f32.mrf.mxu0
        %v1197 = vadd.f32 0.0, %v1196
        %1198 = vmatmul.f32.gmra.mxu0 %v1039
        %v1199 = vpop.f32.mrf.mxu0
        %v1200 = vadd.f32 0.0, %v1199
        %1201 = vmatmul.f32.gmra.mxu0 %v1042
        %v1202 = vpop.f32.mrf.mxu0
        %v1203 = vadd.f32 0.0, %v1202
        %1204 = vmatmul.f32.gmra.mxu0 %v1045
        %v1205 = vpop.f32.mrf.mxu0
        %v1206 = vadd.f32 0.0, %v1205
        %1207 = vmatmul.f32.gmra.mxu0 %v1048
        %v1208 = vpop.f32.mrf.mxu0
        %v1209 = vadd.f32 0.0, %v1208
        %1210 = vmatmul.f32.gmra.mxu0 %v1051
        %v1211 = vpop.f32.mrf.mxu0
        %v1212 = vadd.f32 0.0, %v1211
        %1213 = vmatmul.f32.gmra.mxu0 %v1054
        %v1214 = vpop.f32.mrf.mxu0
        %v1215 = vadd.f32 0.0, %v1214
        %1216 = vdwg.mxu0
        %v1217 = vadd.f32 %v864, %v1074
        %v1218 = vadd.f32 %v865, %v1077
        %v1219 = vadd.f32 %v866, %v1080
        %v1220 = vadd.f32 %v867, %v1083
        %v1221 = vadd.f32 %v868, %v1086
        %v1222 = vadd.f32 %v869, %v1089
        %v1223 = vadd.f32 %v870, %v1092
        %v1224 = vadd.f32 %v871, %v1095
        %v1225 = vadd.f32 %v872, %v1098
        %v1226 = vadd.f32 %v873, %v1101
        %v1227 = vadd.f32 %v874, %v1104
        %v1228 = vadd.f32 %v875, %v1107
        %v1229 = vadd.f32 %v876, %v1110
        %v1230 = vadd.f32 %v877, %v1113
        %v1231 = vadd.f32 %v878, %v1116
        %v1232 = vadd.f32 %v879, %v1119
        %v1233 = vadd.f32 %v880, %v1122
        %v1234 = vadd.f32 %v881, %v1125
        %v1235 = vadd.f32 %v882, %v1128
        %v1236 = vadd.f32 %v883, %v1131
        %v1237 = vadd.f32 %v884, %v1134
        %v1238 = vadd.f32 %v885, %v1137
        %v1239 = vadd.f32 %v886, %v1140
        %v1240 = vadd.f32 %v887, %v1143
        %v1241 = vadd.f32 %v888, %v1146
        %v1242 = vadd.f32 %v889, %v1149
        %v1243 = vadd.f32 %v890, %v1152
        %v1244 = vadd.f32 %v891, %v1155
        %v1245 = vadd.f32 %v892, %v1158
        %v1246 = vadd.f32 %v893, %v1161
        %v1247 = vadd.f32 %v894, %v1164
        %v1248 = vadd.f32 %v895, %v1167
        %v1249 = vadd.f32 %v896, %v1170
        %v1250 = vadd.f32 %v897, %v1173
        %v1251 = vadd.f32 %v898, %v1176
        %v1252 = vadd.f32 %v899, %v1179
        %v1253 = vadd.f32 %v900, %v1182
        %v1254 = vadd.f32 %v901, %v1185
        %v1255 = vadd.f32 %v902, %v1188
        %v1256 = vadd.f32 %v903, %v1191
        %v1257 = vadd.f32 %v904, %v1194
        %v1258 = vadd.f32 %v905, %v1197
        %v1259 = vadd.f32 %v906, %v1200
        %v1260 = vadd.f32 %v907, %v1203
        %v1261 = vadd.f32 %v908, %v1206
        %v1262 = vadd.f32 %v909, %v1209
        %v1263 = vadd.f32 %v910, %v1212
        %v1264 = vadd.f32 %v911, %v1215
        %1265 = vst.msk [vmem:[#allocation2] sm:$0xff] %vm265, %v1217
        %1266 = vst.msk [vmem:[#allocation2 + $0x8] sm:$0xff] %vm265, %v1218
        %1267 = vst.msk [vmem:[#allocation2 + $0x10] sm:$0xff] %vm265, %v1219
        %1268 = vst.msk [vmem:[#allocation2 + $0x18] sm:$0xff] %vm265, %v1220
        %1269 = vst.msk [vmem:[#allocation2 + $0x20] sm:$0xff] %vm265, %v1221
        %1270 = vst.msk [vmem:[#allocation2 + $0x28] sm:$0xff] %vm265, %v1222
        %1271 = vst.msk [vmem:[#allocation2 + $0x30] sm:$0xff] %vm265, %v1223
        %1272 = vst.msk [vmem:[#allocation2 + $0x38] sm:$0xff] %vm265, %v1224
        %1273 = vst.msk [vmem:[#allocation2 + $0x40] sm:$0xff] %vm265, %v1225
        %1274 = vst.msk [vmem:[#allocation2 + $0x48] sm:$0xff] %vm265, %v1226
        %1275 = vst.msk [vmem:[#allocation2 + $0x50] sm:$0xff] %vm265, %v1227
        %1276 = vst.msk [vmem:[#allocation2 + $0x58] sm:$0xff] %vm265, %v1228
        %1277 = vst.msk [vmem:[#allocation2 + $0x60] sm:$0xff] %vm265, %v1229
        %1278 = vst.msk [vmem:[#allocation2 + $0x68] sm:$0xff] %vm265, %v1230
        %1279 = vst.msk [vmem:[#allocation2 + $0x70] sm:$0xff] %vm265, %v1231
        %1280 = vst.msk [vmem:[#allocation2 + $0x78] sm:$0xff] %vm265, %v1232
        %1281 = vst.msk [vmem:[#allocation2 + $0x80] sm:$0xff] %vm265, %v1233
        %1282 = vst.msk [vmem:[#allocation2 + $0x88] sm:$0xff] %vm265, %v1234
        %1283 = vst.msk [vmem:[#allocation2 + $0x90] sm:$0xff] %vm265, %v1235
        %1284 = vst.msk [vmem:[#allocation2 + $0x98] sm:$0xff] %vm265, %v1236
        %1285 = vst.msk [vmem:[#allocation2 + $0xa0] sm:$0xff] %vm265, %v1237
        %1286 = vst.msk [vmem:[#allocation2 + $0xa8] sm:$0xff] %vm265, %v1238
        %1287 = vst.msk [vmem:[#allocation2 + $0xb0] sm:$0xff] %vm265, %v1239
        %1288 = vst.msk [vmem:[#allocation2 + $0xb8] sm:$0xff] %vm265, %v1240
        %1289 = vst.msk [vmem:[#allocation2 + $0xc0] sm:$0xff] %vm265, %v1241
        %1290 = vst.msk [vmem:[#allocation2 + $0xc8] sm:$0xff] %vm265, %v1242
        %1291 = vst.msk [vmem:[#allocation2 + $0xd0] sm:$0xff] %vm265, %v1243
        %1292 = vst.msk [vmem:[#allocation2 + $0xd8] sm:$0xff] %vm265, %v1244
        %1293 = vst.msk [vmem:[#allocation2 + $0xe0] sm:$0xff] %vm265, %v1245
        %1294 = vst.msk [vmem:[#allocation2 + $0xe8] sm:$0xff] %vm265, %v1246
        %1295 = vst.msk [vmem:[#allocation2 + $0xf0] sm:$0xff] %vm265, %v1247
        %1296 = vst.msk [vmem:[#allocation2 + $0xf8] sm:$0xff] %vm265, %v1248
        %1297 = vst.msk [vmem:[#allocation2 + $0x100] sm:$0xff] %vm265, %v1249
        %1298 = vst.msk [vmem:[#allocation2 + $0x108] sm:$0xff] %vm265, %v1250
        %1299 = vst.msk [vmem:[#allocation2 + $0x110] sm:$0xff] %vm265, %v1251
        %1300 = vst.msk [vmem:[#allocation2 + $0x118] sm:$0xff] %vm265, %v1252
        %1301 = vst.msk [vmem:[#allocation2 + $0x120] sm:$0xff] %vm265, %v1253
        %1302 = vst.msk [vmem:[#allocation2 + $0x128] sm:$0xff] %vm265, %v1254
        %1303 = vst.msk [vmem:[#allocation2 + $0x130] sm:$0xff] %vm265, %v1255
        %1304 = vst.msk [vmem:[#allocation2 + $0x138] sm:$0xff] %vm265, %v1256
        %1305 = vst.msk [vmem:[#allocation2 + $0x140] sm:$0xff] %vm265, %v1257
        %1306 = vst.msk [vmem:[#allocation2 + $0x148] sm:$0xff] %vm265, %v1258
        %1307 = vst.msk [vmem:[#allocation2 + $0x150] sm:$0xff] %vm265, %v1259
        %1308 = vst.msk [vmem:[#allocation2 + $0x158] sm:$0xff] %vm265, %v1260
        %1309 = vst.msk [vmem:[#allocation2 + $0x160] sm:$0xff] %vm265, %v1261
        %1310 = vst.msk [vmem:[#allocation2 + $0x168] sm:$0xff] %vm265, %v1262
        %1311 = vst.msk [vmem:[#allocation2 + $0x170] sm:$0xff] %vm265, %v1263
        %1312 = vst.msk [vmem:[#allocation2 + $0x178] sm:$0xff] %vm265, %v1264
        %s1313 = sadd.s32 %s264, 2
        %s1314 = scalar_lea.vmem %s0, %s1313
        %v1315 = vld [vmem:[%s1314] sm:$0xff]
        %v1316 = vld [vmem:[%s1314 + $0x8] sm:$0xff]
        %v1317 = vld [vmem:[%s1314 + $0x10] sm:$0xff]
        %v1318 = vld [vmem:[%s1314 + $0x18] sm:$0xff]
        %v1319 = vld [vmem:[%s1314 + $0x20] sm:$0xff]
        %v1320 = vld [vmem:[%s1314 + $0x28] sm:$0xff]
        %v1321 = vld [vmem:[%s1314 + $0x30] sm:$0xff]
        %v1322 = vld [vmem:[%s1314 + $0x38] sm:$0xff]
        %v1323 = vld [vmem:[%s1314 + $0x40] sm:$0xff]
        %v1324 = vld [vmem:[%s1314 + $0x48] sm:$0xff]
        %v1325 = vld [vmem:[%s1314 + $0x50] sm:$0xff]
        %v1326 = vld [vmem:[%s1314 + $0x58] sm:$0xff]
        %v1327 = vld [vmem:[%s1314 + $0x60] sm:$0xff]
        %v1328 = vld [vmem:[%s1314 + $0x68] sm:$0xff]
        %v1329 = vld [vmem:[%s1314 + $0x70] sm:$0xff]
        %v1330 = vld [vmem:[%s1314 + $0x78] sm:$0xff]
        %v1331 = vld [vmem:[%s1314 + $0x80] sm:$0xff]
        %v1332 = vld [vmem:[%s1314 + $0x88] sm:$0xff]
        %v1333 = vld [vmem:[%s1314 + $0x90] sm:$0xff]
        %v1334 = vld [vmem:[%s1314 + $0x98] sm:$0xff]
        %v1335 = vld [vmem:[%s1314 + $0xa0] sm:$0xff]
        %v1336 = vld [vmem:[%s1314 + $0xa8] sm:$0xff]
        %v1337 = vld [vmem:[%s1314 + $0xb0] sm:$0xff]
        %v1338 = vld [vmem:[%s1314 + $0xb8] sm:$0xff]
        %v1339 = vld [vmem:[%s1314 + $0xc0] sm:$0xff]
        %v1340 = vld [vmem:[%s1314 + $0xc8] sm:$0xff]
        %v1341 = vld [vmem:[%s1314 + $0xd0] sm:$0xff]
        %v1342 = vld [vmem:[%s1314 + $0xd8] sm:$0xff]
        %v1343 = vld [vmem:[%s1314 + $0xe0] sm:$0xff]
        %v1344 = vld [vmem:[%s1314 + $0xe8] sm:$0xff]
        %v1345 = vld [vmem:[%s1314 + $0xf0] sm:$0xff]
        %v1346 = vld [vmem:[%s1314 + $0xf8] sm:$0xff]
        %v1347 = vld [vmem:[%s1314 + $0x100] sm:$0xff]
        %v1348 = vld [vmem:[%s1314 + $0x108] sm:$0xff]
        %v1349 = vld [vmem:[%s1314 + $0x110] sm:$0xff]
        %v1350 = vld [vmem:[%s1314 + $0x118] sm:$0xff]
        %v1351 = vld [vmem:[%s1314 + $0x120] sm:$0xff]
        %v1352 = vld [vmem:[%s1314 + $0x128] sm:$0xff]
        %v1353 = vld [vmem:[%s1314 + $0x130] sm:$0xff]
        %v1354 = vld [vmem:[%s1314 + $0x138] sm:$0xff]
        %v1355 = vld [vmem:[%s1314 + $0x140] sm:$0xff]
        %v1356 = vld [vmem:[%s1314 + $0x148] sm:$0xff]
        %v1357 = vld [vmem:[%s1314 + $0x150] sm:$0xff]
        %v1358 = vld [vmem:[%s1314 + $0x158] sm:$0xff]
        %v1359 = vld [vmem:[%s1314 + $0x160] sm:$0xff]
        %v1360 = vld [vmem:[%s1314 + $0x168] sm:$0xff]
        %v1361 = vld [vmem:[%s1314 + $0x170] sm:$0xff]
        %v1362 = vld [vmem:[%s1314 + $0x178] sm:$0xff]
        %v1363 = vld [vmem:[%s2 + $0x10] sm:$0xff]
        %v1364 = vld [vmem:[#allocation2] sm:$0xff]
        %v1365 = vld [vmem:[#allocation2 + $0x8] sm:$0xff]
        %v1366 = vld [vmem:[#allocation2 + $0x10] sm:$0xff]
        %v1367 = vld [vmem:[#allocation2 + $0x18] sm:$0xff]
        %v1368 = vld [vmem:[#allocation2 + $0x20] sm:$0xff]
        %v1369 = vld [vmem:[#allocation2 + $0x28] sm:$0xff]
        %v1370 = vld [vmem:[#allocation2 + $0x30] sm:$0xff]
        %v1371 = vld [vmem:[#allocation2 + $0x38] sm:$0xff]
        %v1372 = vld [vmem:[#allocation2 + $0x40] sm:$0xff]
        %v1373 = vld [vmem:[#allocation2 + $0x48] sm:$0xff]
        %v1374 = vld [vmem:[#allocation2 + $0x50] sm:$0xff]
        %v1375 = vld [vmem:[#allocation2 + $0x58] sm:$0xff]
        %v1376 = vld [vmem:[#allocation2 + $0x60] sm:$0xff]
        %v1377 = vld [vmem:[#allocation2 + $0x68] sm:$0xff]
        %v1378 = vld [vmem:[#allocation2 + $0x70] sm:$0xff]
        %v1379 = vld [vmem:[#allocation2 + $0x78] sm:$0xff]
        %v1380 = vld [vmem:[#allocation2 + $0x80] sm:$0xff]
        %v1381 = vld [vmem:[#allocation2 + $0x88] sm:$0xff]
        %v1382 = vld [vmem:[#allocation2 + $0x90] sm:$0xff]
        %v1383 = vld [vmem:[#allocation2 + $0x98] sm:$0xff]
        %v1384 = vld [vmem:[#allocation2 + $0xa0] sm:$0xff]
        %v1385 = vld [vmem:[#allocation2 + $0xa8] sm:$0xff]
        %v1386 = vld [vmem:[#allocation2 + $0xb0] sm:$0xff]
        %v1387 = vld [vmem:[#allocation2 + $0xb8] sm:$0xff]
        %v1388 = vld [vmem:[#allocation2 + $0xc0] sm:$0xff]
        %v1389 = vld [vmem:[#allocation2 + $0xc8] sm:$0xff]
        %v1390 = vld [vmem:[#allocation2 + $0xd0] sm:$0xff]
        %v1391 = vld [vmem:[#allocation2 + $0xd8] sm:$0xff]
        %v1392 = vld [vmem:[#allocation2 + $0xe0] sm:$0xff]
        %v1393 = vld [vmem:[#allocation2 + $0xe8] sm:$0xff]
        %v1394 = vld [vmem:[#allocation2 + $0xf0] sm:$0xff]
        %v1395 = vld [vmem:[#allocation2 + $0xf8] sm:$0xff]
        %v1396 = vld [vmem:[#allocation2 + $0x100] sm:$0xff]
        %v1397 = vld [vmem:[#allocation2 + $0x108] sm:$0xff]
        %v1398 = vld [vmem:[#allocation2 + $0x110] sm:$0xff]
        %v1399 = vld [vmem:[#allocation2 + $0x118] sm:$0xff]
        %v1400 = vld [vmem:[#allocation2 + $0x120] sm:$0xff]
        %v1401 = vld [vmem:[#allocation2 + $0x128] sm:$0xff]
        %v1402 = vld [vmem:[#allocation2 + $0x130] sm:$0xff]
        %v1403 = vld [vmem:[#allocation2 + $0x138] sm:$0xff]
        %v1404 = vld [vmem:[#allocation2 + $0x140] sm:$0xff]
        %v1405 = vld [vmem:[#allocation2 + $0x148] sm:$0xff]
        %v1406 = vld [vmem:[#allocation2 + $0x150] sm:$0xff]
        %v1407 = vld [vmem:[#allocation2 + $0x158] sm:$0xff]
        %v1408 = vld [vmem:[#allocation2 + $0x160] sm:$0xff]
        %v1409 = vld [vmem:[#allocation2 + $0x168] sm:$0xff]
        %v1410 = vld [vmem:[#allocation2 + $0x170] sm:$0xff]
        %v1411 = vld [vmem:[#allocation2 + $0x178] sm:$0xff]
        %v1413 = vsel %vm265, %v1315, 0
        %v1416 = vsel %vm265, %v1316, 0
        %v1419 = vsel %vm265, %v1317, 0
        %v1422 = vsel %vm265, %v1318, 0
        %v1425 = vsel %vm265, %v1319, 0
        %v1428 = vsel %vm265, %v1320, 0
        %v1431 = vsel %vm265, %v1321, 0
        %v1434 = vsel %vm265, %v1322, 0
        %v1437 = vsel %vm265, %v1323, 0
        %v1440 = vsel %vm265, %v1324, 0
        %v1443 = vsel %vm265, %v1325, 0
        %v1446 = vsel %vm265, %v1326, 0
        %v1449 = vsel %vm265, %v1327, 0
        %v1452 = vsel %vm265, %v1328, 0
        %v1455 = vsel %vm265, %v1329, 0
        %v1458 = vsel %vm265, %v1330, 0
        %v1461 = vsel %vm265, %v1331, 0
        %v1464 = vsel %vm265, %v1332, 0
        %v1467 = vsel %vm265, %v1333, 0
        %v1470 = vsel %vm265, %v1334, 0
        %v1473 = vsel %vm265, %v1335, 0
        %v1476 = vsel %vm265, %v1336, 0
        %v1479 = vsel %vm265, %v1337, 0
        %v1482 = vsel %vm265, %v1338, 0
        %v1485 = vsel %vm265, %v1339, 0
        %v1488 = vsel %vm265, %v1340, 0
        %v1491 = vsel %vm265, %v1341, 0
        %v1494 = vsel %vm265, %v1342, 0
        %v1497 = vsel %vm265, %v1343, 0
        %v1500 = vsel %vm265, %v1344, 0
        %v1503 = vsel %vm265, %v1345, 0
        %v1506 = vsel %vm265, %v1346, 0
        %v1509 = vsel %vm265, %v1347, 0
        %v1512 = vsel %vm265, %v1348, 0
        %v1515 = vsel %vm265, %v1349, 0
        %v1518 = vsel %vm265, %v1350, 0
        %v1521 = vsel %vm265, %v1351, 0
        %v1524 = vsel %vm265, %v1352, 0
        %v1527 = vsel %vm265, %v1353, 0
        %v1530 = vsel %vm265, %v1354, 0
        %v1533 = vsel %vm265, %v1355, 0
        %v1536 = vsel %vm265, %v1356, 0
        %v1539 = vsel %vm265, %v1357, 0
        %v1542 = vsel %vm265, %v1358, 0
        %v1545 = vsel %vm265, %v1359, 0
        %v1548 = vsel %vm265, %v1360, 0
        %v1551 = vsel %vm265, %v1361, 0
        %v1554 = vsel %vm265, %v1362, 0
        %1556 = vmatpush.msra.mxu0 0.0
        %1557 = vmatpush.msra.mxu0 0.0
        %1558 = vmatpush.msra.mxu0 0.0
        %1559 = vmatpush.msra.mxu0 0.0
        %1560 = vmatpush.msra.mxu0 0.0
        %1561 = vmatpush.msra.mxu0 0.0
        %1562 = vmatpush.msra.mxu0 0.0
        %1563 = vmatpush.msra.mxu0 0.0
        %1564 = vmatpush.msra.mxu0 0.0
        %1565 = vmatpush.msra.mxu0 0.0
        %1566 = vmatpush.msra.mxu0 0.0
        %1567 = vmatpush.msra.mxu0 0.0
        %1568 = vmatpush.msra.mxu0 0.0
        %1569 = vmatpush.msra.mxu0 0.0
        %1570 = vmatpush.msra.mxu0 0.0
        %1571 = vmatpush.msra.mxu0 %v1363
        %1572 = vmatmul.f32.gmra.mxu0 %v1413
        %v1573 = vpop.f32.mrf.mxu0
        %v1574 = vadd.f32 0.0, %v1573
        %1575 = vmatmul.f32.gmra.mxu0 %v1416
        %v1576 = vpop.f32.mrf.mxu0
        %v1577 = vadd.f32 0.0, %v1576
        %1578 = vmatmul.f32.gmra.mxu0 %v1419
        %v1579 = vpop.f32.mrf.mxu0
        %v1580 = vadd.f32 0.0, %v1579
        %1581 = vmatmul.f32.gmra.mxu0 %v1422
        %v1582 = vpop.f32.mrf.mxu0
        %v1583 = vadd.f32 0.0, %v1582
        %1584 = vmatmul.f32.gmra.mxu0 %v1425
        %v1585 = vpop.f32.mrf.mxu0
        %v1586 = vadd.f32 0.0, %v1585
        %1587 = vmatmul.f32.gmra.mxu0 %v1428
        %v1588 = vpop.f32.mrf.mxu0
        %v1589 = vadd.f32 0.0, %v1588
        %1590 = vmatmul.f32.gmra.mxu0 %v1431
        %v1591 = vpop.f32.mrf.mxu0
        %v1592 = vadd.f32 0.0, %v1591
        %1593 = vmatmul.f32.gmra.mxu0 %v1434
        %v1594 = vpop.f32.mrf.mxu0
        %v1595 = vadd.f32 0.0, %v1594
        %1596 = vmatmul.f32.gmra.mxu0 %v1437
        %v1597 = vpop.f32.mrf.mxu0
        %v1598 = vadd.f32 0.0, %v1597
        %1599 = vmatmul.f32.gmra.mxu0 %v1440
        %v1600 = vpop.f32.mrf.mxu0
        %v1601 = vadd.f32 0.0, %v1600
        %1602 = vmatmul.f32.gmra.mxu0 %v1443
        %v1603 = vpop.f32.mrf.mxu0
        %v1604 = vadd.f32 0.0, %v1603
        %1605 = vmatmul.f32.gmra.mxu0 %v1446
        %v1606 = vpop.f32.mrf.mxu0
        %v1607 = vadd.f32 0.0, %v1606
        %1608 = vmatmul.f32.gmra.mxu0 %v1449
        %v1609 = vpop.f32.mrf.mxu0
        %v1610 = vadd.f32 0.0, %v1609
        %1611 = vmatmul.f32.gmra.mxu0 %v1452
        %v1612 = vpop.f32.mrf.mxu0
        %v1613 = vadd.f32 0.0, %v1612
        %1614 = vmatmul.f32.gmra.mxu0 %v1455
        %v1615 = vpop.f32.mrf.mxu0
        %v1616 = vadd.f32 0.0, %v1615
        %1617 = vmatmul.f32.gmra.mxu0 %v1458
        %v1618 = vpop.f32.mrf.mxu0
        %v1619 = vadd.f32 0.0, %v1618
        %1620 = vmatmul.f32.gmra.mxu0 %v1461
        %v1621 = vpop.f32.mrf.mxu0
        %v1622 = vadd.f32 0.0, %v1621
        %1623 = vmatmul.f32.gmra.mxu0 %v1464
        %v1624 = vpop.f32.mrf.mxu0
        %v1625 = vadd.f32 0.0, %v1624
        %1626 = vmatmul.f32.gmra.mxu0 %v1467
        %v1627 = vpop.f32.mrf.mxu0
        %v1628 = vadd.f32 0.0, %v1627
        %1629 = vmatmul.f32.gmra.mxu0 %v1470
        %v1630 = vpop.f32.mrf.mxu0
        %v1631 = vadd.f32 0.0, %v1630
        %1632 = vmatmul.f32.gmra.mxu0 %v1473
        %v1633 = vpop.f32.mrf.mxu0
        %v1634 = vadd.f32 0.0, %v1633
        %1635 = vmatmul.f32.gmra.mxu0 %v1476
        %v1636 = vpop.f32.mrf.mxu0
        %v1637 = vadd.f32 0.0, %v1636
        %1638 = vmatmul.f32.gmra.mxu0 %v1479
        %v1639 = vpop.f32.mrf.mxu0
        %v1640 = vadd.f32 0.0, %v1639
        %1641 = vmatmul.f32.gmra.mxu0 %v1482
        %v1642 = vpop.f32.mrf.mxu0
        %v1643 = vadd.f32 0.0, %v1642
        %1644 = vmatmul.f32.gmra.mxu0 %v1485
        %v1645 = vpop.f32.mrf.mxu0
        %v1646 = vadd.f32 0.0, %v1645
        %1647 = vmatmul.f32.gmra.mxu0 %v1488
        %v1648 = vpop.f32.mrf.mxu0
        %v1649 = vadd.f32 0.0, %v1648
        %1650 = vmatmul.f32.gmra.mxu0 %v1491
        %v1651 = vpop.f32.mrf.mxu0
        %v1652 = vadd.f32 0.0, %v1651
        %1653 = vmatmul.f32.gmra.mxu0 %v1494
        %v1654 = vpop.f32.mrf.mxu0
        %v1655 = vadd.f32 0.0, %v1654
        %1656 = vmatmul.f32.gmra.mxu0 %v1497
        %v1657 = vpop.f32.mrf.mxu0
        %v1658 = vadd.f32 0.0, %v1657
        %1659 = vmatmul.f32.gmra.mxu0 %v1500
        %v1660 = vpop.f32.mrf.mxu0
        %v1661 = vadd.f32 0.0, %v1660
        %1662 = vmatmul.f32.gmra.mxu0 %v1503
        %v1663 = vpop.f32.mrf.mxu0
        %v1664 = vadd.f32 0.0, %v1663
        %1665 = vmatmul.f32.gmra.mxu0 %v1506
        %v1666 = vpop.f32.mrf.mxu0
        %v1667 = vadd.f32 0.0, %v1666
        %1668 = vmatmul.f32.gmra.mxu0 %v1509
        %v1669 = vpop.f32.mrf.mxu0
        %v1670 = vadd.f32 0.0, %v1669
        %1671 = vmatmul.f32.gmra.mxu0 %v1512
        %v1672 = vpop.f32.mrf.mxu0
        %v1673 = vadd.f32 0.0, %v1672
        %1674 = vmatmul.f32.gmra.mxu0 %v1515
        %v1675 = vpop.f32.mrf.mxu0
        %v1676 = vadd.f32 0.0, %v1675
        %1677 = vmatmul.f32.gmra.mxu0 %v1518
        %v1678 = vpop.f32.mrf.mxu0
        %v1679 = vadd.f32 0.0, %v1678
        %1680 = vmatmul.f32.gmra.mxu0 %v1521
        %v1681 = vpop.f32.mrf.mxu0
        %v1682 = vadd.f32 0.0, %v1681
        %1683 = vmatmul.f32.gmra.mxu0 %v1524
        %v1684 = vpop.f32.mrf.mxu0
        %v1685 = vadd.f32 0.0, %v1684
        %1686 = vmatmul.f32.gmra.mxu0 %v1527
        %v1687 = vpop.f32.mrf.mxu0
        %v1688 = vadd.f32 0.0, %v1687
        %1689 = vmatmul.f32.gmra.mxu0 %v1530
        %v1690 = vpop.f32.mrf.mxu0
        %v1691 = vadd.f32 0.0, %v1690
        %1692 = vmatmul.f32.gmra.mxu0 %v1533
        %v1693 = vpop.f32.mrf.mxu0
        %v1694 = vadd.f32 0.0, %v1693
        %1695 = vmatmul.f32.gmra.mxu0 %v1536
        %v1696 = vpop.f32.mrf.mxu0
        %v1697 = vadd.f32 0.0, %v1696
        %1698 = vmatmul.f32.gmra.mxu0 %v1539
        %v1699 = vpop.f32.mrf.mxu0
        %v1700 = vadd.f32 0.0, %v1699
        %1701 = vmatmul.f32.gmra.mxu0 %v1542
        %v1702 = vpop.f32.mrf.mxu0
        %v1703 = vadd.f32 0.0, %v1702
        %1704 = vmatmul.f32.gmra.mxu0 %v1545
        %v1705 = vpop.f32.mrf.mxu0
        %v1706 = vadd.f32 0.0, %v1705
        %1707 = vmatmul.f32.gmra.mxu0 %v1548
        %v1708 = vpop.f32.mrf.mxu0
        %v1709 = vadd.f32 0.0, %v1708
        %1710 = vmatmul.f32.gmra.mxu0 %v1551
        %v1711 = vpop.f32.mrf.mxu0
        %v1712 = vadd.f32 0.0, %v1711
        %1713 = vmatmul.f32.gmra.mxu0 %v1554
        %v1714 = vpop.f32.mrf.mxu0
        %v1715 = vadd.f32 0.0, %v1714
        %1716 = vdwg.mxu0
        %v1717 = vadd.f32 %v1364, %v1574
        %v1718 = vadd.f32 %v1365, %v1577
        %v1719 = vadd.f32 %v1366, %v1580
        %v1720 = vadd.f32 %v1367, %v1583
        %v1721 = vadd.f32 %v1368, %v1586
        %v1722 = vadd.f32 %v1369, %v1589
        %v1723 = vadd.f32 %v1370, %v1592
        %v1724 = vadd.f32 %v1371, %v1595
        %v1725 = vadd.f32 %v1372, %v1598
        %v1726 = vadd.f32 %v1373, %v1601
        %v1727 = vadd.f32 %v1374, %v1604
        %v1728 = vadd.f32 %v1375, %v1607
        %v1729 = vadd.f32 %v1376, %v1610
        %v1730 = vadd.f32 %v1377, %v1613
        %v1731 = vadd.f32 %v1378, %v1616
        %v1732 = vadd.f32 %v1379, %v1619
        %v1733 = vadd.f32 %v1380, %v1622
        %v1734 = vadd.f32 %v1381, %v1625
        %v1735 = vadd.f32 %v1382, %v1628
        %v1736 = vadd.f32 %v1383, %v1631
        %v1737 = vadd.f32 %v1384, %v1634
        %v1738 = vadd.f32 %v1385, %v1637
        %v1739 = vadd.f32 %v1386, %v1640
        %v1740 = vadd.f32 %v1387, %v1643
        %v1741 = vadd.f32 %v1388, %v1646
        %v1742 = vadd.f32 %v1389, %v1649
        %v1743 = vadd.f32 %v1390, %v1652
        %v1744 = vadd.f32 %v1391, %v1655
        %v1745 = vadd.f32 %v1392, %v1658
        %v1746 = vadd.f32 %v1393, %v1661
        %v1747 = vadd.f32 %v1394, %v1664
        %v1748 = vadd.f32 %v1395, %v1667
        %v1749 = vadd.f32 %v1396, %v1670
        %v1750 = vadd.f32 %v1397, %v1673
        %v1751 = vadd.f32 %v1398, %v1676
        %v1752 = vadd.f32 %v1399, %v1679
        %v1753 = vadd.f32 %v1400, %v1682
        %v1754 = vadd.f32 %v1401, %v1685
        %v1755 = vadd.f32 %v1402, %v1688
        %v1756 = vadd.f32 %v1403, %v1691
        %v1757 = vadd.f32 %v1404, %v1694
        %v1758 = vadd.f32 %v1405, %v1697
        %v1759 = vadd.f32 %v1406, %v1700
        %v1760 = vadd.f32 %v1407, %v1703
        %v1761 = vadd.f32 %v1408, %v1706
        %v1762 = vadd.f32 %v1409, %v1709
        %v1763 = vadd.f32 %v1410, %v1712
        %v1764 = vadd.f32 %v1411, %v1715
        %1765 = vst.msk [vmem:[#allocation2] sm:$0xff] %vm265, %v1717
        %1766 = vst.msk [vmem:[#allocation2 + $0x8] sm:$0xff] %vm265, %v1718
        %1767 = vst.msk [vmem:[#allocation2 + $0x10] sm:$0xff] %vm265, %v1719
        %1768 = vst.msk [vmem:[#allocation2 + $0x18] sm:$0xff] %vm265, %v1720
        %1769 = vst.msk [vmem:[#allocation2 + $0x20] sm:$0xff] %vm265, %v1721
        %1770 = vst.msk [vmem:[#allocation2 + $0x28] sm:$0xff] %vm265, %v1722
        %1771 = vst.msk [vmem:[#allocation2 + $0x30] sm:$0xff] %vm265, %v1723
        %1772 = vst.msk [vmem:[#allocation2 + $0x38] sm:$0xff] %vm265, %v1724
        %1773 = vst.msk [vmem:[#allocation2 + $0x40] sm:$0xff] %vm265, %v1725
        %1774 = vst.msk [vmem:[#allocation2 + $0x48] sm:$0xff] %vm265, %v1726
        %1775 = vst.msk [vmem:[#allocation2 + $0x50] sm:$0xff] %vm265, %v1727
        %1776 = vst.msk [vmem:[#allocation2 + $0x58] sm:$0xff] %vm265, %v1728
        %1777 = vst.msk [vmem:[#allocation2 + $0x60] sm:$0xff] %vm265, %v1729
        %1778 = vst.msk [vmem:[#allocation2 + $0x68] sm:$0xff] %vm265, %v1730
        %1779 = vst.msk [vmem:[#allocation2 + $0x70] sm:$0xff] %vm265, %v1731
        %1780 = vst.msk [vmem:[#allocation2 + $0x78] sm:$0xff] %vm265, %v1732
        %1781 = vst.msk [vmem:[#allocation2 + $0x80] sm:$0xff] %vm265, %v1733
        %1782 = vst.msk [vmem:[#allocation2 + $0x88] sm:$0xff] %vm265, %v1734
        %1783 = vst.msk [vmem:[#allocation2 + $0x90] sm:$0xff] %vm265, %v1735
        %1784 = vst.msk [vmem:[#allocation2 + $0x98] sm:$0xff] %vm265, %v1736
        %1785 = vst.msk [vmem:[#allocation2 + $0xa0] sm:$0xff] %vm265, %v1737
        %1786 = vst.msk [vmem:[#allocation2 + $0xa8] sm:$0xff] %vm265, %v1738
        %1787 = vst.msk [vmem:[#allocation2 + $0xb0] sm:$0xff] %vm265, %v1739
        %1788 = vst.msk [vmem:[#allocation2 + $0xb8] sm:$0xff] %vm265, %v1740
        %1789 = vst.msk [vmem:[#allocation2 + $0xc0] sm:$0xff] %vm265, %v1741
        %1790 = vst.msk [vmem:[#allocation2 + $0xc8] sm:$0xff] %vm265, %v1742
        %1791 = vst.msk [vmem:[#allocation2 + $0xd0] sm:$0xff] %vm265, %v1743
        %1792 = vst.msk [vmem:[#allocation2 + $0xd8] sm:$0xff] %vm265, %v1744
        %1793 = vst.msk [vmem:[#allocation2 + $0xe0] sm:$0xff] %vm265, %v1745
        %1794 = vst.msk [vmem:[#allocation2 + $0xe8] sm:$0xff] %vm265, %v1746
        %1795 = vst.msk [vmem:[#allocation2 + $0xf0] sm:$0xff] %vm265, %v1747
        %1796 = vst.msk [vmem:[#allocation2 + $0xf8] sm:$0xff] %vm265, %v1748
        %1797 = vst.msk [vmem:[#allocation2 + $0x100] sm:$0xff] %vm265, %v1749
        %1798 = vst.msk [vmem:[#allocation2 + $0x108] sm:$0xff] %vm265, %v1750
        %1799 = vst.msk [vmem:[#allocation2 + $0x110] sm:$0xff] %vm265, %v1751
        %1800 = vst.msk [vmem:[#allocation2 + $0x118] sm:$0xff] %vm265, %v1752
        %1801 = vst.msk [vmem:[#allocation2 + $0x120] sm:$0xff] %vm265, %v1753
        %1802 = vst.msk [vmem:[#allocation2 + $0x128] sm:$0xff] %vm265, %v1754
        %1803 = vst.msk [vmem:[#allocation2 + $0x130] sm:$0xff] %vm265, %v1755
        %1804 = vst.msk [vmem:[#allocation2 + $0x138] sm:$0xff] %vm265, %v1756
        %1805 = vst.msk [vmem:[#allocation2 + $0x140] sm:$0xff] %vm265, %v1757
        %1806 = vst.msk [vmem:[#allocation2 + $0x148] sm:$0xff] %vm265, %v1758
        %1807 = vst.msk [vmem:[#allocation2 + $0x150] sm:$0xff] %vm265, %v1759
        %1808 = vst.msk [vmem:[#allocation2 + $0x158] sm:$0xff] %vm265, %v1760
        %1809 = vst.msk [vmem:[#allocation2 + $0x160] sm:$0xff] %vm265, %v1761
        %1810 = vst.msk [vmem:[#allocation2 + $0x168] sm:$0xff] %vm265, %v1762
        %1811 = vst.msk [vmem:[#allocation2 + $0x170] sm:$0xff] %vm265, %v1763
        %1812 = vst.msk [vmem:[#allocation2 + $0x178] sm:$0xff] %vm265, %v1764
        %s1813 = sadd.s32 %s264, 24
        %s1814 = scalar_lea.vmem %s0, %s1813
        %v1815 = vld [vmem:[%s1814] sm:$0xff]
        %v1816 = vld [vmem:[%s1814 + $0x8] sm:$0xff]
        %v1817 = vld [vmem:[%s1814 + $0x10] sm:$0xff]
        %v1818 = vld [vmem:[%s1814 + $0x18] sm:$0xff]
        %v1819 = vld [vmem:[%s1814 + $0x20] sm:$0xff]
        %v1820 = vld [vmem:[%s1814 + $0x28] sm:$0xff]
        %v1821 = vld [vmem:[%s1814 + $0x30] sm:$0xff]
        %v1822 = vld [vmem:[%s1814 + $0x38] sm:$0xff]
        %v1823 = vld [vmem:[%s1814 + $0x40] sm:$0xff]
        %v1824 = vld [vmem:[%s1814 + $0x48] sm:$0xff]
        %v1825 = vld [vmem:[%s1814 + $0x50] sm:$0xff]
        %v1826 = vld [vmem:[%s1814 + $0x58] sm:$0xff]
        %v1827 = vld [vmem:[%s1814 + $0x60] sm:$0xff]
        %v1828 = vld [vmem:[%s1814 + $0x68] sm:$0xff]
        %v1829 = vld [vmem:[%s1814 + $0x70] sm:$0xff]
        %v1830 = vld [vmem:[%s1814 + $0x78] sm:$0xff]
        %v1831 = vld [vmem:[%s1814 + $0x80] sm:$0xff]
        %v1832 = vld [vmem:[%s1814 + $0x88] sm:$0xff]
        %v1833 = vld [vmem:[%s1814 + $0x90] sm:$0xff]
        %v1834 = vld [vmem:[%s1814 + $0x98] sm:$0xff]
        %v1835 = vld [vmem:[%s1814 + $0xa0] sm:$0xff]
        %v1836 = vld [vmem:[%s1814 + $0xa8] sm:$0xff]
        %v1837 = vld [vmem:[%s1814 + $0xb0] sm:$0xff]
        %v1838 = vld [vmem:[%s1814 + $0xb8] sm:$0xff]
        %v1839 = vld [vmem:[%s1814 + $0xc0] sm:$0xff]
        %v1840 = vld [vmem:[%s1814 + $0xc8] sm:$0xff]
        %v1841 = vld [vmem:[%s1814 + $0xd0] sm:$0xff]
        %v1842 = vld [vmem:[%s1814 + $0xd8] sm:$0xff]
        %v1843 = vld [vmem:[%s1814 + $0xe0] sm:$0xff]
        %v1844 = vld [vmem:[%s1814 + $0xe8] sm:$0xff]
        %v1845 = vld [vmem:[%s1814 + $0xf0] sm:$0xff]
        %v1846 = vld [vmem:[%s1814 + $0xf8] sm:$0xff]
        %v1847 = vld [vmem:[%s1814 + $0x100] sm:$0xff]
        %v1848 = vld [vmem:[%s1814 + $0x108] sm:$0xff]
        %v1849 = vld [vmem:[%s1814 + $0x110] sm:$0xff]
        %v1850 = vld [vmem:[%s1814 + $0x118] sm:$0xff]
        %v1851 = vld [vmem:[%s1814 + $0x120] sm:$0xff]
        %v1852 = vld [vmem:[%s1814 + $0x128] sm:$0xff]
        %v1853 = vld [vmem:[%s1814 + $0x130] sm:$0xff]
        %v1854 = vld [vmem:[%s1814 + $0x138] sm:$0xff]
        %v1855 = vld [vmem:[%s1814 + $0x140] sm:$0xff]
        %v1856 = vld [vmem:[%s1814 + $0x148] sm:$0xff]
        %v1857 = vld [vmem:[%s1814 + $0x150] sm:$0xff]
        %v1858 = vld [vmem:[%s1814 + $0x158] sm:$0xff]
        %v1859 = vld [vmem:[%s1814 + $0x160] sm:$0xff]
        %v1860 = vld [vmem:[%s1814 + $0x168] sm:$0xff]
        %v1861 = vld [vmem:[%s1814 + $0x170] sm:$0xff]
        %v1862 = vld [vmem:[%s1814 + $0x178] sm:$0xff]
        %v1863 = vld [vmem:[%s2 + $0x18] sm:$0xff]
        %v1864 = vld [vmem:[#allocation2] sm:$0xff]
        %v1865 = vld [vmem:[#allocation2 + $0x8] sm:$0xff]
        %v1866 = vld [vmem:[#allocation2 + $0x10] sm:$0xff]
        %v1867 = vld [vmem:[#allocation2 + $0x18] sm:$0xff]
        %v1868 = vld [vmem:[#allocation2 + $0x20] sm:$0xff]
        %v1869 = vld [vmem:[#allocation2 + $0x28] sm:$0xff]
        %v1870 = vld [vmem:[#allocation2 + $0x30] sm:$0xff]
        %v1871 = vld [vmem:[#allocation2 + $0x38] sm:$0xff]
        %v1872 = vld [vmem:[#allocation2 + $0x40] sm:$0xff]
        %v1873 = vld [vmem:[#allocation2 + $0x48] sm:$0xff]
        %v1874 = vld [vmem:[#allocation2 + $0x50] sm:$0xff]
        %v1875 = vld [vmem:[#allocation2 + $0x58] sm:$0xff]
        %v1876 = vld [vmem:[#allocation2 + $0x60] sm:$0xff]
        %v1877 = vld [vmem:[#allocation2 + $0x68] sm:$0xff]
        %v1878 = vld [vmem:[#allocation2 + $0x70] sm:$0xff]
        %v1879 = vld [vmem:[#allocation2 + $0x78] sm:$0xff]
        %v1880 = vld [vmem:[#allocation2 + $0x80] sm:$0xff]
        %v1881 = vld [vmem:[#allocation2 + $0x88] sm:$0xff]
        %v1882 = vld [vmem:[#allocation2 + $0x90] sm:$0xff]
        %v1883 = vld [vmem:[#allocation2 + $0x98] sm:$0xff]
        %v1884 = vld [vmem:[#allocation2 + $0xa0] sm:$0xff]
        %v1885 = vld [vmem:[#allocation2 + $0xa8] sm:$0xff]
        %v1886 = vld [vmem:[#allocation2 + $0xb0] sm:$0xff]
        %v1887 = vld [vmem:[#allocation2 + $0xb8] sm:$0xff]
        %v1888 = vld [vmem:[#allocation2 + $0xc0] sm:$0xff]
        %v1889 = vld [vmem:[#allocation2 + $0xc8] sm:$0xff]
        %v1890 = vld [vmem:[#allocation2 + $0xd0] sm:$0xff]
        %v1891 = vld [vmem:[#allocation2 + $0xd8] sm:$0xff]
        %v1892 = vld [vmem:[#allocation2 + $0xe0] sm:$0xff]
        %v1893 = vld [vmem:[#allocation2 + $0xe8] sm:$0xff]
        %v1894 = vld [vmem:[#allocation2 + $0xf0] sm:$0xff]
        %v1895 = vld [vmem:[#allocation2 + $0xf8] sm:$0xff]
        %v1896 = vld [vmem:[#allocation2 + $0x100] sm:$0xff]
        %v1897 = vld [vmem:[#allocation2 + $0x108] sm:$0xff]
        %v1898 = vld [vmem:[#allocation2 + $0x110] sm:$0xff]
        %v1899 = vld [vmem:[#allocation2 + $0x118] sm:$0xff]
        %v1900 = vld [vmem:[#allocation2 + $0x120] sm:$0xff]
        %v1901 = vld [vmem:[#allocation2 + $0x128] sm:$0xff]
        %v1902 = vld [vmem:[#allocation2 + $0x130] sm:$0xff]
        %v1903 = vld [vmem:[#allocation2 + $0x138] sm:$0xff]
        %v1904 = vld [vmem:[#allocation2 + $0x140] sm:$0xff]
        %v1905 = vld [vmem:[#allocation2 + $0x148] sm:$0xff]
        %v1906 = vld [vmem:[#allocation2 + $0x150] sm:$0xff]
        %v1907 = vld [vmem:[#allocation2 + $0x158] sm:$0xff]
        %v1908 = vld [vmem:[#allocation2 + $0x160] sm:$0xff]
        %v1909 = vld [vmem:[#allocation2 + $0x168] sm:$0xff]
        %v1910 = vld [vmem:[#allocation2 + $0x170] sm:$0xff]
        %v1911 = vld [vmem:[#allocation2 + $0x178] sm:$0xff]
        %v1913 = vsel %vm265, %v1815, 0
        %v1916 = vsel %vm265, %v1816, 0
        %v1919 = vsel %vm265, %v1817, 0
        %v1922 = vsel %vm265, %v1818, 0
        %v1925 = vsel %vm265, %v1819, 0
        %v1928 = vsel %vm265, %v1820, 0
        %v1931 = vsel %vm265, %v1821, 0
        %v1934 = vsel %vm265, %v1822, 0
        %v1937 = vsel %vm265, %v1823, 0
        %v1940 = vsel %vm265, %v1824, 0
        %v1943 = vsel %vm265, %v1825, 0
        %v1946 = vsel %vm265, %v1826, 0
        %v1949 = vsel %vm265, %v1827, 0
        %v1952 = vsel %vm265, %v1828, 0
        %v1955 = vsel %vm265, %v1829, 0
        %v1958 = vsel %vm265, %v1830, 0
        %v1961 = vsel %vm265, %v1831, 0
        %v1964 = vsel %vm265, %v1832, 0
        %v1967 = vsel %vm265, %v1833, 0
        %v1970 = vsel %vm265, %v1834, 0
        %v1973 = vsel %vm265, %v1835, 0
        %v1976 = vsel %vm265, %v1836, 0
        %v1979 = vsel %vm265, %v1837, 0
        %v1982 = vsel %vm265, %v1838, 0
        %v1985 = vsel %vm265, %v1839, 0
        %v1988 = vsel %vm265, %v1840, 0
        %v1991 = vsel %vm265, %v1841, 0
        %v1994 = vsel %vm265, %v1842, 0
        %v1997 = vsel %vm265, %v1843, 0
        %v2000 = vsel %vm265, %v1844, 0
        %v2003 = vsel %vm265, %v1845, 0
        %v2006 = vsel %vm265, %v1846, 0
        %v2009 = vsel %vm265, %v1847, 0
        %v2012 = vsel %vm265, %v1848, 0
        %v2015 = vsel %vm265, %v1849, 0
        %v2018 = vsel %vm265, %v1850, 0
        %v2021 = vsel %vm265, %v1851, 0
        %v2024 = vsel %vm265, %v1852, 0
        %v2027 = vsel %vm265, %v1853, 0
        %v2030 = vsel %vm265, %v1854, 0
        %v2033 = vsel %vm265, %v1855, 0
        %v2036 = vsel %vm265, %v1856, 0
        %v2039 = vsel %vm265, %v1857, 0
        %v2042 = vsel %vm265, %v1858, 0
        %v2045 = vsel %vm265, %v1859, 0
        %v2048 = vsel %vm265, %v1860, 0
        %v2051 = vsel %vm265, %v1861, 0
        %v2054 = vsel %vm265, %v1862, 0
        %2056 = vmatpush.msra.mxu0 0.0
        %2057 = vmatpush.msra.mxu0 0.0
        %2058 = vmatpush.msra.mxu0 0.0
        %2059 = vmatpush.msra.mxu0 0.0
        %2060 = vmatpush.msra.mxu0 0.0
        %2061 = vmatpush.msra.mxu0 0.0
        %2062 = vmatpush.msra.mxu0 0.0
        %2063 = vmatpush.msra.mxu0 0.0
        %2064 = vmatpush.msra.mxu0 0.0
        %2065 = vmatpush.msra.mxu0 0.0
        %2066 = vmatpush.msra.mxu0 0.0
        %2067 = vmatpush.msra.mxu0 0.0
        %2068 = vmatpush.msra.mxu0 0.0
        %2069 = vmatpush.msra.mxu0 0.0
        %2070 = vmatpush.msra.mxu0 0.0
        %2071 = vmatpush.msra.mxu0 %v1863
        %2072 = vmatmul.f32.gmra.mxu0 %v1913
        %v2073 = vpop.f32.mrf.mxu0
        %v2074 = vadd.f32 0.0, %v2073
        %2075 = vmatmul.f32.gmra.mxu0 %v1916
        %v2076 = vpop.f32.mrf.mxu0
        %v2077 = vadd.f32 0.0, %v2076
        %2078 = vmatmul.f32.gmra.mxu0 %v1919
        %v2079 = vpop.f32.mrf.mxu0
        %v2080 = vadd.f32 0.0, %v2079
        %2081 = vmatmul.f32.gmra.mxu0 %v1922
        %v2082 = vpop.f32.mrf.mxu0
        %v2083 = vadd.f32 0.0, %v2082
        %2084 = vmatmul.f32.gmra.mxu0 %v1925
        %v2085 = vpop.f32.mrf.mxu0
        %v2086 = vadd.f32 0.0, %v2085
        %2087 = vmatmul.f32.gmra.mxu0 %v1928
        %v2088 = vpop.f32.mrf.mxu0
        %v2089 = vadd.f32 0.0, %v2088
        %2090 = vmatmul.f32.gmra.mxu0 %v1931
        %v2091 = vpop.f32.mrf.mxu0
        %v2092 = vadd.f32 0.0, %v2091
        %2093 = vmatmul.f32.gmra.mxu0 %v1934
        %v2094 = vpop.f32.mrf.mxu0
        %v2095 = vadd.f32 0.0, %v2094
        %2096 = vmatmul.f32.gmra.mxu0 %v1937
        %v2097 = vpop.f32.mrf.mxu0
        %v2098 = vadd.f32 0.0, %v2097
        %2099 = vmatmul.f32.gmra.mxu0 %v1940
        %v2100 = vpop.f32.mrf.mxu0
        %v2101 = vadd.f32 0.0, %v2100
        %2102 = vmatmul.f32.gmra.mxu0 %v1943
        %v2103 = vpop.f32.mrf.mxu0
        %v2104 = vadd.f32 0.0, %v2103
        %2105 = vmatmul.f32.gmra.mxu0 %v1946
        %v2106 = vpop.f32.mrf.mxu0
        %v2107 = vadd.f32 0.0, %v2106
        %2108 = vmatmul.f32.gmra.mxu0 %v1949
        %v2109 = vpop.f32.mrf.mxu0
        %v2110 = vadd.f32 0.0, %v2109
        %2111 = vmatmul.f32.gmra.mxu0 %v1952
        %v2112 = vpop.f32.mrf.mxu0
        %v2113 = vadd.f32 0.0, %v2112
        %2114 = vmatmul.f32.gmra.mxu0 %v1955
        %v2115 = vpop.f32.mrf.mxu0
        %v2116 = vadd.f32 0.0, %v2115
        %2117 = vmatmul.f32.gmra.mxu0 %v1958
        %v2118 = vpop.f32.mrf.mxu0
        %v2119 = vadd.f32 0.0, %v2118
        %2120 = vmatmul.f32.gmra.mxu0 %v1961
        %v2121 = vpop.f32.mrf.mxu0
        %v2122 = vadd.f32 0.0, %v2121
        %2123 = vmatmul.f32.gmra.mxu0 %v1964
        %v2124 = vpop.f32.mrf.mxu0
        %v2125 = vadd.f32 0.0, %v2124
        %2126 = vmatmul.f32.gmra.mxu0 %v1967
        %v2127 = vpop.f32.mrf.mxu0
        %v2128 = vadd.f32 0.0, %v2127
        %2129 = vmatmul.f32.gmra.mxu0 %v1970
        %v2130 = vpop.f32.mrf.mxu0
        %v2131 = vadd.f32 0.0, %v2130
        %2132 = vmatmul.f32.gmra.mxu0 %v1973
        %v2133 = vpop.f32.mrf.mxu0
        %v2134 = vadd.f32 0.0, %v2133
        %2135 = vmatmul.f32.gmra.mxu0 %v1976
        %v2136 = vpop.f32.mrf.mxu0
        %v2137 = vadd.f32 0.0, %v2136
        %2138 = vmatmul.f32.gmra.mxu0 %v1979
        %v2139 = vpop.f32.mrf.mxu0
        %v2140 = vadd.f32 0.0, %v2139
        %2141 = vmatmul.f32.gmra.mxu0 %v1982
        %v2142 = vpop.f32.mrf.mxu0
        %v2143 = vadd.f32 0.0, %v2142
        %2144 = vmatmul.f32.gmra.mxu0 %v1985
        %v2145 = vpop.f32.mrf.mxu0
        %v2146 = vadd.f32 0.0, %v2145
        %2147 = vmatmul.f32.gmra.mxu0 %v1988
        %v2148 = vpop.f32.mrf.mxu0
        %v2149 = vadd.f32 0.0, %v2148
        %2150 = vmatmul.f32.gmra.mxu0 %v1991
        %v2151 = vpop.f32.mrf.mxu0
        %v2152 = vadd.f32 0.0, %v2151
        %2153 = vmatmul.f32.gmra.mxu0 %v1994
        %v2154 = vpop.f32.mrf.mxu0
        %v2155 = vadd.f32 0.0, %v2154
        %2156 = vmatmul.f32.gmra.mxu0 %v1997
        %v2157 = vpop.f32.mrf.mxu0
        %v2158 = vadd.f32 0.0, %v2157
        %2159 = vmatmul.f32.gmra.mxu0 %v2000
        %v2160 = vpop.f32.mrf.mxu0
        %v2161 = vadd.f32 0.0, %v2160
        %2162 = vmatmul.f32.gmra.mxu0 %v2003
        %v2163 = vpop.f32.mrf.mxu0
        %v2164 = vadd.f32 0.0, %v2163
        %2165 = vmatmul.f32.gmra.mxu0 %v2006
        %v2166 = vpop.f32.mrf.mxu0
        %v2167 = vadd.f32 0.0, %v2166
        %2168 = vmatmul.f32.gmra.mxu0 %v2009
        %v2169 = vpop.f32.mrf.mxu0
        %v2170 = vadd.f32 0.0, %v2169
        %2171 = vmatmul.f32.gmra.mxu0 %v2012
        %v2172 = vpop.f32.mrf.mxu0
        %v2173 = vadd.f32 0.0, %v2172
        %2174 = vmatmul.f32.gmra.mxu0 %v2015
        %v2175 = vpop.f32.mrf.mxu0
        %v2176 = vadd.f32 0.0, %v2175
        %2177 = vmatmul.f32.gmra.mxu0 %v2018
        %v2178 = vpop.f32.mrf.mxu0
        %v2179 = vadd.f32 0.0, %v2178
        %2180 = vmatmul.f32.gmra.mxu0 %v2021
        %v2181 = vpop.f32.mrf.mxu0
        %v2182 = vadd.f32 0.0, %v2181
        %2183 = vmatmul.f32.gmra.mxu0 %v2024
        %v2184 = vpop.f32.mrf.mxu0
        %v2185 = vadd.f32 0.0, %v2184
        %2186 = vmatmul.f32.gmra.mxu0 %v2027
        %v2187 = vpop.f32.mrf.mxu0
        %v2188 = vadd.f32 0.0, %v2187
        %2189 = vmatmul.f32.gmra.mxu0 %v2030
        %v2190 = vpop.f32.mrf.mxu0
        %v2191 = vadd.f32 0.0, %v2190
        %2192 = vmatmul.f32.gmra.mxu0 %v2033
        %v2193 = vpop.f32.mrf.mxu0
        %v2194 = vadd.f32 0.0, %v2193
        %2195 = vmatmul.f32.gmra.mxu0 %v2036
        %v2196 = vpop.f32.mrf.mxu0
        %v2197 = vadd.f32 0.0, %v2196
        %2198 = vmatmul.f32.gmra.mxu0 %v2039
        %v2199 = vpop.f32.mrf.mxu0
        %v2200 = vadd.f32 0.0, %v2199
        %2201 = vmatmul.f32.gmra.mxu0 %v2042
        %v2202 = vpop.f32.mrf.mxu0
        %v2203 = vadd.f32 0.0, %v2202
        %2204 = vmatmul.f32.gmra.mxu0 %v2045
        %v2205 = vpop.f32.mrf.mxu0
        %v2206 = vadd.f32 0.0, %v2205
        %2207 = vmatmul.f32.gmra.mxu0 %v2048
        %v2208 = vpop.f32.mrf.mxu0
        %v2209 = vadd.f32 0.0, %v2208
        %2210 = vmatmul.f32.gmra.mxu0 %v2051
        %v2211 = vpop.f32.mrf.mxu0
        %v2212 = vadd.f32 0.0, %v2211
        %2213 = vmatmul.f32.gmra.mxu0 %v2054
        %v2214 = vpop.f32.mrf.mxu0
        %v2215 = vadd.f32 0.0, %v2214
        %2216 = vdwg.mxu0
        %v2217 = vadd.f32 %v1864, %v2074
        %v2218 = vadd.f32 %v1865, %v2077
        %v2219 = vadd.f32 %v1866, %v2080
        %v2220 = vadd.f32 %v1867, %v2083
        %v2221 = vadd.f32 %v1868, %v2086
        %v2222 = vadd.f32 %v1869, %v2089
        %v2223 = vadd.f32 %v1870, %v2092
        %v2224 = vadd.f32 %v1871, %v2095
        %v2225 = vadd.f32 %v1872, %v2098
        %v2226 = vadd.f32 %v1873, %v2101
        %v2227 = vadd.f32 %v1874, %v2104
        %v2228 = vadd.f32 %v1875, %v2107
        %v2229 = vadd.f32 %v1876, %v2110
        %v2230 = vadd.f32 %v1877, %v2113
        %v2231 = vadd.f32 %v1878, %v2116
        %v2232 = vadd.f32 %v1879, %v2119
        %v2233 = vadd.f32 %v1880, %v2122
        %v2234 = vadd.f32 %v1881, %v2125
        %v2235 = vadd.f32 %v1882, %v2128
        %v2236 = vadd.f32 %v1883, %v2131
        %v2237 = vadd.f32 %v1884, %v2134
        %v2238 = vadd.f32 %v1885, %v2137
        %v2239 = vadd.f32 %v1886, %v2140
        %v2240 = vadd.f32 %v1887, %v2143
        %v2241 = vadd.f32 %v1888, %v2146
        %v2242 = vadd.f32 %v1889, %v2149
        %v2243 = vadd.f32 %v1890, %v2152
        %v2244 = vadd.f32 %v1891, %v2155
        %v2245 = vadd.f32 %v1892, %v2158
        %v2246 = vadd.f32 %v1893, %v2161
        %v2247 = vadd.f32 %v1894, %v2164
        %v2248 = vadd.f32 %v1895, %v2167
        %v2249 = vadd.f32 %v1896, %v2170
        %v2250 = vadd.f32 %v1897, %v2173
        %v2251 = vadd.f32 %v1898, %v2176
        %v2252 = vadd.f32 %v1899, %v2179
        %v2253 = vadd.f32 %v1900, %v2182
        %v2254 = vadd.f32 %v1901, %v2185
        %v2255 = vadd.f32 %v1902, %v2188
        %v2256 = vadd.f32 %v1903, %v2191
        %v2257 = vadd.f32 %v1904, %v2194
        %v2258 = vadd.f32 %v1905, %v2197
        %v2259 = vadd.f32 %v1906, %v2200
        %v2260 = vadd.f32 %v1907, %v2203
        %v2261 = vadd.f32 %v1908, %v2206
        %v2262 = vadd.f32 %v1909, %v2209
        %v2263 = vadd.f32 %v1910, %v2212
        %v2264 = vadd.f32 %v1911, %v2215
        %2265 = vst.msk [vmem:[#allocation2] sm:$0xff] %vm265, %v2217
        %2266 = vst.msk [vmem:[#allocation2 + $0x8] sm:$0xff] %vm265, %v2218
        %2267 = vst.msk [vmem:[#allocation2 + $0x10] sm:$0xff] %vm265, %v2219
        %2268 = vst.msk [vmem:[#allocation2 + $0x18] sm:$0xff] %vm265, %v2220
        %2269 = vst.msk [vmem:[#allocation2 + $0x20] sm:$0xff] %vm265, %v2221
        %2270 = vst.msk [vmem:[#allocation2 + $0x28] sm:$0xff] %vm265, %v2222
        %2271 = vst.msk [vmem:[#allocation2 + $0x30] sm:$0xff] %vm265, %v2223
        %2272 = vst.msk [vmem:[#allocation2 + $0x38] sm:$0xff] %vm265, %v2224
        %2273 = vst.msk [vmem:[#allocation2 + $0x40] sm:$0xff] %vm265, %v2225
        %2274 = vst.msk [vmem:[#allocation2 + $0x48] sm:$0xff] %vm265, %v2226
        %2275 = vst.msk [vmem:[#allocation2 + $0x50] sm:$0xff] %vm265, %v2227
        %2276 = vst.msk [vmem:[#allocation2 + $0x58] sm:$0xff] %vm265, %v2228
        %2277 = vst.msk [vmem:[#allocation2 + $0x60] sm:$0xff] %vm265, %v2229
        %2278 = vst.msk [vmem:[#allocation2 + $0x68] sm:$0xff] %vm265, %v2230
        %2279 = vst.msk [vmem:[#allocation2 + $0x70] sm:$0xff] %vm265, %v2231
        %2280 = vst.msk [vmem:[#allocation2 + $0x78] sm:$0xff] %vm265, %v2232
        %2281 = vst.msk [vmem:[#allocation2 + $0x80] sm:$0xff] %vm265, %v2233
        %2282 = vst.msk [vmem:[#allocation2 + $0x88] sm:$0xff] %vm265, %v2234
        %2283 = vst.msk [vmem:[#allocation2 + $0x90] sm:$0xff] %vm265, %v2235
        %2284 = vst.msk [vmem:[#allocation2 + $0x98] sm:$0xff] %vm265, %v2236
        %2285 = vst.msk [vmem:[#allocation2 + $0xa0] sm:$0xff] %vm265, %v2237
        %2286 = vst.msk [vmem:[#allocation2 + $0xa8] sm:$0xff] %vm265, %v2238
        %2287 = vst.msk [vmem:[#allocation2 + $0xb0] sm:$0xff] %vm265, %v2239
        %2288 = vst.msk [vmem:[#allocation2 + $0xb8] sm:$0xff] %vm265, %v2240
        %2289 = vst.msk [vmem:[#allocation2 + $0xc0] sm:$0xff] %vm265, %v2241
        %2290 = vst.msk [vmem:[#allocation2 + $0xc8] sm:$0xff] %vm265, %v2242
        %2291 = vst.msk [vmem:[#allocation2 + $0xd0] sm:$0xff] %vm265, %v2243
        %2292 = vst.msk [vmem:[#allocation2 + $0xd8] sm:$0xff] %vm265, %v2244
        %2293 = vst.msk [vmem:[#allocation2 + $0xe0] sm:$0xff] %vm265, %v2245
        %2294 = vst.msk [vmem:[#allocation2 + $0xe8] sm:$0xff] %vm265, %v2246
        %2295 = vst.msk [vmem:[#allocation2 + $0xf0] sm:$0xff] %vm265, %v2247
        %2296 = vst.msk [vmem:[#allocation2 + $0xf8] sm:$0xff] %vm265, %v2248
        %2297 = vst.msk [vmem:[#allocation2 + $0x100] sm:$0xff] %vm265, %v2249
        %2298 = vst.msk [vmem:[#allocation2 + $0x108] sm:$0xff] %vm265, %v2250
        %2299 = vst.msk [vmem:[#allocation2 + $0x110] sm:$0xff] %vm265, %v2251
        %2300 = vst.msk [vmem:[#allocation2 + $0x118] sm:$0xff] %vm265, %v2252
        %2301 = vst.msk [vmem:[#allocation2 + $0x120] sm:$0xff] %vm265, %v2253
        %2302 = vst.msk [vmem:[#allocation2 + $0x128] sm:$0xff] %vm265, %v2254
        %2303 = vst.msk [vmem:[#allocation2 + $0x130] sm:$0xff] %vm265, %v2255
        %2304 = vst.msk [vmem:[#allocation2 + $0x138] sm:$0xff] %vm265, %v2256
        %2305 = vst.msk [vmem:[#allocation2 + $0x140] sm:$0xff] %vm265, %v2257
        %2306 = vst.msk [vmem:[#allocation2 + $0x148] sm:$0xff] %vm265, %v2258
        %2307 = vst.msk [vmem:[#allocation2 + $0x150] sm:$0xff] %vm265, %v2259
        %2308 = vst.msk [vmem:[#allocation2 + $0x158] sm:$0xff] %vm265, %v2260
        %2309 = vst.msk [vmem:[#allocation2 + $0x160] sm:$0xff] %vm265, %v2261
        %2310 = vst.msk [vmem:[#allocation2 + $0x168] sm:$0xff] %vm265, %v2262
        %2311 = vst.msk [vmem:[#allocation2 + $0x170] sm:$0xff] %vm265, %v2263
        %2312 = vst.msk [vmem:[#allocation2 + $0x178] sm:$0xff] %vm265, %v2264
        %s2313 = sadd.s32 %s264, 25
        %s2314 = scalar_lea.vmem %s0, %s2313
        %v2315 = vld [vmem:[%s2314] sm:$0xff]
        %v2316 = vld [vmem:[%s2314 + $0x8] sm:$0xff]
        %v2317 = vld [vmem:[%s2314 + $0x10] sm:$0xff]
        %v2318 = vld [vmem:[%s2314 + $0x18] sm:$0xff]
        %v2319 = vld [vmem:[%s2314 + $0x20] sm:$0xff]
        %v2320 = vld [vmem:[%s2314 + $0x28] sm:$0xff]
        %v2321 = vld [vmem:[%s2314 + $0x30] sm:$0xff]
        %v2322 = vld [vmem:[%s2314 + $0x38] sm:$0xff]
        %v2323 = vld [vmem:[%s2314 + $0x40] sm:$0xff]
        %v2324 = vld [vmem:[%s2314 + $0x48] sm:$0xff]
        %v2325 = vld [vmem:[%s2314 + $0x50] sm:$0xff]
        %v2326 = vld [vmem:[%s2314 + $0x58] sm:$0xff]
        %v2327 = vld [vmem:[%s2314 + $0x60] sm:$0xff]
        %v2328 = vld [vmem:[%s2314 + $0x68] sm:$0xff]
        %v2329 = vld [vmem:[%s2314 + $0x70] sm:$0xff]
        %v2330 = vld [vmem:[%s2314 + $0x78] sm:$0xff]
        %v2331 = vld [vmem:[%s2314 + $0x80] sm:$0xff]
        %v2332 = vld [vmem:[%s2314 + $0x88] sm:$0xff]
        %v2333 = vld [vmem:[%s2314 + $0x90] sm:$0xff]
        %v2334 = vld [vmem:[%s2314 + $0x98] sm:$0xff]
        %v2335 = vld [vmem:[%s2314 + $0xa0] sm:$0xff]
        %v2336 = vld [vmem:[%s2314 + $0xa8] sm:$0xff]
        %v2337 = vld [vmem:[%s2314 + $0xb0] sm:$0xff]
        %v2338 = vld [vmem:[%s2314 + $0xb8] sm:$0xff]
        %v2339 = vld [vmem:[%s2314 + $0xc0] sm:$0xff]
        %v2340 = vld [vmem:[%s2314 + $0xc8] sm:$0xff]
        %v2341 = vld [vmem:[%s2314 + $0xd0] sm:$0xff]
        %v2342 = vld [vmem:[%s2314 + $0xd8] sm:$0xff]
        %v2343 = vld [vmem:[%s2314 + $0xe0] sm:$0xff]
        %v2344 = vld [vmem:[%s2314 + $0xe8] sm:$0xff]
        %v2345 = vld [vmem:[%s2314 + $0xf0] sm:$0xff]
        %v2346 = vld [vmem:[%s2314 + $0xf8] sm:$0xff]
        %v2347 = vld [vmem:[%s2314 + $0x100] sm:$0xff]
        %v2348 = vld [vmem:[%s2314 + $0x108] sm:$0xff]
        %v2349 = vld [vmem:[%s2314 + $0x110] sm:$0xff]
        %v2350 = vld [vmem:[%s2314 + $0x118] sm:$0xff]
        %v2351 = vld [vmem:[%s2314 + $0x120] sm:$0xff]
        %v2352 = vld [vmem:[%s2314 + $0x128] sm:$0xff]
        %v2353 = vld [vmem:[%s2314 + $0x130] sm:$0xff]
        %v2354 = vld [vmem:[%s2314 + $0x138] sm:$0xff]
        %v2355 = vld [vmem:[%s2314 + $0x140] sm:$0xff]
        %v2356 = vld [vmem:[%s2314 + $0x148] sm:$0xff]
        %v2357 = vld [vmem:[%s2314 + $0x150] sm:$0xff]
        %v2358 = vld [vmem:[%s2314 + $0x158] sm:$0xff]
        %v2359 = vld [vmem:[%s2314 + $0x160] sm:$0xff]
        %v2360 = vld [vmem:[%s2314 + $0x168] sm:$0xff]
        %v2361 = vld [vmem:[%s2314 + $0x170] sm:$0xff]
        %v2362 = vld [vmem:[%s2314 + $0x178] sm:$0xff]
        %v2363 = vld [vmem:[%s2 + $0x20] sm:$0xff]
        %v2364 = vld [vmem:[#allocation2] sm:$0xff]
        %v2365 = vld [vmem:[#allocation2 + $0x8] sm:$0xff]
        %v2366 = vld [vmem:[#allocation2 + $0x10] sm:$0xff]
        %v2367 = vld [vmem:[#allocation2 + $0x18] sm:$0xff]
        %v2368 = vld [vmem:[#allocation2 + $0x20] sm:$0xff]
        %v2369 = vld [vmem:[#allocation2 + $0x28] sm:$0xff]
        %v2370 = vld [vmem:[#allocation2 + $0x30] sm:$0xff]
        %v2371 = vld [vmem:[#allocation2 + $0x38] sm:$0xff]
        %v2372 = vld [vmem:[#allocation2 + $0x40] sm:$0xff]
        %v2373 = vld [vmem:[#allocation2 + $0x48] sm:$0xff]
        %v2374 = vld [vmem:[#allocation2 + $0x50] sm:$0xff]
        %v2375 = vld [vmem:[#allocation2 + $0x58] sm:$0xff]
        %v2376 = vld [vmem:[#allocation2 + $0x60] sm:$0xff]
        %v2377 = vld [vmem:[#allocation2 + $0x68] sm:$0xff]
        %v2378 = vld [vmem:[#allocation2 + $0x70] sm:$0xff]
        %v2379 = vld [vmem:[#allocation2 + $0x78] sm:$0xff]
        %v2380 = vld [vmem:[#allocation2 + $0x80] sm:$0xff]
        %v2381 = vld [vmem:[#allocation2 + $0x88] sm:$0xff]
        %v2382 = vld [vmem:[#allocation2 + $0x90] sm:$0xff]
        %v2383 = vld [vmem:[#allocation2 + $0x98] sm:$0xff]
        %v2384 = vld [vmem:[#allocation2 + $0xa0] sm:$0xff]
        %v2385 = vld [vmem:[#allocation2 + $0xa8] sm:$0xff]
        %v2386 = vld [vmem:[#allocation2 + $0xb0] sm:$0xff]
        %v2387 = vld [vmem:[#allocation2 + $0xb8] sm:$0xff]
        %v2388 = vld [vmem:[#allocation2 + $0xc0] sm:$0xff]
        %v2389 = vld [vmem:[#allocation2 + $0xc8] sm:$0xff]
        %v2390 = vld [vmem:[#allocation2 + $0xd0] sm:$0xff]
        %v2391 = vld [vmem:[#allocation2 + $0xd8] sm:$0xff]
        %v2392 = vld [vmem:[#allocation2 + $0xe0] sm:$0xff]
        %v2393 = vld [vmem:[#allocation2 + $0xe8] sm:$0xff]
        %v2394 = vld [vmem:[#allocation2 + $0xf0] sm:$0xff]
        %v2395 = vld [vmem:[#allocation2 + $0xf8] sm:$0xff]
        %v2396 = vld [vmem:[#allocation2 + $0x100] sm:$0xff]
        %v2397 = vld [vmem:[#allocation2 + $0x108] sm:$0xff]
        %v2398 = vld [vmem:[#allocation2 + $0x110] sm:$0xff]
        %v2399 = vld [vmem:[#allocation2 + $0x118] sm:$0xff]
        %v2400 = vld [vmem:[#allocation2 + $0x120] sm:$0xff]
        %v2401 = vld [vmem:[#allocation2 + $0x128] sm:$0xff]
        %v2402 = vld [vmem:[#allocation2 + $0x130] sm:$0xff]
        %v2403 = vld [vmem:[#allocation2 + $0x138] sm:$0xff]
        %v2404 = vld [vmem:[#allocation2 + $0x140] sm:$0xff]
        %v2405 = vld [vmem:[#allocation2 + $0x148] sm:$0xff]
        %v2406 = vld [vmem:[#allocation2 + $0x150] sm:$0xff]
        %v2407 = vld [vmem:[#allocation2 + $0x158] sm:$0xff]
        %v2408 = vld [vmem:[#allocation2 + $0x160] sm:$0xff]
        %v2409 = vld [vmem:[#allocation2 + $0x168] sm:$0xff]
        %v2410 = vld [vmem:[#allocation2 + $0x170] sm:$0xff]
        %v2411 = vld [vmem:[#allocation2 + $0x178] sm:$0xff]
        %v2413 = vsel %vm265, %v2315, 0
        %v2416 = vsel %vm265, %v2316, 0
        %v2419 = vsel %vm265, %v2317, 0
        %v2422 = vsel %vm265, %v2318, 0
        %v2425 = vsel %vm265, %v2319, 0
        %v2428 = vsel %vm265, %v2320, 0
        %v2431 = vsel %vm265, %v2321, 0
        %v2434 = vsel %vm265, %v2322, 0
        %v2437 = vsel %vm265, %v2323, 0
        %v2440 = vsel %vm265, %v2324, 0
        %v2443 = vsel %vm265, %v2325, 0
        %v2446 = vsel %vm265, %v2326, 0
        %v2449 = vsel %vm265, %v2327, 0
        %v2452 = vsel %vm265, %v2328, 0
        %v2455 = vsel %vm265, %v2329, 0
        %v2458 = vsel %vm265, %v2330, 0
        %v2461 = vsel %vm265, %v2331, 0
        %v2464 = vsel %vm265, %v2332, 0
        %v2467 = vsel %vm265, %v2333, 0
        %v2470 = vsel %vm265, %v2334, 0
        %v2473 = vsel %vm265, %v2335, 0
        %v2476 = vsel %vm265, %v2336, 0
        %v2479 = vsel %vm265, %v2337, 0
        %v2482 = vsel %vm265, %v2338, 0
        %v2485 = vsel %vm265, %v2339, 0
        %v2488 = vsel %vm265, %v2340, 0
        %v2491 = vsel %vm265, %v2341, 0
        %v2494 = vsel %vm265, %v2342, 0
        %v2497 = vsel %vm265, %v2343, 0
        %v2500 = vsel %vm265, %v2344, 0
        %v2503 = vsel %vm265, %v2345, 0
        %v2506 = vsel %vm265, %v2346, 0
        %v2509 = vsel %vm265, %v2347, 0
        %v2512 = vsel %vm265, %v2348, 0
        %v2515 = vsel %vm265, %v2349, 0
        %v2518 = vsel %vm265, %v2350, 0
        %v2521 = vsel %vm265, %v2351, 0
        %v2524 = vsel %vm265, %v2352, 0
        %v2527 = vsel %vm265, %v2353, 0
        %v2530 = vsel %vm265, %v2354, 0
        %v2533 = vsel %vm265, %v2355, 0
        %v2536 = vsel %vm265, %v2356, 0
        %v2539 = vsel %vm265, %v2357, 0
        %v2542 = vsel %vm265, %v2358, 0
        %v2545 = vsel %vm265, %v2359, 0
        %v2548 = vsel %vm265, %v2360, 0
        %v2551 = vsel %vm265, %v2361, 0
        %v2554 = vsel %vm265, %v2362, 0
        %2556 = vmatpush.msra.mxu0 0.0
        %2557 = vmatpush.msra.mxu0 0.0
        %2558 = vmatpush.msra.mxu0 0.0
        %2559 = vmatpush.msra.mxu0 0.0
        %2560 = vmatpush.msra.mxu0 0.0
        %2561 = vmatpush.msra.mxu0 0.0
        %2562 = vmatpush.msra.mxu0 0.0
        %2563 = vmatpush.msra.mxu0 0.0
        %2564 = vmatpush.msra.mxu0 0.0
        %2565 = vmatpush.msra.mxu0 0.0
        %2566 = vmatpush.msra.mxu0 0.0
        %2567 = vmatpush.msra.mxu0 0.0
        %2568 = vmatpush.msra.mxu0 0.0
        %2569 = vmatpush.msra.mxu0 0.0
        %2570 = vmatpush.msra.mxu0 0.0
        %2571 = vmatpush.msra.mxu0 %v2363
        %2572 = vmatmul.f32.gmra.mxu0 %v2413
        %v2573 = vpop.f32.mrf.mxu0
        %v2574 = vadd.f32 0.0, %v2573
        %2575 = vmatmul.f32.gmra.mxu0 %v2416
        %v2576 = vpop.f32.mrf.mxu0
        %v2577 = vadd.f32 0.0, %v2576
        %2578 = vmatmul.f32.gmra.mxu0 %v2419
        %v2579 = vpop.f32.mrf.mxu0
        %v2580 = vadd.f32 0.0, %v2579
        %2581 = vmatmul.f32.gmra.mxu0 %v2422
        %v2582 = vpop.f32.mrf.mxu0
        %v2583 = vadd.f32 0.0, %v2582
        %2584 = vmatmul.f32.gmra.mxu0 %v2425
        %v2585 = vpop.f32.mrf.mxu0
        %v2586 = vadd.f32 0.0, %v2585
        %2587 = vmatmul.f32.gmra.mxu0 %v2428
        %v2588 = vpop.f32.mrf.mxu0
        %v2589 = vadd.f32 0.0, %v2588
        %2590 = vmatmul.f32.gmra.mxu0 %v2431
        %v2591 = vpop.f32.mrf.mxu0
        %v2592 = vadd.f32 0.0, %v2591
        %2593 = vmatmul.f32.gmra.mxu0 %v2434
        %v2594 = vpop.f32.mrf.mxu0
        %v2595 = vadd.f32 0.0, %v2594
        %2596 = vmatmul.f32.gmra.mxu0 %v2437
        %v2597 = vpop.f32.mrf.mxu0
        %v2598 = vadd.f32 0.0, %v2597
        %2599 = vmatmul.f32.gmra.mxu0 %v2440
        %v2600 = vpop.f32.mrf.mxu0
        %v2601 = vadd.f32 0.0, %v2600
        %2602 = vmatmul.f32.gmra.mxu0 %v2443
        %v2603 = vpop.f32.mrf.mxu0
        %v2604 = vadd.f32 0.0, %v2603
        %2605 = vmatmul.f32.gmra.mxu0 %v2446
        %v2606 = vpop.f32.mrf.mxu0
        %v2607 = vadd.f32 0.0, %v2606
        %2608 = vmatmul.f32.gmra.mxu0 %v2449
        %v2609 = vpop.f32.mrf.mxu0
        %v2610 = vadd.f32 0.0, %v2609
        %2611 = vmatmul.f32.gmra.mxu0 %v2452
        %v2612 = vpop.f32.mrf.mxu0
        %v2613 = vadd.f32 0.0, %v2612
        %2614 = vmatmul.f32.gmra.mxu0 %v2455
        %v2615 = vpop.f32.mrf.mxu0
        %v2616 = vadd.f32 0.0, %v2615
        %2617 = vmatmul.f32.gmra.mxu0 %v2458
        %v2618 = vpop.f32.mrf.mxu0
        %v2619 = vadd.f32 0.0, %v2618
        %2620 = vmatmul.f32.gmra.mxu0 %v2461
        %v2621 = vpop.f32.mrf.mxu0
        %v2622 = vadd.f32 0.0, %v2621
        %2623 = vmatmul.f32.gmra.mxu0 %v2464
        %v2624 = vpop.f32.mrf.mxu0
        %v2625 = vadd.f32 0.0, %v2624
        %2626 = vmatmul.f32.gmra.mxu0 %v2467
        %v2627 = vpop.f32.mrf.mxu0
        %v2628 = vadd.f32 0.0, %v2627
        %2629 = vmatmul.f32.gmra.mxu0 %v2470
        %v2630 = vpop.f32.mrf.mxu0
        %v2631 = vadd.f32 0.0, %v2630
        %2632 = vmatmul.f32.gmra.mxu0 %v2473
        %v2633 = vpop.f32.mrf.mxu0
        %v2634 = vadd.f32 0.0, %v2633
        %2635 = vmatmul.f32.gmra.mxu0 %v2476
        %v2636 = vpop.f32.mrf.mxu0
        %v2637 = vadd.f32 0.0, %v2636
        %2638 = vmatmul.f32.gmra.mxu0 %v2479
        %v2639 = vpop.f32.mrf.mxu0
        %v2640 = vadd.f32 0.0, %v2639
        %2641 = vmatmul.f32.gmra.mxu0 %v2482
        %v2642 = vpop.f32.mrf.mxu0
        %v2643 = vadd.f32 0.0, %v2642
        %2644 = vmatmul.f32.gmra.mxu0 %v2485
        %v2645 = vpop.f32.mrf.mxu0
        %v2646 = vadd.f32 0.0, %v2645
        %2647 = vmatmul.f32.gmra.mxu0 %v2488
        %v2648 = vpop.f32.mrf.mxu0
        %v2649 = vadd.f32 0.0, %v2648
        %2650 = vmatmul.f32.gmra.mxu0 %v2491
        %v2651 = vpop.f32.mrf.mxu0
        %v2652 = vadd.f32 0.0, %v2651
        %2653 = vmatmul.f32.gmra.mxu0 %v2494
        %v2654 = vpop.f32.mrf.mxu0
        %v2655 = vadd.f32 0.0, %v2654
        %2656 = vmatmul.f32.gmra.mxu0 %v2497
        %v2657 = vpop.f32.mrf.mxu0
        %v2658 = vadd.f32 0.0, %v2657
        %2659 = vmatmul.f32.gmra.mxu0 %v2500
        %v2660 = vpop.f32.mrf.mxu0
        %v2661 = vadd.f32 0.0, %v2660
        %2662 = vmatmul.f32.gmra.mxu0 %v2503
        %v2663 = vpop.f32.mrf.mxu0
        %v2664 = vadd.f32 0.0, %v2663
        %2665 = vmatmul.f32.gmra.mxu0 %v2506
        %v2666 = vpop.f32.mrf.mxu0
        %v2667 = vadd.f32 0.0, %v2666
        %2668 = vmatmul.f32.gmra.mxu0 %v2509
        %v2669 = vpop.f32.mrf.mxu0
        %v2670 = vadd.f32 0.0, %v2669
        %2671 = vmatmul.f32.gmra.mxu0 %v2512
        %v2672 = vpop.f32.mrf.mxu0
        %v2673 = vadd.f32 0.0, %v2672
        %2674 = vmatmul.f32.gmra.mxu0 %v2515
        %v2675 = vpop.f32.mrf.mxu0
        %v2676 = vadd.f32 0.0, %v2675
        %2677 = vmatmul.f32.gmra.mxu0 %v2518
        %v2678 = vpop.f32.mrf.mxu0
        %v2679 = vadd.f32 0.0, %v2678
        %2680 = vmatmul.f32.gmra.mxu0 %v2521
        %v2681 = vpop.f32.mrf.mxu0
        %v2682 = vadd.f32 0.0, %v2681
        %2683 = vmatmul.f32.gmra.mxu0 %v2524
        %v2684 = vpop.f32.mrf.mxu0
        %v2685 = vadd.f32 0.0, %v2684
        %2686 = vmatmul.f32.gmra.mxu0 %v2527
        %v2687 = vpop.f32.mrf.mxu0
        %v2688 = vadd.f32 0.0, %v2687
        %2689 = vmatmul.f32.gmra.mxu0 %v2530
        %v2690 = vpop.f32.mrf.mxu0
        %v2691 = vadd.f32 0.0, %v2690
        %2692 = vmatmul.f32.gmra.mxu0 %v2533
        %v2693 = vpop.f32.mrf.mxu0
        %v2694 = vadd.f32 0.0, %v2693
        %2695 = vmatmul.f32.gmra.mxu0 %v2536
        %v2696 = vpop.f32.mrf.mxu0
        %v2697 = vadd.f32 0.0, %v2696
        %2698 = vmatmul.f32.gmra.mxu0 %v2539
        %v2699 = vpop.f32.mrf.mxu0
        %v2700 = vadd.f32 0.0, %v2699
        %2701 = vmatmul.f32.gmra.mxu0 %v2542
        %v2702 = vpop.f32.mrf.mxu0
        %v2703 = vadd.f32 0.0, %v2702
        %2704 = vmatmul.f32.gmra.mxu0 %v2545
        %v2705 = vpop.f32.mrf.mxu0
        %v2706 = vadd.f32 0.0, %v2705
        %2707 = vmatmul.f32.gmra.mxu0 %v2548
        %v2708 = vpop.f32.mrf.mxu0
        %v2709 = vadd.f32 0.0, %v2708
        %2710 = vmatmul.f32.gmra.mxu0 %v2551
        %v2711 = vpop.f32.mrf.mxu0
        %v2712 = vadd.f32 0.0, %v2711
        %2713 = vmatmul.f32.gmra.mxu0 %v2554
        %v2714 = vpop.f32.mrf.mxu0
        %v2715 = vadd.f32 0.0, %v2714
        %2716 = vdwg.mxu0
        %v2717 = vadd.f32 %v2364, %v2574
        %v2718 = vadd.f32 %v2365, %v2577
        %v2719 = vadd.f32 %v2366, %v2580
        %v2720 = vadd.f32 %v2367, %v2583
        %v2721 = vadd.f32 %v2368, %v2586
        %v2722 = vadd.f32 %v2369, %v2589
        %v2723 = vadd.f32 %v2370, %v2592
        %v2724 = vadd.f32 %v2371, %v2595
        %v2725 = vadd.f32 %v2372, %v2598
        %v2726 = vadd.f32 %v2373, %v2601
        %v2727 = vadd.f32 %v2374, %v2604
        %v2728 = vadd.f32 %v2375, %v2607
        %v2729 = vadd.f32 %v2376, %v2610
        %v2730 = vadd.f32 %v2377, %v2613
        %v2731 = vadd.f32 %v2378, %v2616
        %v2732 = vadd.f32 %v2379, %v2619
        %v2733 = vadd.f32 %v2380, %v2622
        %v2734 = vadd.f32 %v2381, %v2625
        %v2735 = vadd.f32 %v2382, %v2628
        %v2736 = vadd.f32 %v2383, %v2631
        %v2737 = vadd.f32 %v2384, %v2634
        %v2738 = vadd.f32 %v2385, %v2637
        %v2739 = vadd.f32 %v2386, %v2640
        %v2740 = vadd.f32 %v2387, %v2643
        %v2741 = vadd.f32 %v2388, %v2646
        %v2742 = vadd.f32 %v2389, %v2649
        %v2743 = vadd.f32 %v2390, %v2652
        %v2744 = vadd.f32 %v2391, %v2655
        %v2745 = vadd.f32 %v2392, %v2658
        %v2746 = vadd.f32 %v2393, %v2661
        %v2747 = vadd.f32 %v2394, %v2664
        %v2748 = vadd.f32 %v2395, %v2667
        %v2749 = vadd.f32 %v2396, %v2670
        %v2750 = vadd.f32 %v2397, %v2673
        %v2751 = vadd.f32 %v2398, %v2676
        %v2752 = vadd.f32 %v2399, %v2679
        %v2753 = vadd.f32 %v2400, %v2682
        %v2754 = vadd.f32 %v2401, %v2685
        %v2755 = vadd.f32 %v2402, %v2688
        %v2756 = vadd.f32 %v2403, %v2691
        %v2757 = vadd.f32 %v2404, %v2694
        %v2758 = vadd.f32 %v2405, %v2697
        %v2759 = vadd.f32 %v2406, %v2700
        %v2760 = vadd.f32 %v2407, %v2703
        %v2761 = vadd.f32 %v2408, %v2706
        %v2762 = vadd.f32 %v2409, %v2709
        %v2763 = vadd.f32 %v2410, %v2712
        %v2764 = vadd.f32 %v2411, %v2715
        %2765 = vst.msk [vmem:[#allocation2] sm:$0xff] %vm265, %v2717
        %2766 = vst.msk [vmem:[#allocation2 + $0x8] sm:$0xff] %vm265, %v2718
        %2767 = vst.msk [vmem:[#allocation2 + $0x10] sm:$0xff] %vm265, %v2719
        %2768 = vst.msk [vmem:[#allocation2 + $0x18] sm:$0xff] %vm265, %v2720
        %2769 = vst.msk [vmem:[#allocation2 + $0x20] sm:$0xff] %vm265, %v2721
        %2770 = vst.msk [vmem:[#allocation2 + $0x28] sm:$0xff] %vm265, %v2722
        %2771 = vst.msk [vmem:[#allocation2 + $0x30] sm:$0xff] %vm265, %v2723
        %2772 = vst.msk [vmem:[#allocation2 + $0x38] sm:$0xff] %vm265, %v2724
        %2773 = vst.msk [vmem:[#allocation2 + $0x40] sm:$0xff] %vm265, %v2725
        %2774 = vst.msk [vmem:[#allocation2 + $0x48] sm:$0xff] %vm265, %v2726
        %2775 = vst.msk [vmem:[#allocation2 + $0x50] sm:$0xff] %vm265, %v2727
        %2776 = vst.msk [vmem:[#allocation2 + $0x58] sm:$0xff] %vm265, %v2728
        %2777 = vst.msk [vmem:[#allocation2 + $0x60] sm:$0xff] %vm265, %v2729
        %2778 = vst.msk [vmem:[#allocation2 + $0x68] sm:$0xff] %vm265, %v2730
        %2779 = vst.msk [vmem:[#allocation2 + $0x70] sm:$0xff] %vm265, %v2731
        %2780 = vst.msk [vmem:[#allocation2 + $0x78] sm:$0xff] %vm265, %v2732
        %2781 = vst.msk [vmem:[#allocation2 + $0x80] sm:$0xff] %vm265, %v2733
        %2782 = vst.msk [vmem:[#allocation2 + $0x88] sm:$0xff] %vm265, %v2734
        %2783 = vst.msk [vmem:[#allocation2 + $0x90] sm:$0xff] %vm265, %v2735
        %2784 = vst.msk [vmem:[#allocation2 + $0x98] sm:$0xff] %vm265, %v2736
        %2785 = vst.msk [vmem:[#allocation2 + $0xa0] sm:$0xff] %vm265, %v2737
        %2786 = vst.msk [vmem:[#allocation2 + $0xa8] sm:$0xff] %vm265, %v2738
        %2787 = vst.msk [vmem:[#allocation2 + $0xb0] sm:$0xff] %vm265, %v2739
        %2788 = vst.msk [vmem:[#allocation2 + $0xb8] sm:$0xff] %vm265, %v2740
        %2789 = vst.msk [vmem:[#allocation2 + $0xc0] sm:$0xff] %vm265, %v2741
        %2790 = vst.msk [vmem:[#allocation2 + $0xc8] sm:$0xff] %vm265, %v2742
        %2791 = vst.msk [vmem:[#allocation2 + $0xd0] sm:$0xff] %vm265, %v2743
        %2792 = vst.msk [vmem:[#allocation2 + $0xd8] sm:$0xff] %vm265, %v2744
        %2793 = vst.msk [vmem:[#allocation2 + $0xe0] sm:$0xff] %vm265, %v2745
        %2794 = vst.msk [vmem:[#allocation2 + $0xe8] sm:$0xff] %vm265, %v2746
        %2795 = vst.msk [vmem:[#allocation2 + $0xf0] sm:$0xff] %vm265, %v2747
        %2796 = vst.msk [vmem:[#allocation2 + $0xf8] sm:$0xff] %vm265, %v2748
        %2797 = vst.msk [vmem:[#allocation2 + $0x100] sm:$0xff] %vm265, %v2749
        %2798 = vst.msk [vmem:[#allocation2 + $0x108] sm:$0xff] %vm265, %v2750
        %2799 = vst.msk [vmem:[#allocation2 + $0x110] sm:$0xff] %vm265, %v2751
        %2800 = vst.msk [vmem:[#allocation2 + $0x118] sm:$0xff] %vm265, %v2752
        %2801 = vst.msk [vmem:[#allocation2 + $0x120] sm:$0xff] %vm265, %v2753
        %2802 = vst.msk [vmem:[#allocation2 + $0x128] sm:$0xff] %vm265, %v2754
        %2803 = vst.msk [vmem:[#allocation2 + $0x130] sm:$0xff] %vm265, %v2755
        %2804 = vst.msk [vmem:[#allocation2 + $0x138] sm:$0xff] %vm265, %v2756
        %2805 = vst.msk [vmem:[#allocation2 + $0x140] sm:$0xff] %vm265, %v2757
        %2806 = vst.msk [vmem:[#allocation2 + $0x148] sm:$0xff] %vm265, %v2758
        %2807 = vst.msk [vmem:[#allocation2 + $0x150] sm:$0xff] %vm265, %v2759
        %2808 = vst.msk [vmem:[#allocation2 + $0x158] sm:$0xff] %vm265, %v2760
        %2809 = vst.msk [vmem:[#allocation2 + $0x160] sm:$0xff] %vm265, %v2761
        %2810 = vst.msk [vmem:[#allocation2 + $0x168] sm:$0xff] %vm265, %v2762
        %2811 = vst.msk [vmem:[#allocation2 + $0x170] sm:$0xff] %vm265, %v2763
        %2812 = vst.msk [vmem:[#allocation2 + $0x178] sm:$0xff] %vm265, %v2764
        %s2813 = sadd.s32 %s264, 26
        %s2814 = scalar_lea.vmem %s0, %s2813
        %v2815 = vld [vmem:[%s2814] sm:$0xff]
        %v2816 = vld [vmem:[%s2814 + $0x8] sm:$0xff]
        %v2817 = vld [vmem:[%s2814 + $0x10] sm:$0xff]
        %v2818 = vld [vmem:[%s2814 + $0x18] sm:$0xff]
        %v2819 = vld [vmem:[%s2814 + $0x20] sm:$0xff]
        %v2820 = vld [vmem:[%s2814 + $0x28] sm:$0xff]
        %v2821 = vld [vmem:[%s2814 + $0x30] sm:$0xff]
        %v2822 = vld [vmem:[%s2814 + $0x38] sm:$0xff]
        %v2823 = vld [vmem:[%s2814 + $0x40] sm:$0xff]
        %v2824 = vld [vmem:[%s2814 + $0x48] sm:$0xff]
        %v2825 = vld [vmem:[%s2814 + $0x50] sm:$0xff]
        %v2826 = vld [vmem:[%s2814 + $0x58] sm:$0xff]
        %v2827 = vld [vmem:[%s2814 + $0x60] sm:$0xff]
        %v2828 = vld [vmem:[%s2814 + $0x68] sm:$0xff]
        %v2829 = vld [vmem:[%s2814 + $0x70] sm:$0xff]
        %v2830 = vld [vmem:[%s2814 + $0x78] sm:$0xff]
        %v2831 = vld [vmem:[%s2814 + $0x80] sm:$0xff]
        %v2832 = vld [vmem:[%s2814 + $0x88] sm:$0xff]
        %v2833 = vld [vmem:[%s2814 + $0x90] sm:$0xff]
        %v2834 = vld [vmem:[%s2814 + $0x98] sm:$0xff]
        %v2835 = vld [vmem:[%s2814 + $0xa0] sm:$0xff]
        %v2836 = vld [vmem:[%s2814 + $0xa8] sm:$0xff]
        %v2837 = vld [vmem:[%s2814 + $0xb0] sm:$0xff]
        %v2838 = vld [vmem:[%s2814 + $0xb8] sm:$0xff]
        %v2839 = vld [vmem:[%s2814 + $0xc0] sm:$0xff]
        %v2840 = vld [vmem:[%s2814 + $0xc8] sm:$0xff]
        %v2841 = vld [vmem:[%s2814 + $0xd0] sm:$0xff]
        %v2842 = vld [vmem:[%s2814 + $0xd8] sm:$0xff]
        %v2843 = vld [vmem:[%s2814 + $0xe0] sm:$0xff]
        %v2844 = vld [vmem:[%s2814 + $0xe8] sm:$0xff]
        %v2845 = vld [vmem:[%s2814 + $0xf0] sm:$0xff]
        %v2846 = vld [vmem:[%s2814 + $0xf8] sm:$0xff]
        %v2847 = vld [vmem:[%s2814 + $0x100] sm:$0xff]
        %v2848 = vld [vmem:[%s2814 + $0x108] sm:$0xff]
        %v2849 = vld [vmem:[%s2814 + $0x110] sm:$0xff]
        %v2850 = vld [vmem:[%s2814 + $0x118] sm:$0xff]
        %v2851 = vld [vmem:[%s2814 + $0x120] sm:$0xff]
        %v2852 = vld [vmem:[%s2814 + $0x128] sm:$0xff]
        %v2853 = vld [vmem:[%s2814 + $0x130] sm:$0xff]
        %v2854 = vld [vmem:[%s2814 + $0x138] sm:$0xff]
        %v2855 = vld [vmem:[%s2814 + $0x140] sm:$0xff]
        %v2856 = vld [vmem:[%s2814 + $0x148] sm:$0xff]
        %v2857 = vld [vmem:[%s2814 + $0x150] sm:$0xff]
        %v2858 = vld [vmem:[%s2814 + $0x158] sm:$0xff]
        %v2859 = vld [vmem:[%s2814 + $0x160] sm:$0xff]
        %v2860 = vld [vmem:[%s2814 + $0x168] sm:$0xff]
        %v2861 = vld [vmem:[%s2814 + $0x170] sm:$0xff]
        %v2862 = vld [vmem:[%s2814 + $0x178] sm:$0xff]
        %v2863 = vld [vmem:[%s2 + $0x28] sm:$0xff]
        %v2864 = vld [vmem:[#allocation2] sm:$0xff]
        %v2865 = vld [vmem:[#allocation2 + $0x8] sm:$0xff]
        %v2866 = vld [vmem:[#allocation2 + $0x10] sm:$0xff]
        %v2867 = vld [vmem:[#allocation2 + $0x18] sm:$0xff]
        %v2868 = vld [vmem:[#allocation2 + $0x20] sm:$0xff]
        %v2869 = vld [vmem:[#allocation2 + $0x28] sm:$0xff]
        %v2870 = vld [vmem:[#allocation2 + $0x30] sm:$0xff]
        %v2871 = vld [vmem:[#allocation2 + $0x38] sm:$0xff]
        %v2872 = vld [vmem:[#allocation2 + $0x40] sm:$0xff]
        %v2873 = vld [vmem:[#allocation2 + $0x48] sm:$0xff]
        %v2874 = vld [vmem:[#allocation2 + $0x50] sm:$0xff]
        %v2875 = vld [vmem:[#allocation2 + $0x58] sm:$0xff]
        %v2876 = vld [vmem:[#allocation2 + $0x60] sm:$0xff]
        %v2877 = vld [vmem:[#allocation2 + $0x68] sm:$0xff]
        %v2878 = vld [vmem:[#allocation2 + $0x70] sm:$0xff]
        %v2879 = vld [vmem:[#allocation2 + $0x78] sm:$0xff]
        %v2880 = vld [vmem:[#allocation2 + $0x80] sm:$0xff]
        %v2881 = vld [vmem:[#allocation2 + $0x88] sm:$0xff]
        %v2882 = vld [vmem:[#allocation2 + $0x90] sm:$0xff]
        %v2883 = vld [vmem:[#allocation2 + $0x98] sm:$0xff]
        %v2884 = vld [vmem:[#allocation2 + $0xa0] sm:$0xff]
        %v2885 = vld [vmem:[#allocation2 + $0xa8] sm:$0xff]
        %v2886 = vld [vmem:[#allocation2 + $0xb0] sm:$0xff]
        %v2887 = vld [vmem:[#allocation2 + $0xb8] sm:$0xff]
        %v2888 = vld [vmem:[#allocation2 + $0xc0] sm:$0xff]
        %v2889 = vld [vmem:[#allocation2 + $0xc8] sm:$0xff]
        %v2890 = vld [vmem:[#allocation2 + $0xd0] sm:$0xff]
        %v2891 = vld [vmem:[#allocation2 + $0xd8] sm:$0xff]
        %v2892 = vld [vmem:[#allocation2 + $0xe0] sm:$0xff]
        %v2893 = vld [vmem:[#allocation2 + $0xe8] sm:$0xff]
        %v2894 = vld [vmem:[#allocation2 + $0xf0] sm:$0xff]
        %v2895 = vld [vmem:[#allocation2 + $0xf8] sm:$0xff]
        %v2896 = vld [vmem:[#allocation2 + $0x100] sm:$0xff]
        %v2897 = vld [vmem:[#allocation2 + $0x108] sm:$0xff]
        %v2898 = vld [vmem:[#allocation2 + $0x110] sm:$0xff]
        %v2899 = vld [vmem:[#allocation2 + $0x118] sm:$0xff]
        %v2900 = vld [vmem:[#allocation2 + $0x120] sm:$0xff]
        %v2901 = vld [vmem:[#allocation2 + $0x128] sm:$0xff]
        %v2902 = vld [vmem:[#allocation2 + $0x130] sm:$0xff]
        %v2903 = vld [vmem:[#allocation2 + $0x138] sm:$0xff]
        %v2904 = vld [vmem:[#allocation2 + $0x140] sm:$0xff]
        %v2905 = vld [vmem:[#allocation2 + $0x148] sm:$0xff]
        %v2906 = vld [vmem:[#allocation2 + $0x150] sm:$0xff]
        %v2907 = vld [vmem:[#allocation2 + $0x158] sm:$0xff]
        %v2908 = vld [vmem:[#allocation2 + $0x160] sm:$0xff]
        %v2909 = vld [vmem:[#allocation2 + $0x168] sm:$0xff]
        %v2910 = vld [vmem:[#allocation2 + $0x170] sm:$0xff]
        %v2911 = vld [vmem:[#allocation2 + $0x178] sm:$0xff]
        %v2913 = vsel %vm265, %v2815, 0
        %v2916 = vsel %vm265, %v2816, 0
        %v2919 = vsel %vm265, %v2817, 0
        %v2922 = vsel %vm265, %v2818, 0
        %v2925 = vsel %vm265, %v2819, 0
        %v2928 = vsel %vm265, %v2820, 0
        %v2931 = vsel %vm265, %v2821, 0
        %v2934 = vsel %vm265, %v2822, 0
        %v2937 = vsel %vm265, %v2823, 0
        %v2940 = vsel %vm265, %v2824, 0
        %v2943 = vsel %vm265, %v2825, 0
        %v2946 = vsel %vm265, %v2826, 0
        %v2949 = vsel %vm265, %v2827, 0
        %v2952 = vsel %vm265, %v2828, 0
        %v2955 = vsel %vm265, %v2829, 0
        %v2958 = vsel %vm265, %v2830, 0
        %v2961 = vsel %vm265, %v2831, 0
        %v2964 = vsel %vm265, %v2832, 0
        %v2967 = vsel %vm265, %v2833, 0
        %v2970 = vsel %vm265, %v2834, 0
        %v2973 = vsel %vm265, %v2835, 0
        %v2976 = vsel %vm265, %v2836, 0
        %v2979 = vsel %vm265, %v2837, 0
        %v2982 = vsel %vm265, %v2838, 0
        %v2985 = vsel %vm265, %v2839, 0
        %v2988 = vsel %vm265, %v2840, 0
        %v2991 = vsel %vm265, %v2841, 0
        %v2994 = vsel %vm265, %v2842, 0
        %v2997 = vsel %vm265, %v2843, 0
        %v3000 = vsel %vm265, %v2844, 0
        %v3003 = vsel %vm265, %v2845, 0
        %v3006 = vsel %vm265, %v2846, 0
        %v3009 = vsel %vm265, %v2847, 0
        %v3012 = vsel %vm265, %v2848, 0
        %v3015 = vsel %vm265, %v2849, 0
        %v3018 = vsel %vm265, %v2850, 0
        %v3021 = vsel %vm265, %v2851, 0
        %v3024 = vsel %vm265, %v2852, 0
        %v3027 = vsel %vm265, %v2853, 0
        %v3030 = vsel %vm265, %v2854, 0
        %v3033 = vsel %vm265, %v2855, 0
        %v3036 = vsel %vm265, %v2856, 0
        %v3039 = vsel %vm265, %v2857, 0
        %v3042 = vsel %vm265, %v2858, 0
        %v3045 = vsel %vm265, %v2859, 0
        %v3048 = vsel %vm265, %v2860, 0
        %v3051 = vsel %vm265, %v2861, 0
        %v3054 = vsel %vm265, %v2862, 0
        %3056 = vmatpush.msra.mxu0 0.0
        %3057 = vmatpush.msra.mxu0 0.0
        %3058 = vmatpush.msra.mxu0 0.0
        %3059 = vmatpush.msra.mxu0 0.0
        %3060 = vmatpush.msra.mxu0 0.0
        %3061 = vmatpush.msra.mxu0 0.0
        %3062 = vmatpush.msra.mxu0 0.0
        %3063 = vmatpush.msra.mxu0 0.0
        %3064 = vmatpush.msra.mxu0 0.0
        %3065 = vmatpush.msra.mxu0 0.0
        %3066 = vmatpush.msra.mxu0 0.0
        %3067 = vmatpush.msra.mxu0 0.0
        %3068 = vmatpush.msra.mxu0 0.0
        %3069 = vmatpush.msra.mxu0 0.0
        %3070 = vmatpush.msra.mxu0 0.0
        %3071 = vmatpush.msra.mxu0 %v2863
        %3072 = vmatmul.f32.gmra.mxu0 %v2913
        %v3073 = vpop.f32.mrf.mxu0
        %v3074 = vadd.f32 0.0, %v3073
        %3075 = vmatmul.f32.gmra.mxu0 %v2916
        %v3076 = vpop.f32.mrf.mxu0
        %v3077 = vadd.f32 0.0, %v3076
        %3078 = vmatmul.f32.gmra.mxu0 %v2919
        %v3079 = vpop.f32.mrf.mxu0
        %v3080 = vadd.f32 0.0, %v3079
        %3081 = vmatmul.f32.gmra.mxu0 %v2922
        %v3082 = vpop.f32.mrf.mxu0
        %v3083 = vadd.f32 0.0, %v3082
        %3084 = vmatmul.f32.gmra.mxu0 %v2925
        %v3085 = vpop.f32.mrf.mxu0
        %v3086 = vadd.f32 0.0, %v3085
        %3087 = vmatmul.f32.gmra.mxu0 %v2928
        %v3088 = vpop.f32.mrf.mxu0
        %v3089 = vadd.f32 0.0, %v3088
        %3090 = vmatmul.f32.gmra.mxu0 %v2931
        %v3091 = vpop.f32.mrf.mxu0
        %v3092 = vadd.f32 0.0, %v3091
        %3093 = vmatmul.f32.gmra.mxu0 %v2934
        %v3094 = vpop.f32.mrf.mxu0
        %v3095 = vadd.f32 0.0, %v3094
        %3096 = vmatmul.f32.gmra.mxu0 %v2937
        %v3097 = vpop.f32.mrf.mxu0
        %v3098 = vadd.f32 0.0, %v3097
        %3099 = vmatmul.f32.gmra.mxu0 %v2940
        %v3100 = vpop.f32.mrf.mxu0
        %v3101 = vadd.f32 0.0, %v3100
        %3102 = vmatmul.f32.gmra.mxu0 %v2943
        %v3103 = vpop.f32.mrf.mxu0
        %v3104 = vadd.f32 0.0, %v3103
        %3105 = vmatmul.f32.gmra.mxu0 %v2946
        %v3106 = vpop.f32.mrf.mxu0
        %v3107 = vadd.f32 0.0, %v3106
        %3108 = vmatmul.f32.gmra.mxu0 %v2949
        %v3109 = vpop.f32.mrf.mxu0
        %v3110 = vadd.f32 0.0, %v3109
        %3111 = vmatmul.f32.gmra.mxu0 %v2952
        %v3112 = vpop.f32.mrf.mxu0
        %v3113 = vadd.f32 0.0, %v3112
        %3114 = vmatmul.f32.gmra.mxu0 %v2955
        %v3115 = vpop.f32.mrf.mxu0
        %v3116 = vadd.f32 0.0, %v3115
        %3117 = vmatmul.f32.gmra.mxu0 %v2958
        %v3118 = vpop.f32.mrf.mxu0
        %v3119 = vadd.f32 0.0, %v3118
        %3120 = vmatmul.f32.gmra.mxu0 %v2961
        %v3121 = vpop.f32.mrf.mxu0
        %v3122 = vadd.f32 0.0, %v3121
        %3123 = vmatmul.f32.gmra.mxu0 %v2964
        %v3124 = vpop.f32.mrf.mxu0
        %v3125 = vadd.f32 0.0, %v3124
        %3126 = vmatmul.f32.gmra.mxu0 %v2967
        %v3127 = vpop.f32.mrf.mxu0
        %v3128 = vadd.f32 0.0, %v3127
        %3129 = vmatmul.f32.gmra.mxu0 %v2970
        %v3130 = vpop.f32.mrf.mxu0
        %v3131 = vadd.f32 0.0, %v3130
        %3132 = vmatmul.f32.gmra.mxu0 %v2973
        %v3133 = vpop.f32.mrf.mxu0
        %v3134 = vadd.f32 0.0, %v3133
        %3135 = vmatmul.f32.gmra.mxu0 %v2976
        %v3136 = vpop.f32.mrf.mxu0
        %v3137 = vadd.f32 0.0, %v3136
        %3138 = vmatmul.f32.gmra.mxu0 %v2979
        %v3139 = vpop.f32.mrf.mxu0
        %v3140 = vadd.f32 0.0, %v3139
        %3141 = vmatmul.f32.gmra.mxu0 %v2982
        %v3142 = vpop.f32.mrf.mxu0
        %v3143 = vadd.f32 0.0, %v3142
        %3144 = vmatmul.f32.gmra.mxu0 %v2985
        %v3145 = vpop.f32.mrf.mxu0
        %v3146 = vadd.f32 0.0, %v3145
        %3147 = vmatmul.f32.gmra.mxu0 %v2988
        %v3148 = vpop.f32.mrf.mxu0
        %v3149 = vadd.f32 0.0, %v3148
        %3150 = vmatmul.f32.gmra.mxu0 %v2991
        %v3151 = vpop.f32.mrf.mxu0
        %v3152 = vadd.f32 0.0, %v3151
        %3153 = vmatmul.f32.gmra.mxu0 %v2994
        %v3154 = vpop.f32.mrf.mxu0
        %v3155 = vadd.f32 0.0, %v3154
        %3156 = vmatmul.f32.gmra.mxu0 %v2997
        %v3157 = vpop.f32.mrf.mxu0
        %v3158 = vadd.f32 0.0, %v3157
        %3159 = vmatmul.f32.gmra.mxu0 %v3000
        %v3160 = vpop.f32.mrf.mxu0
        %v3161 = vadd.f32 0.0, %v3160
        %3162 = vmatmul.f32.gmra.mxu0 %v3003
        %v3163 = vpop.f32.mrf.mxu0
        %v3164 = vadd.f32 0.0, %v3163
        %3165 = vmatmul.f32.gmra.mxu0 %v3006
        %v3166 = vpop.f32.mrf.mxu0
        %v3167 = vadd.f32 0.0, %v3166
        %3168 = vmatmul.f32.gmra.mxu0 %v3009
        %v3169 = vpop.f32.mrf.mxu0
        %v3170 = vadd.f32 0.0, %v3169
        %3171 = vmatmul.f32.gmra.mxu0 %v3012
        %v3172 = vpop.f32.mrf.mxu0
        %v3173 = vadd.f32 0.0, %v3172
        %3174 = vmatmul.f32.gmra.mxu0 %v3015
        %v3175 = vpop.f32.mrf.mxu0
        %v3176 = vadd.f32 0.0, %v3175
        %3177 = vmatmul.f32.gmra.mxu0 %v3018
        %v3178 = vpop.f32.mrf.mxu0
        %v3179 = vadd.f32 0.0, %v3178
        %3180 = vmatmul.f32.gmra.mxu0 %v3021
        %v3181 = vpop.f32.mrf.mxu0
        %v3182 = vadd.f32 0.0, %v3181
        %3183 = vmatmul.f32.gmra.mxu0 %v3024
        %v3184 = vpop.f32.mrf.mxu0
        %v3185 = vadd.f32 0.0, %v3184
        %3186 = vmatmul.f32.gmra.mxu0 %v3027
        %v3187 = vpop.f32.mrf.mxu0
        %v3188 = vadd.f32 0.0, %v3187
        %3189 = vmatmul.f32.gmra.mxu0 %v3030
        %v3190 = vpop.f32.mrf.mxu0
        %v3191 = vadd.f32 0.0, %v3190
        %3192 = vmatmul.f32.gmra.mxu0 %v3033
        %v3193 = vpop.f32.mrf.mxu0
        %v3194 = vadd.f32 0.0, %v3193
        %3195 = vmatmul.f32.gmra.mxu0 %v3036
        %v3196 = vpop.f32.mrf.mxu0
        %v3197 = vadd.f32 0.0, %v3196
        %3198 = vmatmul.f32.gmra.mxu0 %v3039
        %v3199 = vpop.f32.mrf.mxu0
        %v3200 = vadd.f32 0.0, %v3199
        %3201 = vmatmul.f32.gmra.mxu0 %v3042
        %v3202 = vpop.f32.mrf.mxu0
        %v3203 = vadd.f32 0.0, %v3202
        %3204 = vmatmul.f32.gmra.mxu0 %v3045
        %v3205 = vpop.f32.mrf.mxu0
        %v3206 = vadd.f32 0.0, %v3205
        %3207 = vmatmul.f32.gmra.mxu0 %v3048
        %v3208 = vpop.f32.mrf.mxu0
        %v3209 = vadd.f32 0.0, %v3208
        %3210 = vmatmul.f32.gmra.mxu0 %v3051
        %v3211 = vpop.f32.mrf.mxu0
        %v3212 = vadd.f32 0.0, %v3211
        %3213 = vmatmul.f32.gmra.mxu0 %v3054
        %v3214 = vpop.f32.mrf.mxu0
        %v3215 = vadd.f32 0.0, %v3214
        %3216 = vdwg.mxu0
        %v3217 = vadd.f32 %v2864, %v3074
        %v3218 = vadd.f32 %v2865, %v3077
        %v3219 = vadd.f32 %v2866, %v3080
        %v3220 = vadd.f32 %v2867, %v3083
        %v3221 = vadd.f32 %v2868, %v3086
        %v3222 = vadd.f32 %v2869, %v3089
        %v3223 = vadd.f32 %v2870, %v3092
        %v3224 = vadd.f32 %v2871, %v3095
        %v3225 = vadd.f32 %v2872, %v3098
        %v3226 = vadd.f32 %v2873, %v3101
        %v3227 = vadd.f32 %v2874, %v3104
        %v3228 = vadd.f32 %v2875, %v3107
        %v3229 = vadd.f32 %v2876, %v3110
        %v3230 = vadd.f32 %v2877, %v3113
        %v3231 = vadd.f32 %v2878, %v3116
        %v3232 = vadd.f32 %v2879, %v3119
        %v3233 = vadd.f32 %v2880, %v3122
        %v3234 = vadd.f32 %v2881, %v3125
        %v3235 = vadd.f32 %v2882, %v3128
        %v3236 = vadd.f32 %v2883, %v3131
        %v3237 = vadd.f32 %v2884, %v3134
        %v3238 = vadd.f32 %v2885, %v3137
        %v3239 = vadd.f32 %v2886, %v3140
        %v3240 = vadd.f32 %v2887, %v3143
        %v3241 = vadd.f32 %v2888, %v3146
        %v3242 = vadd.f32 %v2889, %v3149
        %v3243 = vadd.f32 %v2890, %v3152
        %v3244 = vadd.f32 %v2891, %v3155
        %v3245 = vadd.f32 %v2892, %v3158
        %v3246 = vadd.f32 %v2893, %v3161
        %v3247 = vadd.f32 %v2894, %v3164
        %v3248 = vadd.f32 %v2895, %v3167
        %v3249 = vadd.f32 %v2896, %v3170
        %v3250 = vadd.f32 %v2897, %v3173
        %v3251 = vadd.f32 %v2898, %v3176
        %v3252 = vadd.f32 %v2899, %v3179
        %v3253 = vadd.f32 %v2900, %v3182
        %v3254 = vadd.f32 %v2901, %v3185
        %v3255 = vadd.f32 %v2902, %v3188
        %v3256 = vadd.f32 %v2903, %v3191
        %v3257 = vadd.f32 %v2904, %v3194
        %v3258 = vadd.f32 %v2905, %v3197
        %v3259 = vadd.f32 %v2906, %v3200
        %v3260 = vadd.f32 %v2907, %v3203
        %v3261 = vadd.f32 %v2908, %v3206
        %v3262 = vadd.f32 %v2909, %v3209
        %v3263 = vadd.f32 %v2910, %v3212
        %v3264 = vadd.f32 %v2911, %v3215
        %3265 = vst.msk [vmem:[#allocation2] sm:$0xff] %vm265, %v3217
        %3266 = vst.msk [vmem:[#allocation2 + $0x8] sm:$0xff] %vm265, %v3218
        %3267 = vst.msk [vmem:[#allocation2 + $0x10] sm:$0xff] %vm265, %v3219
        %3268 = vst.msk [vmem:[#allocation2 + $0x18] sm:$0xff] %vm265, %v3220
        %3269 = vst.msk [vmem:[#allocation2 + $0x20] sm:$0xff] %vm265, %v3221
        %3270 = vst.msk [vmem:[#allocation2 + $0x28] sm:$0xff] %vm265, %v3222
        %3271 = vst.msk [vmem:[#allocation2 + $0x30] sm:$0xff] %vm265, %v3223
        %3272 = vst.msk [vmem:[#allocation2 + $0x38] sm:$0xff] %vm265, %v3224
        %3273 = vst.msk [vmem:[#allocation2 + $0x40] sm:$0xff] %vm265, %v3225
        %3274 = vst.msk [vmem:[#allocation2 + $0x48] sm:$0xff] %vm265, %v3226
        %3275 = vst.msk [vmem:[#allocation2 + $0x50] sm:$0xff] %vm265, %v3227
        %3276 = vst.msk [vmem:[#allocation2 + $0x58] sm:$0xff] %vm265, %v3228
        %3277 = vst.msk [vmem:[#allocation2 + $0x60] sm:$0xff] %vm265, %v3229
        %3278 = vst.msk [vmem:[#allocation2 + $0x68] sm:$0xff] %vm265, %v3230
        %3279 = vst.msk [vmem:[#allocation2 + $0x70] sm:$0xff] %vm265, %v3231
        %3280 = vst.msk [vmem:[#allocation2 + $0x78] sm:$0xff] %vm265, %v3232
        %3281 = vst.msk [vmem:[#allocation2 + $0x80] sm:$0xff] %vm265, %v3233
        %3282 = vst.msk [vmem:[#allocation2 + $0x88] sm:$0xff] %vm265, %v3234
        %3283 = vst.msk [vmem:[#allocation2 + $0x90] sm:$0xff] %vm265, %v3235
        %3284 = vst.msk [vmem:[#allocation2 + $0x98] sm:$0xff] %vm265, %v3236
        %3285 = vst.msk [vmem:[#allocation2 + $0xa0] sm:$0xff] %vm265, %v3237
        %3286 = vst.msk [vmem:[#allocation2 + $0xa8] sm:$0xff] %vm265, %v3238
        %3287 = vst.msk [vmem:[#allocation2 + $0xb0] sm:$0xff] %vm265, %v3239
        %3288 = vst.msk [vmem:[#allocation2 + $0xb8] sm:$0xff] %vm265, %v3240
        %3289 = vst.msk [vmem:[#allocation2 + $0xc0] sm:$0xff] %vm265, %v3241
        %3290 = vst.msk [vmem:[#allocation2 + $0xc8] sm:$0xff] %vm265, %v3242
        %3291 = vst.msk [vmem:[#allocation2 + $0xd0] sm:$0xff] %vm265, %v3243
        %3292 = vst.msk [vmem:[#allocation2 + $0xd8] sm:$0xff] %vm265, %v3244
        %3293 = vst.msk [vmem:[#allocation2 + $0xe0] sm:$0xff] %vm265, %v3245
        %3294 = vst.msk [vmem:[#allocation2 + $0xe8] sm:$0xff] %vm265, %v3246
        %3295 = vst.msk [vmem:[#allocation2 + $0xf0] sm:$0xff] %vm265, %v3247
        %3296 = vst.msk [vmem:[#allocation2 + $0xf8] sm:$0xff] %vm265, %v3248
        %3297 = vst.msk [vmem:[#allocation2 + $0x100] sm:$0xff] %vm265, %v3249
        %3298 = vst.msk [vmem:[#allocation2 + $0x108] sm:$0xff] %vm265, %v3250
        %3299 = vst.msk [vmem:[#allocation2 + $0x110] sm:$0xff] %vm265, %v3251
        %3300 = vst.msk [vmem:[#allocation2 + $0x118] sm:$0xff] %vm265, %v3252
        %3301 = vst.msk [vmem:[#allocation2 + $0x120] sm:$0xff] %vm265, %v3253
        %3302 = vst.msk [vmem:[#allocation2 + $0x128] sm:$0xff] %vm265, %v3254
        %3303 = vst.msk [vmem:[#allocation2 + $0x130] sm:$0xff] %vm265, %v3255
        %3304 = vst.msk [vmem:[#allocation2 + $0x138] sm:$0xff] %vm265, %v3256
        %3305 = vst.msk [vmem:[#allocation2 + $0x140] sm:$0xff] %vm265, %v3257
        %3306 = vst.msk [vmem:[#allocation2 + $0x148] sm:$0xff] %vm265, %v3258
        %3307 = vst.msk [vmem:[#allocation2 + $0x150] sm:$0xff] %vm265, %v3259
        %3308 = vst.msk [vmem:[#allocation2 + $0x158] sm:$0xff] %vm265, %v3260
        %3309 = vst.msk [vmem:[#allocation2 + $0x160] sm:$0xff] %vm265, %v3261
        %3310 = vst.msk [vmem:[#allocation2 + $0x168] sm:$0xff] %vm265, %v3262
        %3311 = vst.msk [vmem:[#allocation2 + $0x170] sm:$0xff] %vm265, %v3263
        %3312 = vst.msk [vmem:[#allocation2 + $0x178] sm:$0xff] %vm265, %v3264
        %s3313 = sadd.s32 %s264, 48
        %s3314 = scalar_lea.vmem %s0, %s3313
        %v3315 = vld [vmem:[%s3314] sm:$0xff]
        %v3316 = vld [vmem:[%s3314 + $0x8] sm:$0xff]
        %v3317 = vld [vmem:[%s3314 + $0x10] sm:$0xff]
        %v3318 = vld [vmem:[%s3314 + $0x18] sm:$0xff]
        %v3319 = vld [vmem:[%s3314 + $0x20] sm:$0xff]
        %v3320 = vld [vmem:[%s3314 + $0x28] sm:$0xff]
        %v3321 = vld [vmem:[%s3314 + $0x30] sm:$0xff]
        %v3322 = vld [vmem:[%s3314 + $0x38] sm:$0xff]
        %v3323 = vld [vmem:[%s3314 + $0x40] sm:$0xff]
        %v3324 = vld [vmem:[%s3314 + $0x48] sm:$0xff]
        %v3325 = vld [vmem:[%s3314 + $0x50] sm:$0xff]
        %v3326 = vld [vmem:[%s3314 + $0x58] sm:$0xff]
        %v3327 = vld [vmem:[%s3314 + $0x60] sm:$0xff]
        %v3328 = vld [vmem:[%s3314 + $0x68] sm:$0xff]
        %v3329 = vld [vmem:[%s3314 + $0x70] sm:$0xff]
        %v3330 = vld [vmem:[%s3314 + $0x78] sm:$0xff]
        %v3331 = vld [vmem:[%s3314 + $0x80] sm:$0xff]
        %v3332 = vld [vmem:[%s3314 + $0x88] sm:$0xff]
        %v3333 = vld [vmem:[%s3314 + $0x90] sm:$0xff]
        %v3334 = vld [vmem:[%s3314 + $0x98] sm:$0xff]
        %v3335 = vld [vmem:[%s3314 + $0xa0] sm:$0xff]
        %v3336 = vld [vmem:[%s3314 + $0xa8] sm:$0xff]
        %v3337 = vld [vmem:[%s3314 + $0xb0] sm:$0xff]
        %v3338 = vld [vmem:[%s3314 + $0xb8] sm:$0xff]
        %v3339 = vld [vmem:[%s3314 + $0xc0] sm:$0xff]
        %v3340 = vld [vmem:[%s3314 + $0xc8] sm:$0xff]
        %v3341 = vld [vmem:[%s3314 + $0xd0] sm:$0xff]
        %v3342 = vld [vmem:[%s3314 + $0xd8] sm:$0xff]
        %v3343 = vld [vmem:[%s3314 + $0xe0] sm:$0xff]
        %v3344 = vld [vmem:[%s3314 + $0xe8] sm:$0xff]
        %v3345 = vld [vmem:[%s3314 + $0xf0] sm:$0xff]
        %v3346 = vld [vmem:[%s3314 + $0xf8] sm:$0xff]
        %v3347 = vld [vmem:[%s3314 + $0x100] sm:$0xff]
        %v3348 = vld [vmem:[%s3314 + $0x108] sm:$0xff]
        %v3349 = vld [vmem:[%s3314 + $0x110] sm:$0xff]
        %v3350 = vld [vmem:[%s3314 + $0x118] sm:$0xff]
        %v3351 = vld [vmem:[%s3314 + $0x120] sm:$0xff]
        %v3352 = vld [vmem:[%s3314 + $0x128] sm:$0xff]
        %v3353 = vld [vmem:[%s3314 + $0x130] sm:$0xff]
        %v3354 = vld [vmem:[%s3314 + $0x138] sm:$0xff]
        %v3355 = vld [vmem:[%s3314 + $0x140] sm:$0xff]
        %v3356 = vld [vmem:[%s3314 + $0x148] sm:$0xff]
        %v3357 = vld [vmem:[%s3314 + $0x150] sm:$0xff]
        %v3358 = vld [vmem:[%s3314 + $0x158] sm:$0xff]
        %v3359 = vld [vmem:[%s3314 + $0x160] sm:$0xff]
        %v3360 = vld [vmem:[%s3314 + $0x168] sm:$0xff]
        %v3361 = vld [vmem:[%s3314 + $0x170] sm:$0xff]
        %v3362 = vld [vmem:[%s3314 + $0x178] sm:$0xff]
        %v3363 = vld [vmem:[%s2 + $0x30] sm:$0xff]
        %v3364 = vld [vmem:[#allocation2] sm:$0xff]
        %v3365 = vld [vmem:[#allocation2 + $0x8] sm:$0xff]
        %v3366 = vld [vmem:[#allocation2 + $0x10] sm:$0xff]
        %v3367 = vld [vmem:[#allocation2 + $0x18] sm:$0xff]
        %v3368 = vld [vmem:[#allocation2 + $0x20] sm:$0xff]
        %v3369 = vld [vmem:[#allocation2 + $0x28] sm:$0xff]
        %v3370 = vld [vmem:[#allocation2 + $0x30] sm:$0xff]
        %v3371 = vld [vmem:[#allocation2 + $0x38] sm:$0xff]
        %v3372 = vld [vmem:[#allocation2 + $0x40] sm:$0xff]
        %v3373 = vld [vmem:[#allocation2 + $0x48] sm:$0xff]
        %v3374 = vld [vmem:[#allocation2 + $0x50] sm:$0xff]
        %v3375 = vld [vmem:[#allocation2 + $0x58] sm:$0xff]
        %v3376 = vld [vmem:[#allocation2 + $0x60] sm:$0xff]
        %v3377 = vld [vmem:[#allocation2 + $0x68] sm:$0xff]
        %v3378 = vld [vmem:[#allocation2 + $0x70] sm:$0xff]
        %v3379 = vld [vmem:[#allocation2 + $0x78] sm:$0xff]
        %v3380 = vld [vmem:[#allocation2 + $0x80] sm:$0xff]
        %v3381 = vld [vmem:[#allocation2 + $0x88] sm:$0xff]
        %v3382 = vld [vmem:[#allocation2 + $0x90] sm:$0xff]
        %v3383 = vld [vmem:[#allocation2 + $0x98] sm:$0xff]
        %v3384 = vld [vmem:[#allocation2 + $0xa0] sm:$0xff]
        %v3385 = vld [vmem:[#allocation2 + $0xa8] sm:$0xff]
        %v3386 = vld [vmem:[#allocation2 + $0xb0] sm:$0xff]
        %v3387 = vld [vmem:[#allocation2 + $0xb8] sm:$0xff]
        %v3388 = vld [vmem:[#allocation2 + $0xc0] sm:$0xff]
        %v3389 = vld [vmem:[#allocation2 + $0xc8] sm:$0xff]
        %v3390 = vld [vmem:[#allocation2 + $0xd0] sm:$0xff]
        %v3391 = vld [vmem:[#allocation2 + $0xd8] sm:$0xff]
        %v3392 = vld [vmem:[#allocation2 + $0xe0] sm:$0xff]
        %v3393 = vld [vmem:[#allocation2 + $0xe8] sm:$0xff]
        %v3394 = vld [vmem:[#allocation2 + $0xf0] sm:$0xff]
        %v3395 = vld [vmem:[#allocation2 + $0xf8] sm:$0xff]
        %v3396 = vld [vmem:[#allocation2 + $0x100] sm:$0xff]
        %v3397 = vld [vmem:[#allocation2 + $0x108] sm:$0xff]
        %v3398 = vld [vmem:[#allocation2 + $0x110] sm:$0xff]
        %v3399 = vld [vmem:[#allocation2 + $0x118] sm:$0xff]
        %v3400 = vld [vmem:[#allocation2 + $0x120] sm:$0xff]
        %v3401 = vld [vmem:[#allocation2 + $0x128] sm:$0xff]
        %v3402 = vld [vmem:[#allocation2 + $0x130] sm:$0xff]
        %v3403 = vld [vmem:[#allocation2 + $0x138] sm:$0xff]
        %v3404 = vld [vmem:[#allocation2 + $0x140] sm:$0xff]
        %v3405 = vld [vmem:[#allocation2 + $0x148] sm:$0xff]
        %v3406 = vld [vmem:[#allocation2 + $0x150] sm:$0xff]
        %v3407 = vld [vmem:[#allocation2 + $0x158] sm:$0xff]
        %v3408 = vld [vmem:[#allocation2 + $0x160] sm:$0xff]
        %v3409 = vld [vmem:[#allocation2 + $0x168] sm:$0xff]
        %v3410 = vld [vmem:[#allocation2 + $0x170] sm:$0xff]
        %v3411 = vld [vmem:[#allocation2 + $0x178] sm:$0xff]
        %v3413 = vsel %vm265, %v3315, 0
        %v3416 = vsel %vm265, %v3316, 0
        %v3419 = vsel %vm265, %v3317, 0
        %v3422 = vsel %vm265, %v3318, 0
        %v3425 = vsel %vm265, %v3319, 0
        %v3428 = vsel %vm265, %v3320, 0
        %v3431 = vsel %vm265, %v3321, 0
        %v3434 = vsel %vm265, %v3322, 0
        %v3437 = vsel %vm265, %v3323, 0
        %v3440 = vsel %vm265, %v3324, 0
        %v3443 = vsel %vm265, %v3325, 0
        %v3446 = vsel %vm265, %v3326, 0
        %v3449 = vsel %vm265, %v3327, 0
        %v3452 = vsel %vm265, %v3328, 0
        %v3455 = vsel %vm265, %v3329, 0
        %v3458 = vsel %vm265, %v3330, 0
        %v3461 = vsel %vm265, %v3331, 0
        %v3464 = vsel %vm265, %v3332, 0
        %v3467 = vsel %vm265, %v3333, 0
        %v3470 = vsel %vm265, %v3334, 0
        %v3473 = vsel %vm265, %v3335, 0
        %v3476 = vsel %vm265, %v3336, 0
        %v3479 = vsel %vm265, %v3337, 0
        %v3482 = vsel %vm265, %v3338, 0
        %v3485 = vsel %vm265, %v3339, 0
        %v3488 = vsel %vm265, %v3340, 0
        %v3491 = vsel %vm265, %v3341, 0
        %v3494 = vsel %vm265, %v3342, 0
        %v3497 = vsel %vm265, %v3343, 0
        %v3500 = vsel %vm265, %v3344, 0
        %v3503 = vsel %vm265, %v3345, 0
        %v3506 = vsel %vm265, %v3346, 0
        %v3509 = vsel %vm265, %v3347, 0
        %v3512 = vsel %vm265, %v3348, 0
        %v3515 = vsel %vm265, %v3349, 0
        %v3518 = vsel %vm265, %v3350, 0
        %v3521 = vsel %vm265, %v3351, 0
        %v3524 = vsel %vm265, %v3352, 0
        %v3527 = vsel %vm265, %v3353, 0
        %v3530 = vsel %vm265, %v3354, 0
        %v3533 = vsel %vm265, %v3355, 0
        %v3536 = vsel %vm265, %v3356, 0
        %v3539 = vsel %vm265, %v3357, 0
        %v3542 = vsel %vm265, %v3358, 0
        %v3545 = vsel %vm265, %v3359, 0
        %v3548 = vsel %vm265, %v3360, 0
        %v3551 = vsel %vm265, %v3361, 0
        %v3554 = vsel %vm265, %v3362, 0
        %3556 = vmatpush.msra.mxu0 0.0
        %3557 = vmatpush.msra.mxu0 0.0
        %3558 = vmatpush.msra.mxu0 0.0
        %3559 = vmatpush.msra.mxu0 0.0
        %3560 = vmatpush.msra.mxu0 0.0
        %3561 = vmatpush.msra.mxu0 0.0
        %3562 = vmatpush.msra.mxu0 0.0
        %3563 = vmatpush.msra.mxu0 0.0
        %3564 = vmatpush.msra.mxu0 0.0
        %3565 = vmatpush.msra.mxu0 0.0
        %3566 = vmatpush.msra.mxu0 0.0
        %3567 = vmatpush.msra.mxu0 0.0
        %3568 = vmatpush.msra.mxu0 0.0
        %3569 = vmatpush.msra.mxu0 0.0
        %3570 = vmatpush.msra.mxu0 0.0
        %3571 = vmatpush.msra.mxu0 %v3363
        %3572 = vmatmul.f32.gmra.mxu0 %v3413
        %v3573 = vpop.f32.mrf.mxu0
        %v3574 = vadd.f32 0.0, %v3573
        %3575 = vmatmul.f32.gmra.mxu0 %v3416
        %v3576 = vpop.f32.mrf.mxu0
        %v3577 = vadd.f32 0.0, %v3576
        %3578 = vmatmul.f32.gmra.mxu0 %v3419
        %v3579 = vpop.f32.mrf.mxu0
        %v3580 = vadd.f32 0.0, %v3579
        %3581 = vmatmul.f32.gmra.mxu0 %v3422
        %v3582 = vpop.f32.mrf.mxu0
        %v3583 = vadd.f32 0.0, %v3582
        %3584 = vmatmul.f32.gmra.mxu0 %v3425
        %v3585 = vpop.f32.mrf.mxu0
        %v3586 = vadd.f32 0.0, %v3585
        %3587 = vmatmul.f32.gmra.mxu0 %v3428
        %v3588 = vpop.f32.mrf.mxu0
        %v3589 = vadd.f32 0.0, %v3588
        %3590 = vmatmul.f32.gmra.mxu0 %v3431
        %v3591 = vpop.f32.mrf.mxu0
        %v3592 = vadd.f32 0.0, %v3591
        %3593 = vmatmul.f32.gmra.mxu0 %v3434
        %v3594 = vpop.f32.mrf.mxu0
        %v3595 = vadd.f32 0.0, %v3594
        %3596 = vmatmul.f32.gmra.mxu0 %v3437
        %v3597 = vpop.f32.mrf.mxu0
        %v3598 = vadd.f32 0.0, %v3597
        %3599 = vmatmul.f32.gmra.mxu0 %v3440
        %v3600 = vpop.f32.mrf.mxu0
        %v3601 = vadd.f32 0.0, %v3600
        %3602 = vmatmul.f32.gmra.mxu0 %v3443
        %v3603 = vpop.f32.mrf.mxu0
        %v3604 = vadd.f32 0.0, %v3603
        %3605 = vmatmul.f32.gmra.mxu0 %v3446
        %v3606 = vpop.f32.mrf.mxu0
        %v3607 = vadd.f32 0.0, %v3606
        %3608 = vmatmul.f32.gmra.mxu0 %v3449
        %v3609 = vpop.f32.mrf.mxu0
        %v3610 = vadd.f32 0.0, %v3609
        %3611 = vmatmul.f32.gmra.mxu0 %v3452
        %v3612 = vpop.f32.mrf.mxu0
        %v3613 = vadd.f32 0.0, %v3612
        %3614 = vmatmul.f32.gmra.mxu0 %v3455
        %v3615 = vpop.f32.mrf.mxu0
        %v3616 = vadd.f32 0.0, %v3615
        %3617 = vmatmul.f32.gmra.mxu0 %v3458
        %v3618 = vpop.f32.mrf.mxu0
        %v3619 = vadd.f32 0.0, %v3618
        %3620 = vmatmul.f32.gmra.mxu0 %v3461
        %v3621 = vpop.f32.mrf.mxu0
        %v3622 = vadd.f32 0.0, %v3621
        %3623 = vmatmul.f32.gmra.mxu0 %v3464
        %v3624 = vpop.f32.mrf.mxu0
        %v3625 = vadd.f32 0.0, %v3624
        %3626 = vmatmul.f32.gmra.mxu0 %v3467
        %v3627 = vpop.f32.mrf.mxu0
        %v3628 = vadd.f32 0.0, %v3627
        %3629 = vmatmul.f32.gmra.mxu0 %v3470
        %v3630 = vpop.f32.mrf.mxu0
        %v3631 = vadd.f32 0.0, %v3630
        %3632 = vmatmul.f32.gmra.mxu0 %v3473
        %v3633 = vpop.f32.mrf.mxu0
        %v3634 = vadd.f32 0.0, %v3633
        %3635 = vmatmul.f32.gmra.mxu0 %v3476
        %v3636 = vpop.f32.mrf.mxu0
        %v3637 = vadd.f32 0.0, %v3636
        %3638 = vmatmul.f32.gmra.mxu0 %v3479
        %v3639 = vpop.f32.mrf.mxu0
        %v3640 = vadd.f32 0.0, %v3639
        %3641 = vmatmul.f32.gmra.mxu0 %v3482
        %v3642 = vpop.f32.mrf.mxu0
        %v3643 = vadd.f32 0.0, %v3642
        %3644 = vmatmul.f32.gmra.mxu0 %v3485
        %v3645 = vpop.f32.mrf.mxu0
        %v3646 = vadd.f32 0.0, %v3645
        %3647 = vmatmul.f32.gmra.mxu0 %v3488
        %v3648 = vpop.f32.mrf.mxu0
        %v3649 = vadd.f32 0.0, %v3648
        %3650 = vmatmul.f32.gmra.mxu0 %v3491
        %v3651 = vpop.f32.mrf.mxu0
        %v3652 = vadd.f32 0.0, %v3651
        %3653 = vmatmul.f32.gmra.mxu0 %v3494
        %v3654 = vpop.f32.mrf.mxu0
        %v3655 = vadd.f32 0.0, %v3654
        %3656 = vmatmul.f32.gmra.mxu0 %v3497
        %v3657 = vpop.f32.mrf.mxu0
        %v3658 = vadd.f32 0.0, %v3657
        %3659 = vmatmul.f32.gmra.mxu0 %v3500
        %v3660 = vpop.f32.mrf.mxu0
        %v3661 = vadd.f32 0.0, %v3660
        %3662 = vmatmul.f32.gmra.mxu0 %v3503
        %v3663 = vpop.f32.mrf.mxu0
        %v3664 = vadd.f32 0.0, %v3663
        %3665 = vmatmul.f32.gmra.mxu0 %v3506
        %v3666 = vpop.f32.mrf.mxu0
        %v3667 = vadd.f32 0.0, %v3666
        %3668 = vmatmul.f32.gmra.mxu0 %v3509
        %v3669 = vpop.f32.mrf.mxu0
        %v3670 = vadd.f32 0.0, %v3669
        %3671 = vmatmul.f32.gmra.mxu0 %v3512
        %v3672 = vpop.f32.mrf.mxu0
        %v3673 = vadd.f32 0.0, %v3672
        %3674 = vmatmul.f32.gmra.mxu0 %v3515
        %v3675 = vpop.f32.mrf.mxu0
        %v3676 = vadd.f32 0.0, %v3675
        %3677 = vmatmul.f32.gmra.mxu0 %v3518
        %v3678 = vpop.f32.mrf.mxu0
        %v3679 = vadd.f32 0.0, %v3678
        %3680 = vmatmul.f32.gmra.mxu0 %v3521
        %v3681 = vpop.f32.mrf.mxu0
        %v3682 = vadd.f32 0.0, %v3681
        %3683 = vmatmul.f32.gmra.mxu0 %v3524
        %v3684 = vpop.f32.mrf.mxu0
        %v3685 = vadd.f32 0.0, %v3684
        %3686 = vmatmul.f32.gmra.mxu0 %v3527
        %v3687 = vpop.f32.mrf.mxu0
        %v3688 = vadd.f32 0.0, %v3687
        %3689 = vmatmul.f32.gmra.mxu0 %v3530
        %v3690 = vpop.f32.mrf.mxu0
        %v3691 = vadd.f32 0.0, %v3690
        %3692 = vmatmul.f32.gmra.mxu0 %v3533
        %v3693 = vpop.f32.mrf.mxu0
        %v3694 = vadd.f32 0.0, %v3693
        %3695 = vmatmul.f32.gmra.mxu0 %v3536
        %v3696 = vpop.f32.mrf.mxu0
        %v3697 = vadd.f32 0.0, %v3696
        %3698 = vmatmul.f32.gmra.mxu0 %v3539
        %v3699 = vpop.f32.mrf.mxu0
        %v3700 = vadd.f32 0.0, %v3699
        %3701 = vmatmul.f32.gmra.mxu0 %v3542
        %v3702 = vpop.f32.mrf.mxu0
        %v3703 = vadd.f32 0.0, %v3702
        %3704 = vmatmul.f32.gmra.mxu0 %v3545
        %v3705 = vpop.f32.mrf.mxu0
        %v3706 = vadd.f32 0.0, %v3705
        %3707 = vmatmul.f32.gmra.mxu0 %v3548
        %v3708 = vpop.f32.mrf.mxu0
        %v3709 = vadd.f32 0.0, %v3708
        %3710 = vmatmul.f32.gmra.mxu0 %v3551
        %v3711 = vpop.f32.mrf.mxu0
        %v3712 = vadd.f32 0.0, %v3711
        %3713 = vmatmul.f32.gmra.mxu0 %v3554
        %v3714 = vpop.f32.mrf.mxu0
        %v3715 = vadd.f32 0.0, %v3714
        %3716 = vdwg.mxu0
        %v3717 = vadd.f32 %v3364, %v3574
        %v3718 = vadd.f32 %v3365, %v3577
        %v3719 = vadd.f32 %v3366, %v3580
        %v3720 = vadd.f32 %v3367, %v3583
        %v3721 = vadd.f32 %v3368, %v3586
        %v3722 = vadd.f32 %v3369, %v3589
        %v3723 = vadd.f32 %v3370, %v3592
        %v3724 = vadd.f32 %v3371, %v3595
        %v3725 = vadd.f32 %v3372, %v3598
        %v3726 = vadd.f32 %v3373, %v3601
        %v3727 = vadd.f32 %v3374, %v3604
        %v3728 = vadd.f32 %v3375, %v3607
        %v3729 = vadd.f32 %v3376, %v3610
        %v3730 = vadd.f32 %v3377, %v3613
        %v3731 = vadd.f32 %v3378, %v3616
        %v3732 = vadd.f32 %v3379, %v3619
        %v3733 = vadd.f32 %v3380, %v3622
        %v3734 = vadd.f32 %v3381, %v3625
        %v3735 = vadd.f32 %v3382, %v3628
        %v3736 = vadd.f32 %v3383, %v3631
        %v3737 = vadd.f32 %v3384, %v3634
        %v3738 = vadd.f32 %v3385, %v3637
        %v3739 = vadd.f32 %v3386, %v3640
        %v3740 = vadd.f32 %v3387, %v3643
        %v3741 = vadd.f32 %v3388, %v3646
        %v3742 = vadd.f32 %v3389, %v3649
        %v3743 = vadd.f32 %v3390, %v3652
        %v3744 = vadd.f32 %v3391, %v3655
        %v3745 = vadd.f32 %v3392, %v3658
        %v3746 = vadd.f32 %v3393, %v3661
        %v3747 = vadd.f32 %v3394, %v3664
        %v3748 = vadd.f32 %v3395, %v3667
        %v3749 = vadd.f32 %v3396, %v3670
        %v3750 = vadd.f32 %v3397, %v3673
        %v3751 = vadd.f32 %v3398, %v3676
        %v3752 = vadd.f32 %v3399, %v3679
        %v3753 = vadd.f32 %v3400, %v3682
        %v3754 = vadd.f32 %v3401, %v3685
        %v3755 = vadd.f32 %v3402, %v3688
        %v3756 = vadd.f32 %v3403, %v3691
        %v3757 = vadd.f32 %v3404, %v3694
        %v3758 = vadd.f32 %v3405, %v3697
        %v3759 = vadd.f32 %v3406, %v3700
        %v3760 = vadd.f32 %v3407, %v3703
        %v3761 = vadd.f32 %v3408, %v3706
        %v3762 = vadd.f32 %v3409, %v3709
        %v3763 = vadd.f32 %v3410, %v3712
        %v3764 = vadd.f32 %v3411, %v3715
        %3765 = vst.msk [vmem:[#allocation2] sm:$0xff] %vm265, %v3717
        %3766 = vst.msk [vmem:[#allocation2 + $0x8] sm:$0xff] %vm265, %v3718
        %3767 = vst.msk [vmem:[#allocation2 + $0x10] sm:$0xff] %vm265, %v3719
        %3768 = vst.msk [vmem:[#allocation2 + $0x18] sm:$0xff] %vm265, %v3720
        %3769 = vst.msk [vmem:[#allocation2 + $0x20] sm:$0xff] %vm265, %v3721
        %3770 = vst.msk [vmem:[#allocation2 + $0x28] sm:$0xff] %vm265, %v3722
        %3771 = vst.msk [vmem:[#allocation2 + $0x30] sm:$0xff] %vm265, %v3723
        %3772 = vst.msk [vmem:[#allocation2 + $0x38] sm:$0xff] %vm265, %v3724
        %3773 = vst.msk [vmem:[#allocation2 + $0x40] sm:$0xff] %vm265, %v3725
        %3774 = vst.msk [vmem:[#allocation2 + $0x48] sm:$0xff] %vm265, %v3726
        %3775 = vst.msk [vmem:[#allocation2 + $0x50] sm:$0xff] %vm265, %v3727
        %3776 = vst.msk [vmem:[#allocation2 + $0x58] sm:$0xff] %vm265, %v3728
        %3777 = vst.msk [vmem:[#allocation2 + $0x60] sm:$0xff] %vm265, %v3729
        %3778 = vst.msk [vmem:[#allocation2 + $0x68] sm:$0xff] %vm265, %v3730
        %3779 = vst.msk [vmem:[#allocation2 + $0x70] sm:$0xff] %vm265, %v3731
        %3780 = vst.msk [vmem:[#allocation2 + $0x78] sm:$0xff] %vm265, %v3732
        %3781 = vst.msk [vmem:[#allocation2 + $0x80] sm:$0xff] %vm265, %v3733
        %3782 = vst.msk [vmem:[#allocation2 + $0x88] sm:$0xff] %vm265, %v3734
        %3783 = vst.msk [vmem:[#allocation2 + $0x90] sm:$0xff] %vm265, %v3735
        %3784 = vst.msk [vmem:[#allocation2 + $0x98] sm:$0xff] %vm265, %v3736
        %3785 = vst.msk [vmem:[#allocation2 + $0xa0] sm:$0xff] %vm265, %v3737
        %3786 = vst.msk [vmem:[#allocation2 + $0xa8] sm:$0xff] %vm265, %v3738
        %3787 = vst.msk [vmem:[#allocation2 + $0xb0] sm:$0xff] %vm265, %v3739
        %3788 = vst.msk [vmem:[#allocation2 + $0xb8] sm:$0xff] %vm265, %v3740
        %3789 = vst.msk [vmem:[#allocation2 + $0xc0] sm:$0xff] %vm265, %v3741
        %3790 = vst.msk [vmem:[#allocation2 + $0xc8] sm:$0xff] %vm265, %v3742
        %3791 = vst.msk [vmem:[#allocation2 + $0xd0] sm:$0xff] %vm265, %v3743
        %3792 = vst.msk [vmem:[#allocation2 + $0xd8] sm:$0xff] %vm265, %v3744
        %3793 = vst.msk [vmem:[#allocation2 + $0xe0] sm:$0xff] %vm265, %v3745
        %3794 = vst.msk [vmem:[#allocation2 + $0xe8] sm:$0xff] %vm265, %v3746
        %3795 = vst.msk [vmem:[#allocation2 + $0xf0] sm:$0xff] %vm265, %v3747
        %3796 = vst.msk [vmem:[#allocation2 + $0xf8] sm:$0xff] %vm265, %v3748
        %3797 = vst.msk [vmem:[#allocation2 + $0x100] sm:$0xff] %vm265, %v3749
        %3798 = vst.msk [vmem:[#allocation2 + $0x108] sm:$0xff] %vm265, %v3750
        %3799 = vst.msk [vmem:[#allocation2 + $0x110] sm:$0xff] %vm265, %v3751
        %3800 = vst.msk [vmem:[#allocation2 + $0x118] sm:$0xff] %vm265, %v3752
        %3801 = vst.msk [vmem:[#allocation2 + $0x120] sm:$0xff] %vm265, %v3753
        %3802 = vst.msk [vmem:[#allocation2 + $0x128] sm:$0xff] %vm265, %v3754
        %3803 = vst.msk [vmem:[#allocation2 + $0x130] sm:$0xff] %vm265, %v3755
        %3804 = vst.msk [vmem:[#allocation2 + $0x138] sm:$0xff] %vm265, %v3756
        %3805 = vst.msk [vmem:[#allocation2 + $0x140] sm:$0xff] %vm265, %v3757
        %3806 = vst.msk [vmem:[#allocation2 + $0x148] sm:$0xff] %vm265, %v3758
        %3807 = vst.msk [vmem:[#allocation2 + $0x150] sm:$0xff] %vm265, %v3759
        %3808 = vst.msk [vmem:[#allocation2 + $0x158] sm:$0xff] %vm265, %v3760
        %3809 = vst.msk [vmem:[#allocation2 + $0x160] sm:$0xff] %vm265, %v3761
        %3810 = vst.msk [vmem:[#allocation2 + $0x168] sm:$0xff] %vm265, %v3762
        %3811 = vst.msk [vmem:[#allocation2 + $0x170] sm:$0xff] %vm265, %v3763
        %3812 = vst.msk [vmem:[#allocation2 + $0x178] sm:$0xff] %vm265, %v3764
        %s3813 = sadd.s32 %s264, 49
        %s3814 = scalar_lea.vmem %s0, %s3813
        %v3815 = vld [vmem:[%s3814] sm:$0xff]
        %v3816 = vld [vmem:[%s3814 + $0x8] sm:$0xff]
        %v3817 = vld [vmem:[%s3814 + $0x10] sm:$0xff]
        %v3818 = vld [vmem:[%s3814 + $0x18] sm:$0xff]
        %v3819 = vld [vmem:[%s3814 + $0x20] sm:$0xff]
        %v3820 = vld [vmem:[%s3814 + $0x28] sm:$0xff]
        %v3821 = vld [vmem:[%s3814 + $0x30] sm:$0xff]
        %v3822 = vld [vmem:[%s3814 + $0x38] sm:$0xff]
        %v3823 = vld [vmem:[%s3814 + $0x40] sm:$0xff]
        %v3824 = vld [vmem:[%s3814 + $0x48] sm:$0xff]
        %v3825 = vld [vmem:[%s3814 + $0x50] sm:$0xff]
        %v3826 = vld [vmem:[%s3814 + $0x58] sm:$0xff]
        %v3827 = vld [vmem:[%s3814 + $0x60] sm:$0xff]
        %v3828 = vld [vmem:[%s3814 + $0x68] sm:$0xff]
        %v3829 = vld [vmem:[%s3814 + $0x70] sm:$0xff]
        %v3830 = vld [vmem:[%s3814 + $0x78] sm:$0xff]
        %v3831 = vld [vmem:[%s3814 + $0x80] sm:$0xff]
        %v3832 = vld [vmem:[%s3814 + $0x88] sm:$0xff]
        %v3833 = vld [vmem:[%s3814 + $0x90] sm:$0xff]
        %v3834 = vld [vmem:[%s3814 + $0x98] sm:$0xff]
        %v3835 = vld [vmem:[%s3814 + $0xa0] sm:$0xff]
        %v3836 = vld [vmem:[%s3814 + $0xa8] sm:$0xff]
        %v3837 = vld [vmem:[%s3814 + $0xb0] sm:$0xff]
        %v3838 = vld [vmem:[%s3814 + $0xb8] sm:$0xff]
        %v3839 = vld [vmem:[%s3814 + $0xc0] sm:$0xff]
        %v3840 = vld [vmem:[%s3814 + $0xc8] sm:$0xff]
        %v3841 = vld [vmem:[%s3814 + $0xd0] sm:$0xff]
        %v3842 = vld [vmem:[%s3814 + $0xd8] sm:$0xff]
        %v3843 = vld [vmem:[%s3814 + $0xe0] sm:$0xff]
        %v3844 = vld [vmem:[%s3814 + $0xe8] sm:$0xff]
        %v3845 = vld [vmem:[%s3814 + $0xf0] sm:$0xff]
        %v3846 = vld [vmem:[%s3814 + $0xf8] sm:$0xff]
        %v3847 = vld [vmem:[%s3814 + $0x100] sm:$0xff]
        %v3848 = vld [vmem:[%s3814 + $0x108] sm:$0xff]
        %v3849 = vld [vmem:[%s3814 + $0x110] sm:$0xff]
        %v3850 = vld [vmem:[%s3814 + $0x118] sm:$0xff]
        %v3851 = vld [vmem:[%s3814 + $0x120] sm:$0xff]
        %v3852 = vld [vmem:[%s3814 + $0x128] sm:$0xff]
        %v3853 = vld [vmem:[%s3814 + $0x130] sm:$0xff]
        %v3854 = vld [vmem:[%s3814 + $0x138] sm:$0xff]
        %v3855 = vld [vmem:[%s3814 + $0x140] sm:$0xff]
        %v3856 = vld [vmem:[%s3814 + $0x148] sm:$0xff]
        %v3857 = vld [vmem:[%s3814 + $0x150] sm:$0xff]
        %v3858 = vld [vmem:[%s3814 + $0x158] sm:$0xff]
        %v3859 = vld [vmem:[%s3814 + $0x160] sm:$0xff]
        %v3860 = vld [vmem:[%s3814 + $0x168] sm:$0xff]
        %v3861 = vld [vmem:[%s3814 + $0x170] sm:$0xff]
        %v3862 = vld [vmem:[%s3814 + $0x178] sm:$0xff]
        %v3863 = vld [vmem:[%s2 + $0x38] sm:$0xff]
        %v3864 = vld [vmem:[#allocation2] sm:$0xff]
        %v3865 = vld [vmem:[#allocation2 + $0x8] sm:$0xff]
        %v3866 = vld [vmem:[#allocation2 + $0x10] sm:$0xff]
        %v3867 = vld [vmem:[#allocation2 + $0x18] sm:$0xff]
        %v3868 = vld [vmem:[#allocation2 + $0x20] sm:$0xff]
        %v3869 = vld [vmem:[#allocation2 + $0x28] sm:$0xff]
        %v3870 = vld [vmem:[#allocation2 + $0x30] sm:$0xff]
        %v3871 = vld [vmem:[#allocation2 + $0x38] sm:$0xff]
        %v3872 = vld [vmem:[#allocation2 + $0x40] sm:$0xff]
        %v3873 = vld [vmem:[#allocation2 + $0x48] sm:$0xff]
        %v3874 = vld [vmem:[#allocation2 + $0x50] sm:$0xff]
        %v3875 = vld [vmem:[#allocation2 + $0x58] sm:$0xff]
        %v3876 = vld [vmem:[#allocation2 + $0x60] sm:$0xff]
        %v3877 = vld [vmem:[#allocation2 + $0x68] sm:$0xff]
        %v3878 = vld [vmem:[#allocation2 + $0x70] sm:$0xff]
        %v3879 = vld [vmem:[#allocation2 + $0x78] sm:$0xff]
        %v3880 = vld [vmem:[#allocation2 + $0x80] sm:$0xff]
        %v3881 = vld [vmem:[#allocation2 + $0x88] sm:$0xff]
        %v3882 = vld [vmem:[#allocation2 + $0x90] sm:$0xff]
        %v3883 = vld [vmem:[#allocation2 + $0x98] sm:$0xff]
        %v3884 = vld [vmem:[#allocation2 + $0xa0] sm:$0xff]
        %v3885 = vld [vmem:[#allocation2 + $0xa8] sm:$0xff]
        %v3886 = vld [vmem:[#allocation2 + $0xb0] sm:$0xff]
        %v3887 = vld [vmem:[#allocation2 + $0xb8] sm:$0xff]
        %v3888 = vld [vmem:[#allocation2 + $0xc0] sm:$0xff]
        %v3889 = vld [vmem:[#allocation2 + $0xc8] sm:$0xff]
        %v3890 = vld [vmem:[#allocation2 + $0xd0] sm:$0xff]
        %v3891 = vld [vmem:[#allocation2 + $0xd8] sm:$0xff]
        %v3892 = vld [vmem:[#allocation2 + $0xe0] sm:$0xff]
        %v3893 = vld [vmem:[#allocation2 + $0xe8] sm:$0xff]
        %v3894 = vld [vmem:[#allocation2 + $0xf0] sm:$0xff]
        %v3895 = vld [vmem:[#allocation2 + $0xf8] sm:$0xff]
        %v3896 = vld [vmem:[#allocation2 + $0x100] sm:$0xff]
        %v3897 = vld [vmem:[#allocation2 + $0x108] sm:$0xff]
        %v3898 = vld [vmem:[#allocation2 + $0x110] sm:$0xff]
        %v3899 = vld [vmem:[#allocation2 + $0x118] sm:$0xff]
        %v3900 = vld [vmem:[#allocation2 + $0x120] sm:$0xff]
        %v3901 = vld [vmem:[#allocation2 + $0x128] sm:$0xff]
        %v3902 = vld [vmem:[#allocation2 + $0x130] sm:$0xff]
        %v3903 = vld [vmem:[#allocation2 + $0x138] sm:$0xff]
        %v3904 = vld [vmem:[#allocation2 + $0x140] sm:$0xff]
        %v3905 = vld [vmem:[#allocation2 + $0x148] sm:$0xff]
        %v3906 = vld [vmem:[#allocation2 + $0x150] sm:$0xff]
        %v3907 = vld [vmem:[#allocation2 + $0x158] sm:$0xff]
        %v3908 = vld [vmem:[#allocation2 + $0x160] sm:$0xff]
        %v3909 = vld [vmem:[#allocation2 + $0x168] sm:$0xff]
        %v3910 = vld [vmem:[#allocation2 + $0x170] sm:$0xff]
        %v3911 = vld [vmem:[#allocation2 + $0x178] sm:$0xff]
        %v3913 = vsel %vm265, %v3815, 0
        %v3916 = vsel %vm265, %v3816, 0
        %v3919 = vsel %vm265, %v3817, 0
        %v3922 = vsel %vm265, %v3818, 0
        %v3925 = vsel %vm265, %v3819, 0
        %v3928 = vsel %vm265, %v3820, 0
        %v3931 = vsel %vm265, %v3821, 0
        %v3934 = vsel %vm265, %v3822, 0
        %v3937 = vsel %vm265, %v3823, 0
        %v3940 = vsel %vm265, %v3824, 0
        %v3943 = vsel %vm265, %v3825, 0
        %v3946 = vsel %vm265, %v3826, 0
        %v3949 = vsel %vm265, %v3827, 0
        %v3952 = vsel %vm265, %v3828, 0
        %v3955 = vsel %vm265, %v3829, 0
        %v3958 = vsel %vm265, %v3830, 0
        %v3961 = vsel %vm265, %v3831, 0
        %v3964 = vsel %vm265, %v3832, 0
        %v3967 = vsel %vm265, %v3833, 0
        %v3970 = vsel %vm265, %v3834, 0
        %v3973 = vsel %vm265, %v3835, 0
        %v3976 = vsel %vm265, %v3836, 0
        %v3979 = vsel %vm265, %v3837, 0
        %v3982 = vsel %vm265, %v3838, 0
        %v3985 = vsel %vm265, %v3839, 0
        %v3988 = vsel %vm265, %v3840, 0
        %v3991 = vsel %vm265, %v3841, 0
        %v3994 = vsel %vm265, %v3842, 0
        %v3997 = vsel %vm265, %v3843, 0
        %v4000 = vsel %vm265, %v3844, 0
        %v4003 = vsel %vm265, %v3845, 0
        %v4006 = vsel %vm265, %v3846, 0
        %v4009 = vsel %vm265, %v3847, 0
        %v4012 = vsel %vm265, %v3848, 0
        %v4015 = vsel %vm265, %v3849, 0
        %v4018 = vsel %vm265, %v3850, 0
        %v4021 = vsel %vm265, %v3851, 0
        %v4024 = vsel %vm265, %v3852, 0
        %v4027 = vsel %vm265, %v3853, 0
        %v4030 = vsel %vm265, %v3854, 0
        %v4033 = vsel %vm265, %v3855, 0
        %v4036 = vsel %vm265, %v3856, 0
        %v4039 = vsel %vm265, %v3857, 0
        %v4042 = vsel %vm265, %v3858, 0
        %v4045 = vsel %vm265, %v3859, 0
        %v4048 = vsel %vm265, %v3860, 0
        %v4051 = vsel %vm265, %v3861, 0
        %v4054 = vsel %vm265, %v3862, 0
        %4056 = vmatpush.msra.mxu0 0.0
        %4057 = vmatpush.msra.mxu0 0.0
        %4058 = vmatpush.msra.mxu0 0.0
        %4059 = vmatpush.msra.mxu0 0.0
        %4060 = vmatpush.msra.mxu0 0.0
        %4061 = vmatpush.msra.mxu0 0.0
        %4062 = vmatpush.msra.mxu0 0.0
        %4063 = vmatpush.msra.mxu0 0.0
        %4064 = vmatpush.msra.mxu0 0.0
        %4065 = vmatpush.msra.mxu0 0.0
        %4066 = vmatpush.msra.mxu0 0.0
        %4067 = vmatpush.msra.mxu0 0.0
        %4068 = vmatpush.msra.mxu0 0.0
        %4069 = vmatpush.msra.mxu0 0.0
        %4070 = vmatpush.msra.mxu0 0.0
        %4071 = vmatpush.msra.mxu0 %v3863
        %4072 = vmatmul.f32.gmra.mxu0 %v3913
        %v4073 = vpop.f32.mrf.mxu0
        %v4074 = vadd.f32 0.0, %v4073
        %4075 = vmatmul.f32.gmra.mxu0 %v3916
        %v4076 = vpop.f32.mrf.mxu0
        %v4077 = vadd.f32 0.0, %v4076
        %4078 = vmatmul.f32.gmra.mxu0 %v3919
        %v4079 = vpop.f32.mrf.mxu0
        %v4080 = vadd.f32 0.0, %v4079
        %4081 = vmatmul.f32.gmra.mxu0 %v3922
        %v4082 = vpop.f32.mrf.mxu0
        %v4083 = vadd.f32 0.0, %v4082
        %4084 = vmatmul.f32.gmra.mxu0 %v3925
        %v4085 = vpop.f32.mrf.mxu0
        %v4086 = vadd.f32 0.0, %v4085
        %4087 = vmatmul.f32.gmra.mxu0 %v3928
        %v4088 = vpop.f32.mrf.mxu0
        %v4089 = vadd.f32 0.0, %v4088
        %4090 = vmatmul.f32.gmra.mxu0 %v3931
        %v4091 = vpop.f32.mrf.mxu0
        %v4092 = vadd.f32 0.0, %v4091
        %4093 = vmatmul.f32.gmra.mxu0 %v3934
        %v4094 = vpop.f32.mrf.mxu0
        %v4095 = vadd.f32 0.0, %v4094
        %4096 = vmatmul.f32.gmra.mxu0 %v3937
        %v4097 = vpop.f32.mrf.mxu0
        %v4098 = vadd.f32 0.0, %v4097
        %4099 = vmatmul.f32.gmra.mxu0 %v3940
        %v4100 = vpop.f32.mrf.mxu0
        %v4101 = vadd.f32 0.0, %v4100
        %4102 = vmatmul.f32.gmra.mxu0 %v3943
        %v4103 = vpop.f32.mrf.mxu0
        %v4104 = vadd.f32 0.0, %v4103
        %4105 = vmatmul.f32.gmra.mxu0 %v3946
        %v4106 = vpop.f32.mrf.mxu0
        %v4107 = vadd.f32 0.0, %v4106
        %4108 = vmatmul.f32.gmra.mxu0 %v3949
        %v4109 = vpop.f32.mrf.mxu0
        %v4110 = vadd.f32 0.0, %v4109
        %4111 = vmatmul.f32.gmra.mxu0 %v3952
        %v4112 = vpop.f32.mrf.mxu0
        %v4113 = vadd.f32 0.0, %v4112
        %4114 = vmatmul.f32.gmra.mxu0 %v3955
        %v4115 = vpop.f32.mrf.mxu0
        %v4116 = vadd.f32 0.0, %v4115
        %4117 = vmatmul.f32.gmra.mxu0 %v3958
        %v4118 = vpop.f32.mrf.mxu0
        %v4119 = vadd.f32 0.0, %v4118
        %4120 = vmatmul.f32.gmra.mxu0 %v3961
        %v4121 = vpop.f32.mrf.mxu0
        %v4122 = vadd.f32 0.0, %v4121
        %4123 = vmatmul.f32.gmra.mxu0 %v3964
        %v4124 = vpop.f32.mrf.mxu0
        %v4125 = vadd.f32 0.0, %v4124
        %4126 = vmatmul.f32.gmra.mxu0 %v3967
        %v4127 = vpop.f32.mrf.mxu0
        %v4128 = vadd.f32 0.0, %v4127
        %4129 = vmatmul.f32.gmra.mxu0 %v3970
        %v4130 = vpop.f32.mrf.mxu0
        %v4131 = vadd.f32 0.0, %v4130
        %4132 = vmatmul.f32.gmra.mxu0 %v3973
        %v4133 = vpop.f32.mrf.mxu0
        %v4134 = vadd.f32 0.0, %v4133
        %4135 = vmatmul.f32.gmra.mxu0 %v3976
        %v4136 = vpop.f32.mrf.mxu0
        %v4137 = vadd.f32 0.0, %v4136
        %4138 = vmatmul.f32.gmra.mxu0 %v3979
        %v4139 = vpop.f32.mrf.mxu0
        %v4140 = vadd.f32 0.0, %v4139
        %4141 = vmatmul.f32.gmra.mxu0 %v3982
        %v4142 = vpop.f32.mrf.mxu0
        %v4143 = vadd.f32 0.0, %v4142
        %4144 = vmatmul.f32.gmra.mxu0 %v3985
        %v4145 = vpop.f32.mrf.mxu0
        %v4146 = vadd.f32 0.0, %v4145
        %4147 = vmatmul.f32.gmra.mxu0 %v3988
        %v4148 = vpop.f32.mrf.mxu0
        %v4149 = vadd.f32 0.0, %v4148
        %4150 = vmatmul.f32.gmra.mxu0 %v3991
        %v4151 = vpop.f32.mrf.mxu0
        %v4152 = vadd.f32 0.0, %v4151
        %4153 = vmatmul.f32.gmra.mxu0 %v3994
        %v4154 = vpop.f32.mrf.mxu0
        %v4155 = vadd.f32 0.0, %v4154
        %4156 = vmatmul.f32.gmra.mxu0 %v3997
        %v4157 = vpop.f32.mrf.mxu0
        %v4158 = vadd.f32 0.0, %v4157
        %4159 = vmatmul.f32.gmra.mxu0 %v4000
        %v4160 = vpop.f32.mrf.mxu0
        %v4161 = vadd.f32 0.0, %v4160
        %4162 = vmatmul.f32.gmra.mxu0 %v4003
        %v4163 = vpop.f32.mrf.mxu0
        %v4164 = vadd.f32 0.0, %v4163
        %4165 = vmatmul.f32.gmra.mxu0 %v4006
        %v4166 = vpop.f32.mrf.mxu0
        %v4167 = vadd.f32 0.0, %v4166
        %4168 = vmatmul.f32.gmra.mxu0 %v4009
        %v4169 = vpop.f32.mrf.mxu0
        %v4170 = vadd.f32 0.0, %v4169
        %4171 = vmatmul.f32.gmra.mxu0 %v4012
        %v4172 = vpop.f32.mrf.mxu0
        %v4173 = vadd.f32 0.0, %v4172
        %4174 = vmatmul.f32.gmra.mxu0 %v4015
        %v4175 = vpop.f32.mrf.mxu0
        %v4176 = vadd.f32 0.0, %v4175
        %4177 = vmatmul.f32.gmra.mxu0 %v4018
        %v4178 = vpop.f32.mrf.mxu0
        %v4179 = vadd.f32 0.0, %v4178
        %4180 = vmatmul.f32.gmra.mxu0 %v4021
        %v4181 = vpop.f32.mrf.mxu0
        %v4182 = vadd.f32 0.0, %v4181
        %4183 = vmatmul.f32.gmra.mxu0 %v4024
        %v4184 = vpop.f32.mrf.mxu0
        %v4185 = vadd.f32 0.0, %v4184
        %4186 = vmatmul.f32.gmra.mxu0 %v4027
        %v4187 = vpop.f32.mrf.mxu0
        %v4188 = vadd.f32 0.0, %v4187
        %4189 = vmatmul.f32.gmra.mxu0 %v4030
        %v4190 = vpop.f32.mrf.mxu0
        %v4191 = vadd.f32 0.0, %v4190
        %4192 = vmatmul.f32.gmra.mxu0 %v4033
        %v4193 = vpop.f32.mrf.mxu0
        %v4194 = vadd.f32 0.0, %v4193
        %4195 = vmatmul.f32.gmra.mxu0 %v4036
        %v4196 = vpop.f32.mrf.mxu0
        %v4197 = vadd.f32 0.0, %v4196
        %4198 = vmatmul.f32.gmra.mxu0 %v4039
        %v4199 = vpop.f32.mrf.mxu0
        %v4200 = vadd.f32 0.0, %v4199
        %4201 = vmatmul.f32.gmra.mxu0 %v4042
        %v4202 = vpop.f32.mrf.mxu0
        %v4203 = vadd.f32 0.0, %v4202
        %4204 = vmatmul.f32.gmra.mxu0 %v4045
        %v4205 = vpop.f32.mrf.mxu0
        %v4206 = vadd.f32 0.0, %v4205
        %4207 = vmatmul.f32.gmra.mxu0 %v4048
        %v4208 = vpop.f32.mrf.mxu0
        %v4209 = vadd.f32 0.0, %v4208
        %4210 = vmatmul.f32.gmra.mxu0 %v4051
        %v4211 = vpop.f32.mrf.mxu0
        %v4212 = vadd.f32 0.0, %v4211
        %4213 = vmatmul.f32.gmra.mxu0 %v4054
        %v4214 = vpop.f32.mrf.mxu0
        %v4215 = vadd.f32 0.0, %v4214
        %4216 = vdwg.mxu0
        %v4217 = vadd.f32 %v3864, %v4074
        %v4218 = vadd.f32 %v3865, %v4077
        %v4219 = vadd.f32 %v3866, %v4080
        %v4220 = vadd.f32 %v3867, %v4083
        %v4221 = vadd.f32 %v3868, %v4086
        %v4222 = vadd.f32 %v3869, %v4089
        %v4223 = vadd.f32 %v3870, %v4092
        %v4224 = vadd.f32 %v3871, %v4095
        %v4225 = vadd.f32 %v3872, %v4098
        %v4226 = vadd.f32 %v3873, %v4101
        %v4227 = vadd.f32 %v3874, %v4104
        %v4228 = vadd.f32 %v3875, %v4107
        %v4229 = vadd.f32 %v3876, %v4110
        %v4230 = vadd.f32 %v3877, %v4113
        %v4231 = vadd.f32 %v3878, %v4116
        %v4232 = vadd.f32 %v3879, %v4119
        %v4233 = vadd.f32 %v3880, %v4122
        %v4234 = vadd.f32 %v3881, %v4125
        %v4235 = vadd.f32 %v3882, %v4128
        %v4236 = vadd.f32 %v3883, %v4131
        %v4237 = vadd.f32 %v3884, %v4134
        %v4238 = vadd.f32 %v3885, %v4137
        %v4239 = vadd.f32 %v3886, %v4140
        %v4240 = vadd.f32 %v3887, %v4143
        %v4241 = vadd.f32 %v3888, %v4146
        %v4242 = vadd.f32 %v3889, %v4149
        %v4243 = vadd.f32 %v3890, %v4152
        %v4244 = vadd.f32 %v3891, %v4155
        %v4245 = vadd.f32 %v3892, %v4158
        %v4246 = vadd.f32 %v3893, %v4161
        %v4247 = vadd.f32 %v3894, %v4164
        %v4248 = vadd.f32 %v3895, %v4167
        %v4249 = vadd.f32 %v3896, %v4170
        %v4250 = vadd.f32 %v3897, %v4173
        %v4251 = vadd.f32 %v3898, %v4176
        %v4252 = vadd.f32 %v3899, %v4179
        %v4253 = vadd.f32 %v3900, %v4182
        %v4254 = vadd.f32 %v3901, %v4185
        %v4255 = vadd.f32 %v3902, %v4188
        %v4256 = vadd.f32 %v3903, %v4191
        %v4257 = vadd.f32 %v3904, %v4194
        %v4258 = vadd.f32 %v3905, %v4197
        %v4259 = vadd.f32 %v3906, %v4200
        %v4260 = vadd.f32 %v3907, %v4203
        %v4261 = vadd.f32 %v3908, %v4206
        %v4262 = vadd.f32 %v3909, %v4209
        %v4263 = vadd.f32 %v3910, %v4212
        %v4264 = vadd.f32 %v3911, %v4215
        %4265 = vst.msk [vmem:[#allocation2] sm:$0xff] %vm265, %v4217
        %4266 = vst.msk [vmem:[#allocation2 + $0x8] sm:$0xff] %vm265, %v4218
        %4267 = vst.msk [vmem:[#allocation2 + $0x10] sm:$0xff] %vm265, %v4219
        %4268 = vst.msk [vmem:[#allocation2 + $0x18] sm:$0xff] %vm265, %v4220
        %4269 = vst.msk [vmem:[#allocation2 + $0x20] sm:$0xff] %vm265, %v4221
        %4270 = vst.msk [vmem:[#allocation2 + $0x28] sm:$0xff] %vm265, %v4222
        %4271 = vst.msk [vmem:[#allocation2 + $0x30] sm:$0xff] %vm265, %v4223
        %4272 = vst.msk [vmem:[#allocation2 + $0x38] sm:$0xff] %vm265, %v4224
        %4273 = vst.msk [vmem:[#allocation2 + $0x40] sm:$0xff] %vm265, %v4225
        %4274 = vst.msk [vmem:[#allocation2 + $0x48] sm:$0xff] %vm265, %v4226
        %4275 = vst.msk [vmem:[#allocation2 + $0x50] sm:$0xff] %vm265, %v4227
        %4276 = vst.msk [vmem:[#allocation2 + $0x58] sm:$0xff] %vm265, %v4228
        %4277 = vst.msk [vmem:[#allocation2 + $0x60] sm:$0xff] %vm265, %v4229
        %4278 = vst.msk [vmem:[#allocation2 + $0x68] sm:$0xff] %vm265, %v4230
        %4279 = vst.msk [vmem:[#allocation2 + $0x70] sm:$0xff] %vm265, %v4231
        %4280 = vst.msk [vmem:[#allocation2 + $0x78] sm:$0xff] %vm265, %v4232
        %4281 = vst.msk [vmem:[#allocation2 + $0x80] sm:$0xff] %vm265, %v4233
        %4282 = vst.msk [vmem:[#allocation2 + $0x88] sm:$0xff] %vm265, %v4234
        %4283 = vst.msk [vmem:[#allocation2 + $0x90] sm:$0xff] %vm265, %v4235
        %4284 = vst.msk [vmem:[#allocation2 + $0x98] sm:$0xff] %vm265, %v4236
        %4285 = vst.msk [vmem:[#allocation2 + $0xa0] sm:$0xff] %vm265, %v4237
        %4286 = vst.msk [vmem:[#allocation2 + $0xa8] sm:$0xff] %vm265, %v4238
        %4287 = vst.msk [vmem:[#allocation2 + $0xb0] sm:$0xff] %vm265, %v4239
        %4288 = vst.msk [vmem:[#allocation2 + $0xb8] sm:$0xff] %vm265, %v4240
        %4289 = vst.msk [vmem:[#allocation2 + $0xc0] sm:$0xff] %vm265, %v4241
        %4290 = vst.msk [vmem:[#allocation2 + $0xc8] sm:$0xff] %vm265, %v4242
        %4291 = vst.msk [vmem:[#allocation2 + $0xd0] sm:$0xff] %vm265, %v4243
        %4292 = vst.msk [vmem:[#allocation2 + $0xd8] sm:$0xff] %vm265, %v4244
        %4293 = vst.msk [vmem:[#allocation2 + $0xe0] sm:$0xff] %vm265, %v4245
        %4294 = vst.msk [vmem:[#allocation2 + $0xe8] sm:$0xff] %vm265, %v4246
        %4295 = vst.msk [vmem:[#allocation2 + $0xf0] sm:$0xff] %vm265, %v4247
        %4296 = vst.msk [vmem:[#allocation2 + $0xf8] sm:$0xff] %vm265, %v4248
        %4297 = vst.msk [vmem:[#allocation2 + $0x100] sm:$0xff] %vm265, %v4249
        %4298 = vst.msk [vmem:[#allocation2 + $0x108] sm:$0xff] %vm265, %v4250
        %4299 = vst.msk [vmem:[#allocation2 + $0x110] sm:$0xff] %vm265, %v4251
        %4300 = vst.msk [vmem:[#allocation2 + $0x118] sm:$0xff] %vm265, %v4252
        %4301 = vst.msk [vmem:[#allocation2 + $0x120] sm:$0xff] %vm265, %v4253
        %4302 = vst.msk [vmem:[#allocation2 + $0x128] sm:$0xff] %vm265, %v4254
        %4303 = vst.msk [vmem:[#allocation2 + $0x130] sm:$0xff] %vm265, %v4255
        %4304 = vst.msk [vmem:[#allocation2 + $0x138] sm:$0xff] %vm265, %v4256
        %4305 = vst.msk [vmem:[#allocation2 + $0x140] sm:$0xff] %vm265, %v4257
        %4306 = vst.msk [vmem:[#allocation2 + $0x148] sm:$0xff] %vm265, %v4258
        %4307 = vst.msk [vmem:[#allocation2 + $0x150] sm:$0xff] %vm265, %v4259
        %4308 = vst.msk [vmem:[#allocation2 + $0x158] sm:$0xff] %vm265, %v4260
        %4309 = vst.msk [vmem:[#allocation2 + $0x160] sm:$0xff] %vm265, %v4261
        %4310 = vst.msk [vmem:[#allocation2 + $0x168] sm:$0xff] %vm265, %v4262
        %4311 = vst.msk [vmem:[#allocation2 + $0x170] sm:$0xff] %vm265, %v4263
        %4312 = vst.msk [vmem:[#allocation2 + $0x178] sm:$0xff] %vm265, %v4264
        %s4313 = sadd.s32 %s264, 50
        %s4314 = scalar_lea.vmem %s0, %s4313
        %v4315 = vld [vmem:[%s4314] sm:$0xff]
        %v4316 = vld [vmem:[%s4314 + $0x8] sm:$0xff]
        %v4317 = vld [vmem:[%s4314 + $0x10] sm:$0xff]
        %v4318 = vld [vmem:[%s4314 + $0x18] sm:$0xff]
        %v4319 = vld [vmem:[%s4314 + $0x20] sm:$0xff]
        %v4320 = vld [vmem:[%s4314 + $0x28] sm:$0xff]
        %v4321 = vld [vmem:[%s4314 + $0x30] sm:$0xff]
        %v4322 = vld [vmem:[%s4314 + $0x38] sm:$0xff]
        %v4323 = vld [vmem:[%s4314 + $0x40] sm:$0xff]
        %v4324 = vld [vmem:[%s4314 + $0x48] sm:$0xff]
        %v4325 = vld [vmem:[%s4314 + $0x50] sm:$0xff]
        %v4326 = vld [vmem:[%s4314 + $0x58] sm:$0xff]
        %v4327 = vld [vmem:[%s4314 + $0x60] sm:$0xff]
        %v4328 = vld [vmem:[%s4314 + $0x68] sm:$0xff]
        %v4329 = vld [vmem:[%s4314 + $0x70] sm:$0xff]
        %v4330 = vld [vmem:[%s4314 + $0x78] sm:$0xff]
        %v4331 = vld [vmem:[%s4314 + $0x80] sm:$0xff]
        %v4332 = vld [vmem:[%s4314 + $0x88] sm:$0xff]
        %v4333 = vld [vmem:[%s4314 + $0x90] sm:$0xff]
        %v4334 = vld [vmem:[%s4314 + $0x98] sm:$0xff]
        %v4335 = vld [vmem:[%s4314 + $0xa0] sm:$0xff]
        %v4336 = vld [vmem:[%s4314 + $0xa8] sm:$0xff]
        %v4337 = vld [vmem:[%s4314 + $0xb0] sm:$0xff]
        %v4338 = vld [vmem:[%s4314 + $0xb8] sm:$0xff]
        %v4339 = vld [vmem:[%s4314 + $0xc0] sm:$0xff]
        %v4340 = vld [vmem:[%s4314 + $0xc8] sm:$0xff]
        %v4341 = vld [vmem:[%s4314 + $0xd0] sm:$0xff]
        %v4342 = vld [vmem:[%s4314 + $0xd8] sm:$0xff]
        %v4343 = vld [vmem:[%s4314 + $0xe0] sm:$0xff]
        %v4344 = vld [vmem:[%s4314 + $0xe8] sm:$0xff]
        %v4345 = vld [vmem:[%s4314 + $0xf0] sm:$0xff]
        %v4346 = vld [vmem:[%s4314 + $0xf8] sm:$0xff]
        %v4347 = vld [vmem:[%s4314 + $0x100] sm:$0xff]
        %v4348 = vld [vmem:[%s4314 + $0x108] sm:$0xff]
        %v4349 = vld [vmem:[%s4314 + $0x110] sm:$0xff]
        %v4350 = vld [vmem:[%s4314 + $0x118] sm:$0xff]
        %v4351 = vld [vmem:[%s4314 + $0x120] sm:$0xff]
        %v4352 = vld [vmem:[%s4314 + $0x128] sm:$0xff]
        %v4353 = vld [vmem:[%s4314 + $0x130] sm:$0xff]
        %v4354 = vld [vmem:[%s4314 + $0x138] sm:$0xff]
        %v4355 = vld [vmem:[%s4314 + $0x140] sm:$0xff]
        %v4356 = vld [vmem:[%s4314 + $0x148] sm:$0xff]
        %v4357 = vld [vmem:[%s4314 + $0x150] sm:$0xff]
        %v4358 = vld [vmem:[%s4314 + $0x158] sm:$0xff]
        %v4359 = vld [vmem:[%s4314 + $0x160] sm:$0xff]
        %v4360 = vld [vmem:[%s4314 + $0x168] sm:$0xff]
        %v4361 = vld [vmem:[%s4314 + $0x170] sm:$0xff]
        %v4362 = vld [vmem:[%s4314 + $0x178] sm:$0xff]
        %v4363 = vld [vmem:[%s2 + $0x40] sm:$0xff]
        %v4364 = vld [vmem:[#allocation2] sm:$0xff]
        %v4365 = vld [vmem:[#allocation2 + $0x8] sm:$0xff]
        %v4366 = vld [vmem:[#allocation2 + $0x10] sm:$0xff]
        %v4367 = vld [vmem:[#allocation2 + $0x18] sm:$0xff]
        %v4368 = vld [vmem:[#allocation2 + $0x20] sm:$0xff]
        %v4369 = vld [vmem:[#allocation2 + $0x28] sm:$0xff]
        %v4370 = vld [vmem:[#allocation2 + $0x30] sm:$0xff]
        %v4371 = vld [vmem:[#allocation2 + $0x38] sm:$0xff]
        %v4372 = vld [vmem:[#allocation2 + $0x40] sm:$0xff]
        %v4373 = vld [vmem:[#allocation2 + $0x48] sm:$0xff]
        %v4374 = vld [vmem:[#allocation2 + $0x50] sm:$0xff]
        %v4375 = vld [vmem:[#allocation2 + $0x58] sm:$0xff]
        %v4376 = vld [vmem:[#allocation2 + $0x60] sm:$0xff]
        %v4377 = vld [vmem:[#allocation2 + $0x68] sm:$0xff]
        %v4378 = vld [vmem:[#allocation2 + $0x70] sm:$0xff]
        %v4379 = vld [vmem:[#allocation2 + $0x78] sm:$0xff]
        %v4380 = vld [vmem:[#allocation2 + $0x80] sm:$0xff]
        %v4381 = vld [vmem:[#allocation2 + $0x88] sm:$0xff]
        %v4382 = vld [vmem:[#allocation2 + $0x90] sm:$0xff]
        %v4383 = vld [vmem:[#allocation2 + $0x98] sm:$0xff]
        %v4384 = vld [vmem:[#allocation2 + $0xa0] sm:$0xff]
        %v4385 = vld [vmem:[#allocation2 + $0xa8] sm:$0xff]
        %v4386 = vld [vmem:[#allocation2 + $0xb0] sm:$0xff]
        %v4387 = vld [vmem:[#allocation2 + $0xb8] sm:$0xff]
        %v4388 = vld [vmem:[#allocation2 + $0xc0] sm:$0xff]
        %v4389 = vld [vmem:[#allocation2 + $0xc8] sm:$0xff]
        %v4390 = vld [vmem:[#allocation2 + $0xd0] sm:$0xff]
        %v4391 = vld [vmem:[#allocation2 + $0xd8] sm:$0xff]
        %v4392 = vld [vmem:[#allocation2 + $0xe0] sm:$0xff]
        %v4393 = vld [vmem:[#allocation2 + $0xe8] sm:$0xff]
        %v4394 = vld [vmem:[#allocation2 + $0xf0] sm:$0xff]
        %v4395 = vld [vmem:[#allocation2 + $0xf8] sm:$0xff]
        %v4396 = vld [vmem:[#allocation2 + $0x100] sm:$0xff]
        %v4397 = vld [vmem:[#allocation2 + $0x108] sm:$0xff]
        %v4398 = vld [vmem:[#allocation2 + $0x110] sm:$0xff]
        %v4399 = vld [vmem:[#allocation2 + $0x118] sm:$0xff]
        %v4400 = vld [vmem:[#allocation2 + $0x120] sm:$0xff]
        %v4401 = vld [vmem:[#allocation2 + $0x128] sm:$0xff]
        %v4402 = vld [vmem:[#allocation2 + $0x130] sm:$0xff]
        %v4403 = vld [vmem:[#allocation2 + $0x138] sm:$0xff]
        %v4404 = vld [vmem:[#allocation2 + $0x140] sm:$0xff]
        %v4405 = vld [vmem:[#allocation2 + $0x148] sm:$0xff]
        %v4406 = vld [vmem:[#allocation2 + $0x150] sm:$0xff]
        %v4407 = vld [vmem:[#allocation2 + $0x158] sm:$0xff]
        %v4408 = vld [vmem:[#allocation2 + $0x160] sm:$0xff]
        %v4409 = vld [vmem:[#allocation2 + $0x168] sm:$0xff]
        %v4410 = vld [vmem:[#allocation2 + $0x170] sm:$0xff]
        %v4411 = vld [vmem:[#allocation2 + $0x178] sm:$0xff]
        %v4413 = vsel %vm265, %v4315, 0
        %v4416 = vsel %vm265, %v4316, 0
        %v4419 = vsel %vm265, %v4317, 0
        %v4422 = vsel %vm265, %v4318, 0
        %v4425 = vsel %vm265, %v4319, 0
        %v4428 = vsel %vm265, %v4320, 0
        %v4431 = vsel %vm265, %v4321, 0
        %v4434 = vsel %vm265, %v4322, 0
        %v4437 = vsel %vm265, %v4323, 0
        %v4440 = vsel %vm265, %v4324, 0
        %v4443 = vsel %vm265, %v4325, 0
        %v4446 = vsel %vm265, %v4326, 0
        %v4449 = vsel %vm265, %v4327, 0
        %v4452 = vsel %vm265, %v4328, 0
        %v4455 = vsel %vm265, %v4329, 0
        %v4458 = vsel %vm265, %v4330, 0
        %v4461 = vsel %vm265, %v4331, 0
        %v4464 = vsel %vm265, %v4332, 0
        %v4467 = vsel %vm265, %v4333, 0
        %v4470 = vsel %vm265, %v4334, 0
        %v4473 = vsel %vm265, %v4335, 0
        %v4476 = vsel %vm265, %v4336, 0
        %v4479 = vsel %vm265, %v4337, 0
        %v4482 = vsel %vm265, %v4338, 0
        %v4485 = vsel %vm265, %v4339, 0
        %v4488 = vsel %vm265, %v4340, 0
        %v4491 = vsel %vm265, %v4341, 0
        %v4494 = vsel %vm265, %v4342, 0
        %v4497 = vsel %vm265, %v4343, 0
        %v4500 = vsel %vm265, %v4344, 0
        %v4503 = vsel %vm265, %v4345, 0
        %v4506 = vsel %vm265, %v4346, 0
        %v4509 = vsel %vm265, %v4347, 0
        %v4512 = vsel %vm265, %v4348, 0
        %v4515 = vsel %vm265, %v4349, 0
        %v4518 = vsel %vm265, %v4350, 0
        %v4521 = vsel %vm265, %v4351, 0
        %v4524 = vsel %vm265, %v4352, 0
        %v4527 = vsel %vm265, %v4353, 0
        %v4530 = vsel %vm265, %v4354, 0
        %v4533 = vsel %vm265, %v4355, 0
        %v4536 = vsel %vm265, %v4356, 0
        %v4539 = vsel %vm265, %v4357, 0
        %v4542 = vsel %vm265, %v4358, 0
        %v4545 = vsel %vm265, %v4359, 0
        %v4548 = vsel %vm265, %v4360, 0
        %v4551 = vsel %vm265, %v4361, 0
        %v4554 = vsel %vm265, %v4362, 0
        %4556 = vmatpush.msra.mxu0 0.0
        %4557 = vmatpush.msra.mxu0 0.0
        %4558 = vmatpush.msra.mxu0 0.0
        %4559 = vmatpush.msra.mxu0 0.0
        %4560 = vmatpush.msra.mxu0 0.0
        %4561 = vmatpush.msra.mxu0 0.0
        %4562 = vmatpush.msra.mxu0 0.0
        %4563 = vmatpush.msra.mxu0 0.0
        %4564 = vmatpush.msra.mxu0 0.0
        %4565 = vmatpush.msra.mxu0 0.0
        %4566 = vmatpush.msra.mxu0 0.0
        %4567 = vmatpush.msra.mxu0 0.0
        %4568 = vmatpush.msra.mxu0 0.0
        %4569 = vmatpush.msra.mxu0 0.0
        %4570 = vmatpush.msra.mxu0 0.0
        %4571 = vmatpush.msra.mxu0 %v4363
        %4572 = vmatmul.f32.gmra.mxu0 %v4413
        %v4573 = vpop.f32.mrf.mxu0
        %v4574 = vadd.f32 0.0, %v4573
        %4575 = vmatmul.f32.gmra.mxu0 %v4416
        %v4576 = vpop.f32.mrf.mxu0
        %v4577 = vadd.f32 0.0, %v4576
        %4578 = vmatmul.f32.gmra.mxu0 %v4419
        %v4579 = vpop.f32.mrf.mxu0
        %v4580 = vadd.f32 0.0, %v4579
        %4581 = vmatmul.f32.gmra.mxu0 %v4422
        %v4582 = vpop.f32.mrf.mxu0
        %v4583 = vadd.f32 0.0, %v4582
        %4584 = vmatmul.f32.gmra.mxu0 %v4425
        %v4585 = vpop.f32.mrf.mxu0
        %v4586 = vadd.f32 0.0, %v4585
        %4587 = vmatmul.f32.gmra.mxu0 %v4428
        %v4588 = vpop.f32.mrf.mxu0
        %v4589 = vadd.f32 0.0, %v4588
        %4590 = vmatmul.f32.gmra.mxu0 %v4431
        %v4591 = vpop.f32.mrf.mxu0
        %v4592 = vadd.f32 0.0, %v4591
        %4593 = vmatmul.f32.gmra.mxu0 %v4434
        %v4594 = vpop.f32.mrf.mxu0
        %v4595 = vadd.f32 0.0, %v4594
        %4596 = vmatmul.f32.gmra.mxu0 %v4437
        %v4597 = vpop.f32.mrf.mxu0
        %v4598 = vadd.f32 0.0, %v4597
        %4599 = vmatmul.f32.gmra.mxu0 %v4440
        %v4600 = vpop.f32.mrf.mxu0
        %v4601 = vadd.f32 0.0, %v4600
        %4602 = vmatmul.f32.gmra.mxu0 %v4443
        %v4603 = vpop.f32.mrf.mxu0
        %v4604 = vadd.f32 0.0, %v4603
        %4605 = vmatmul.f32.gmra.mxu0 %v4446
        %v4606 = vpop.f32.mrf.mxu0
        %v4607 = vadd.f32 0.0, %v4606
        %4608 = vmatmul.f32.gmra.mxu0 %v4449
        %v4609 = vpop.f32.mrf.mxu0
        %v4610 = vadd.f32 0.0, %v4609
        %4611 = vmatmul.f32.gmra.mxu0 %v4452
        %v4612 = vpop.f32.mrf.mxu0
        %v4613 = vadd.f32 0.0, %v4612
        %4614 = vmatmul.f32.gmra.mxu0 %v4455
        %v4615 = vpop.f32.mrf.mxu0
        %v4616 = vadd.f32 0.0, %v4615
        %4617 = vmatmul.f32.gmra.mxu0 %v4458
        %v4618 = vpop.f32.mrf.mxu0
        %v4619 = vadd.f32 0.0, %v4618
        %4620 = vmatmul.f32.gmra.mxu0 %v4461
        %v4621 = vpop.f32.mrf.mxu0
        %v4622 = vadd.f32 0.0, %v4621
        %4623 = vmatmul.f32.gmra.mxu0 %v4464
        %v4624 = vpop.f32.mrf.mxu0
        %v4625 = vadd.f32 0.0, %v4624
        %4626 = vmatmul.f32.gmra.mxu0 %v4467
        %v4627 = vpop.f32.mrf.mxu0
        %v4628 = vadd.f32 0.0, %v4627
        %4629 = vmatmul.f32.gmra.mxu0 %v4470
        %v4630 = vpop.f32.mrf.mxu0
        %v4631 = vadd.f32 0.0, %v4630
        %4632 = vmatmul.f32.gmra.mxu0 %v4473
        %v4633 = vpop.f32.mrf.mxu0
        %v4634 = vadd.f32 0.0, %v4633
        %4635 = vmatmul.f32.gmra.mxu0 %v4476
        %v4636 = vpop.f32.mrf.mxu0
        %v4637 = vadd.f32 0.0, %v4636
        %4638 = vmatmul.f32.gmra.mxu0 %v4479
        %v4639 = vpop.f32.mrf.mxu0
        %v4640 = vadd.f32 0.0, %v4639
        %4641 = vmatmul.f32.gmra.mxu0 %v4482
        %v4642 = vpop.f32.mrf.mxu0
        %v4643 = vadd.f32 0.0, %v4642
        %4644 = vmatmul.f32.gmra.mxu0 %v4485
        %v4645 = vpop.f32.mrf.mxu0
        %v4646 = vadd.f32 0.0, %v4645
        %4647 = vmatmul.f32.gmra.mxu0 %v4488
        %v4648 = vpop.f32.mrf.mxu0
        %v4649 = vadd.f32 0.0, %v4648
        %4650 = vmatmul.f32.gmra.mxu0 %v4491
        %v4651 = vpop.f32.mrf.mxu0
        %v4652 = vadd.f32 0.0, %v4651
        %4653 = vmatmul.f32.gmra.mxu0 %v4494
        %v4654 = vpop.f32.mrf.mxu0
        %v4655 = vadd.f32 0.0, %v4654
        %4656 = vmatmul.f32.gmra.mxu0 %v4497
        %v4657 = vpop.f32.mrf.mxu0
        %v4658 = vadd.f32 0.0, %v4657
        %4659 = vmatmul.f32.gmra.mxu0 %v4500
        %v4660 = vpop.f32.mrf.mxu0
        %v4661 = vadd.f32 0.0, %v4660
        %4662 = vmatmul.f32.gmra.mxu0 %v4503
        %v4663 = vpop.f32.mrf.mxu0
        %v4664 = vadd.f32 0.0, %v4663
        %4665 = vmatmul.f32.gmra.mxu0 %v4506
        %v4666 = vpop.f32.mrf.mxu0
        %v4667 = vadd.f32 0.0, %v4666
        %4668 = vmatmul.f32.gmra.mxu0 %v4509
        %v4669 = vpop.f32.mrf.mxu0
        %v4670 = vadd.f32 0.0, %v4669
        %4671 = vmatmul.f32.gmra.mxu0 %v4512
        %v4672 = vpop.f32.mrf.mxu0
        %v4673 = vadd.f32 0.0, %v4672
        %4674 = vmatmul.f32.gmra.mxu0 %v4515
        %v4675 = vpop.f32.mrf.mxu0
        %v4676 = vadd.f32 0.0, %v4675
        %4677 = vmatmul.f32.gmra.mxu0 %v4518
        %v4678 = vpop.f32.mrf.mxu0
        %v4679 = vadd.f32 0.0, %v4678
        %4680 = vmatmul.f32.gmra.mxu0 %v4521
        %v4681 = vpop.f32.mrf.mxu0
        %v4682 = vadd.f32 0.0, %v4681
        %4683 = vmatmul.f32.gmra.mxu0 %v4524
        %v4684 = vpop.f32.mrf.mxu0
        %v4685 = vadd.f32 0.0, %v4684
        %4686 = vmatmul.f32.gmra.mxu0 %v4527
        %v4687 = vpop.f32.mrf.mxu0
        %v4688 = vadd.f32 0.0, %v4687
        %4689 = vmatmul.f32.gmra.mxu0 %v4530
        %v4690 = vpop.f32.mrf.mxu0
        %v4691 = vadd.f32 0.0, %v4690
        %4692 = vmatmul.f32.gmra.mxu0 %v4533
        %v4693 = vpop.f32.mrf.mxu0
        %v4694 = vadd.f32 0.0, %v4693
        %4695 = vmatmul.f32.gmra.mxu0 %v4536
        %v4696 = vpop.f32.mrf.mxu0
        %v4697 = vadd.f32 0.0, %v4696
        %4698 = vmatmul.f32.gmra.mxu0 %v4539
        %v4699 = vpop.f32.mrf.mxu0
        %v4700 = vadd.f32 0.0, %v4699
        %4701 = vmatmul.f32.gmra.mxu0 %v4542
        %v4702 = vpop.f32.mrf.mxu0
        %v4703 = vadd.f32 0.0, %v4702
        %4704 = vmatmul.f32.gmra.mxu0 %v4545
        %v4705 = vpop.f32.mrf.mxu0
        %v4706 = vadd.f32 0.0, %v4705
        %4707 = vmatmul.f32.gmra.mxu0 %v4548
        %v4708 = vpop.f32.mrf.mxu0
        %v4709 = vadd.f32 0.0, %v4708
        %4710 = vmatmul.f32.gmra.mxu0 %v4551
        %v4711 = vpop.f32.mrf.mxu0
        %v4712 = vadd.f32 0.0, %v4711
        %4713 = vmatmul.f32.gmra.mxu0 %v4554
        %v4714 = vpop.f32.mrf.mxu0
        %v4715 = vadd.f32 0.0, %v4714
        %4716 = vdwg.mxu0
        %v4717 = vadd.f32 %v4364, %v4574
        %v4718 = vadd.f32 %v4365, %v4577
        %v4719 = vadd.f32 %v4366, %v4580
        %v4720 = vadd.f32 %v4367, %v4583
        %v4721 = vadd.f32 %v4368, %v4586
        %v4722 = vadd.f32 %v4369, %v4589
        %v4723 = vadd.f32 %v4370, %v4592
        %v4724 = vadd.f32 %v4371, %v4595
        %v4725 = vadd.f32 %v4372, %v4598
        %v4726 = vadd.f32 %v4373, %v4601
        %v4727 = vadd.f32 %v4374, %v4604
        %v4728 = vadd.f32 %v4375, %v4607
        %v4729 = vadd.f32 %v4376, %v4610
        %v4730 = vadd.f32 %v4377, %v4613
        %v4731 = vadd.f32 %v4378, %v4616
        %v4732 = vadd.f32 %v4379, %v4619
        %v4733 = vadd.f32 %v4380, %v4622
        %v4734 = vadd.f32 %v4381, %v4625
        %v4735 = vadd.f32 %v4382, %v4628
        %v4736 = vadd.f32 %v4383, %v4631
        %v4737 = vadd.f32 %v4384, %v4634
        %v4738 = vadd.f32 %v4385, %v4637
        %v4739 = vadd.f32 %v4386, %v4640
        %v4740 = vadd.f32 %v4387, %v4643
        %v4741 = vadd.f32 %v4388, %v4646
        %v4742 = vadd.f32 %v4389, %v4649
        %v4743 = vadd.f32 %v4390, %v4652
        %v4744 = vadd.f32 %v4391, %v4655
        %v4745 = vadd.f32 %v4392, %v4658
        %v4746 = vadd.f32 %v4393, %v4661
        %v4747 = vadd.f32 %v4394, %v4664
        %v4748 = vadd.f32 %v4395, %v4667
        %v4749 = vadd.f32 %v4396, %v4670
        %v4750 = vadd.f32 %v4397, %v4673
        %v4751 = vadd.f32 %v4398, %v4676
        %v4752 = vadd.f32 %v4399, %v4679
        %v4753 = vadd.f32 %v4400, %v4682
        %v4754 = vadd.f32 %v4401, %v4685
        %v4755 = vadd.f32 %v4402, %v4688
        %v4756 = vadd.f32 %v4403, %v4691
        %v4757 = vadd.f32 %v4404, %v4694
        %v4758 = vadd.f32 %v4405, %v4697
        %v4759 = vadd.f32 %v4406, %v4700
        %v4760 = vadd.f32 %v4407, %v4703
        %v4761 = vadd.f32 %v4408, %v4706
        %v4762 = vadd.f32 %v4409, %v4709
        %v4763 = vadd.f32 %v4410, %v4712
        %v4764 = vadd.f32 %v4411, %v4715
        %4765 = vst.msk [vmem:[#allocation2] sm:$0xff] %vm265, %v4717
        %4766 = vst.msk [vmem:[#allocation2 + $0x8] sm:$0xff] %vm265, %v4718
        %4767 = vst.msk [vmem:[#allocation2 + $0x10] sm:$0xff] %vm265, %v4719
        %4768 = vst.msk [vmem:[#allocation2 + $0x18] sm:$0xff] %vm265, %v4720
        %4769 = vst.msk [vmem:[#allocation2 + $0x20] sm:$0xff] %vm265, %v4721
        %4770 = vst.msk [vmem:[#allocation2 + $0x28] sm:$0xff] %vm265, %v4722
        %4771 = vst.msk [vmem:[#allocation2 + $0x30] sm:$0xff] %vm265, %v4723
        %4772 = vst.msk [vmem:[#allocation2 + $0x38] sm:$0xff] %vm265, %v4724
        %4773 = vst.msk [vmem:[#allocation2 + $0x40] sm:$0xff] %vm265, %v4725
        %4774 = vst.msk [vmem:[#allocation2 + $0x48] sm:$0xff] %vm265, %v4726
        %4775 = vst.msk [vmem:[#allocation2 + $0x50] sm:$0xff] %vm265, %v4727
        %4776 = vst.msk [vmem:[#allocation2 + $0x58] sm:$0xff] %vm265, %v4728
        %4777 = vst.msk [vmem:[#allocation2 + $0x60] sm:$0xff] %vm265, %v4729
        %4778 = vst.msk [vmem:[#allocation2 + $0x68] sm:$0xff] %vm265, %v4730
        %4779 = vst.msk [vmem:[#allocation2 + $0x70] sm:$0xff] %vm265, %v4731
        %4780 = vst.msk [vmem:[#allocation2 + $0x78] sm:$0xff] %vm265, %v4732
        %4781 = vst.msk [vmem:[#allocation2 + $0x80] sm:$0xff] %vm265, %v4733
        %4782 = vst.msk [vmem:[#allocation2 + $0x88] sm:$0xff] %vm265, %v4734
        %4783 = vst.msk [vmem:[#allocation2 + $0x90] sm:$0xff] %vm265, %v4735
        %4784 = vst.msk [vmem:[#allocation2 + $0x98] sm:$0xff] %vm265, %v4736
        %4785 = vst.msk [vmem:[#allocation2 + $0xa0] sm:$0xff] %vm265, %v4737
        %4786 = vst.msk [vmem:[#allocation2 + $0xa8] sm:$0xff] %vm265, %v4738
        %4787 = vst.msk [vmem:[#allocation2 + $0xb0] sm:$0xff] %vm265, %v4739
        %4788 = vst.msk [vmem:[#allocation2 + $0xb8] sm:$0xff] %vm265, %v4740
        %4789 = vst.msk [vmem:[#allocation2 + $0xc0] sm:$0xff] %vm265, %v4741
        %4790 = vst.msk [vmem:[#allocation2 + $0xc8] sm:$0xff] %vm265, %v4742
        %4791 = vst.msk [vmem:[#allocation2 + $0xd0] sm:$0xff] %vm265, %v4743
        %4792 = vst.msk [vmem:[#allocation2 + $0xd8] sm:$0xff] %vm265, %v4744
        %4793 = vst.msk [vmem:[#allocation2 + $0xe0] sm:$0xff] %vm265, %v4745
        %4794 = vst.msk [vmem:[#allocation2 + $0xe8] sm:$0xff] %vm265, %v4746
        %4795 = vst.msk [vmem:[#allocation2 + $0xf0] sm:$0xff] %vm265, %v4747
        %4796 = vst.msk [vmem:[#allocation2 + $0xf8] sm:$0xff] %vm265, %v4748
        %4797 = vst.msk [vmem:[#allocation2 + $0x100] sm:$0xff] %vm265, %v4749
        %4798 = vst.msk [vmem:[#allocation2 + $0x108] sm:$0xff] %vm265, %v4750
        %4799 = vst.msk [vmem:[#allocation2 + $0x110] sm:$0xff] %vm265, %v4751
        %4800 = vst.msk [vmem:[#allocation2 + $0x118] sm:$0xff] %vm265, %v4752
        %4801 = vst.msk [vmem:[#allocation2 + $0x120] sm:$0xff] %vm265, %v4753
        %4802 = vst.msk [vmem:[#allocation2 + $0x128] sm:$0xff] %vm265, %v4754
        %4803 = vst.msk [vmem:[#allocation2 + $0x130] sm:$0xff] %vm265, %v4755
        %4804 = vst.msk [vmem:[#allocation2 + $0x138] sm:$0xff] %vm265, %v4756
        %4805 = vst.msk [vmem:[#allocation2 + $0x140] sm:$0xff] %vm265, %v4757
        %4806 = vst.msk [vmem:[#allocation2 + $0x148] sm:$0xff] %vm265, %v4758
        %4807 = vst.msk [vmem:[#allocation2 + $0x150] sm:$0xff] %vm265, %v4759
        %4808 = vst.msk [vmem:[#allocation2 + $0x158] sm:$0xff] %vm265, %v4760
        %4809 = vst.msk [vmem:[#allocation2 + $0x160] sm:$0xff] %vm265, %v4761
        %4810 = vst.msk [vmem:[#allocation2 + $0x168] sm:$0xff] %vm265, %v4762
        %4811 = vst.msk [vmem:[#allocation2 + $0x170] sm:$0xff] %vm265, %v4763
        %4812 = vst.msk [vmem:[#allocation2 + $0x178] sm:$0xff] %vm265, %v4764
        %v4813 = vld [vmem:[#allocation2] sm:$0xff]
        %v4814 = vld [vmem:[#allocation2 + $0x8] sm:$0xff]
        %v4815 = vld [vmem:[#allocation2 + $0x10] sm:$0xff]
        %v4816 = vld [vmem:[#allocation2 + $0x18] sm:$0xff]
        %v4817 = vld [vmem:[#allocation2 + $0x20] sm:$0xff]
        %v4818 = vld [vmem:[#allocation2 + $0x28] sm:$0xff]
        %v4819 = vld [vmem:[#allocation2 + $0x30] sm:$0xff]
        %v4820 = vld [vmem:[#allocation2 + $0x38] sm:$0xff]
        %v4821 = vld [vmem:[#allocation2 + $0x40] sm:$0xff]
        %v4822 = vld [vmem:[#allocation2 + $0x48] sm:$0xff]
        %v4823 = vld [vmem:[#allocation2 + $0x50] sm:$0xff]
        %v4824 = vld [vmem:[#allocation2 + $0x58] sm:$0xff]
        %v4825 = vld [vmem:[#allocation2 + $0x60] sm:$0xff]
        %v4826 = vld [vmem:[#allocation2 + $0x68] sm:$0xff]
        %v4827 = vld [vmem:[#allocation2 + $0x70] sm:$0xff]
        %v4828 = vld [vmem:[#allocation2 + $0x78] sm:$0xff]
        %v4829 = vld [vmem:[#allocation2 + $0x80] sm:$0xff]
        %v4830 = vld [vmem:[#allocation2 + $0x88] sm:$0xff]
        %v4831 = vld [vmem:[#allocation2 + $0x90] sm:$0xff]
        %v4832 = vld [vmem:[#allocation2 + $0x98] sm:$0xff]
        %v4833 = vld [vmem:[#allocation2 + $0xa0] sm:$0xff]
        %v4834 = vld [vmem:[#allocation2 + $0xa8] sm:$0xff]
        %v4835 = vld [vmem:[#allocation2 + $0xb0] sm:$0xff]
        %v4836 = vld [vmem:[#allocation2 + $0xb8] sm:$0xff]
        %v4837 = vld [vmem:[#allocation2 + $0xc0] sm:$0xff]
        %v4838 = vld [vmem:[#allocation2 + $0xc8] sm:$0xff]
        %v4839 = vld [vmem:[#allocation2 + $0xd0] sm:$0xff]
        %v4840 = vld [vmem:[#allocation2 + $0xd8] sm:$0xff]
        %v4841 = vld [vmem:[#allocation2 + $0xe0] sm:$0xff]
        %v4842 = vld [vmem:[#allocation2 + $0xe8] sm:$0xff]
        %v4843 = vld [vmem:[#allocation2 + $0xf0] sm:$0xff]
        %v4844 = vld [vmem:[#allocation2 + $0xf8] sm:$0xff]
        %v4845 = vld [vmem:[#allocation2 + $0x100] sm:$0xff]
        %v4846 = vld [vmem:[#allocation2 + $0x108] sm:$0xff]
        %v4847 = vld [vmem:[#allocation2 + $0x110] sm:$0xff]
        %v4848 = vld [vmem:[#allocation2 + $0x118] sm:$0xff]
        %v4849 = vld [vmem:[#allocation2 + $0x120] sm:$0xff]
        %v4850 = vld [vmem:[#allocation2 + $0x128] sm:$0xff]
        %v4851 = vld [vmem:[#allocation2 + $0x130] sm:$0xff]
        %v4852 = vld [vmem:[#allocation2 + $0x138] sm:$0xff]
        %v4853 = vld [vmem:[#allocation2 + $0x140] sm:$0xff]
        %v4854 = vld [vmem:[#allocation2 + $0x148] sm:$0xff]
        %v4855 = vld [vmem:[#allocation2 + $0x150] sm:$0xff]
        %v4856 = vld [vmem:[#allocation2 + $0x158] sm:$0xff]
        %v4857 = vld [vmem:[#allocation2 + $0x160] sm:$0xff]
        %v4858 = vld [vmem:[#allocation2 + $0x168] sm:$0xff]
        %v4859 = vld [vmem:[#allocation2 + $0x170] sm:$0xff]
        %v4860 = vld [vmem:[#allocation2 + $0x178] sm:$0xff]
        %4861 = vxpose.xlu0.b32.start [1/16] %v4813, 128
        %4862 = vxpose.xlu0.b32.cont [2/16] %v4814, 128
        %4863 = vxpose.xlu0.b32.cont [3/16] %v4815, 128
        %4864 = vxpose.xlu0.b32.cont [4/16] %v4816, 128
        %4865 = vxpose.xlu0.b32.cont [5/16] %v4817, 128
        %4866 = vxpose.xlu0.b32.cont [6/16] %v4818, 128
        %4867 = vxpose.xlu0.b32.cont [7/16] %v4819, 128
        %4868 = vxpose.xlu0.b32.cont [8/16] %v4820, 128
        %4869 = vxpose.xlu0.b32.cont [9/16] %v4821, 128
        %4870 = vxpose.xlu0.b32.cont [10/16] %v4822, 128
        %4871 = vxpose.xlu0.b32.cont [11/16] %v4823, 128
        %4872 = vxpose.xlu0.b32.cont [12/16] %v4824, 128
        %4873 = vxpose.xlu0.b32.cont [13/16] %v4825, 128
        %4874 = vxpose.xlu0.b32.cont [14/16] %v4826, 128
        %4875 = vxpose.xlu0.b32.cont [15/16] %v4827, 128
        %4876 = vxpose.xlu0.b32.end [16/16] %v4828, 128
        %v4877 = vpop.trf.xlu0
        %v4878 = vpop.trf.xlu0
        %v4879 = vpop.trf.xlu0
        %v4880 = vpop.trf.xlu0
        %v4881 = vpop.trf.xlu0
        %v4882 = vpop.trf.xlu0
        %v4883 = vpop.trf.xlu0
        %v4884 = vpop.trf.xlu0
        %v4885 = vpop.trf.xlu0
        %v4886 = vpop.trf.xlu0
        %v4887 = vpop.trf.xlu0
        %v4888 = vpop.trf.xlu0
        %v4889 = vpop.trf.xlu0
        %v4890 = vpop.trf.xlu0
        %v4891 = vpop.trf.xlu0
        %v4892 = vpop.trf.xlu0
        %4893 = vxpose.xlu0.b32.start [1/16] %v4829, 128
        %4894 = vxpose.xlu0.b32.cont [2/16] %v4830, 128
        %4895 = vxpose.xlu0.b32.cont [3/16] %v4831, 128
        %4896 = vxpose.xlu0.b32.cont [4/16] %v4832, 128
        %4897 = vxpose.xlu0.b32.cont [5/16] %v4833, 128
        %4898 = vxpose.xlu0.b32.cont [6/16] %v4834, 128
        %4899 = vxpose.xlu0.b32.cont [7/16] %v4835, 128
        %4900 = vxpose.xlu0.b32.cont [8/16] %v4836, 128
        %4901 = vxpose.xlu0.b32.cont [9/16] %v4837, 128
        %4902 = vxpose.xlu0.b32.cont [10/16] %v4838, 128
        %4903 = vxpose.xlu0.b32.cont [11/16] %v4839, 128
        %4904 = vxpose.xlu0.b32.cont [12/16] %v4840, 128
        %4905 = vxpose.xlu0.b32.cont [13/16] %v4841, 128
        %4906 = vxpose.xlu0.b32.cont [14/16] %v4842, 128
        %4907 = vxpose.xlu0.b32.cont [15/16] %v4843, 128
        %4908 = vxpose.xlu0.b32.end [16/16] %v4844, 128
        %v4909 = vpop.trf.xlu0
        %v4910 = vpop.trf.xlu0
        %v4911 = vpop.trf.xlu0
        %v4912 = vpop.trf.xlu0
        %v4913 = vpop.trf.xlu0
        %v4914 = vpop.trf.xlu0
        %v4915 = vpop.trf.xlu0
        %v4916 = vpop.trf.xlu0
        %v4917 = vpop.trf.xlu0
        %v4918 = vpop.trf.xlu0
        %v4919 = vpop.trf.xlu0
        %v4920 = vpop.trf.xlu0
        %v4921 = vpop.trf.xlu0
        %v4922 = vpop.trf.xlu0
        %v4923 = vpop.trf.xlu0
        %v4924 = vpop.trf.xlu0
        %4925 = vxpose.xlu0.b32.start [1/16] %v4845, 128
        %4926 = vxpose.xlu0.b32.cont [2/16] %v4846, 128
        %4927 = vxpose.xlu0.b32.cont [3/16] %v4847, 128
        %4928 = vxpose.xlu0.b32.cont [4/16] %v4848, 128
        %4929 = vxpose.xlu0.b32.cont [5/16] %v4849, 128
        %4930 = vxpose.xlu0.b32.cont [6/16] %v4850, 128
        %4931 = vxpose.xlu0.b32.cont [7/16] %v4851, 128
        %4932 = vxpose.xlu0.b32.cont [8/16] %v4852, 128
        %4933 = vxpose.xlu0.b32.cont [9/16] %v4853, 128
        %4934 = vxpose.xlu0.b32.cont [10/16] %v4854, 128
        %4935 = vxpose.xlu0.b32.cont [11/16] %v4855, 128
        %4936 = vxpose.xlu0.b32.cont [12/16] %v4856, 128
        %4937 = vxpose.xlu0.b32.cont [13/16] %v4857, 128
        %4938 = vxpose.xlu0.b32.cont [14/16] %v4858, 128
        %4939 = vxpose.xlu0.b32.cont [15/16] %v4859, 128
        %4940 = vxpose.xlu0.b32.end [16/16] %v4860, 128
        %v4941 = vpop.trf.xlu0
        %v4942 = vpop.trf.xlu0
        %v4943 = vpop.trf.xlu0
        %v4944 = vpop.trf.xlu0
        %v4945 = vpop.trf.xlu0
        %v4946 = vpop.trf.xlu0
        %v4947 = vpop.trf.xlu0
        %v4948 = vpop.trf.xlu0
        %v4949 = vpop.trf.xlu0
        %v4950 = vpop.trf.xlu0
        %v4951 = vpop.trf.xlu0
        %v4952 = vpop.trf.xlu0
        %v4953 = vpop.trf.xlu0
        %v4954 = vpop.trf.xlu0
        %v4955 = vpop.trf.xlu0
        %v4956 = vpop.trf.xlu0
        %v4957 = vpack.c.bf16 %v4909, %v4877
        %v4958 = vpack.c.bf16 %v4941, %v4941
        %4959 = vst [vmem:[%s233] sm:$0xff] %v4957
        %4960 = vst [vmem:[%s233 + $0x8] sm:$0xf] %v4958
        %p4961 = scmp.eq.s32.totalorder %s25, 0
        // Predicated region
        $region33: #{tpu_custom_call.1} parent=31 // pred_check
          %p4962 = pneg %p4961
        $region34: #{tpu_custom_call.1} parent=31 // pred_check_branch
          %4964 = sbr.rel (%p4962) target = $region36
        $region35: #{tpu_custom_call.1} parent=31 // pred_region
          %4965 = vst.msk [vmem:[%s257] sm:$0xff] %vm265, 0.0
          %4966 = vst.msk [vmem:[%s261] sm:$0xff] %vm265, 0.0
        $region36: #{tpu_custom_call.1} parent=31 // pred_fallthru
          _
        %v4967 = vld [vmem:[%s250] sm:$0xff]
        %v4968 = vld [vmem:[%s250 + $0x8] sm:$0xff]
        %v4969 = vld [vmem:[%s250 + $0x10] sm:$0xff]
        %v4970 = vld [vmem:[%s250 + $0x18] sm:$0xff]
        %v4971 = vld [vmem:[%s250 + $0x20] sm:$0xff]
        %v4972 = vld [vmem:[%s250 + $0x28] sm:$0xff]
        %v4973 = vld [vmem:[%s250 + $0x30] sm:$0xff]
        %v4974 = vld [vmem:[%s250 + $0x38] sm:$0xff]
        %v4975 = vld [vmem:[%s250 + $0x40] sm:$0xff]
        %v4976 = vld [vmem:[%s250 + $0x48] sm:$0xff]
        %v4977 = vld [vmem:[%s250 + $0x50] sm:$0xff]
        %v4978 = vld [vmem:[%s250 + $0x58] sm:$0xff]
        %v4979 = vld [vmem:[%s250 + $0x60] sm:$0xff]
        %v4980 = vld [vmem:[%s250 + $0x68] sm:$0xff]
        %v4981 = vld [vmem:[%s250 + $0x70] sm:$0xff]
        %v4982 = vld [vmem:[%s250 + $0x78] sm:$0xff]
        %v4983 = vld [vmem:[%s250 + $0x80] sm:$0xff]
        %v4984 = vld [vmem:[%s250 + $0x88] sm:$0xff]
        %v4985 = vld [vmem:[%s250 + $0x90] sm:$0xff]
        %v4986 = vld [vmem:[%s250 + $0x98] sm:$0xff]
        %v4987 = vld [vmem:[%s250 + $0xa0] sm:$0xff]
        %v4988 = vld [vmem:[%s250 + $0xa8] sm:$0xff]
        %v4989 = vld [vmem:[%s250 + $0xb0] sm:$0xff]
        %v4990 = vld [vmem:[%s250 + $0xb8] sm:$0xff]
        %v4991 = vld [vmem:[%s250 + $0xc0] sm:$0xff]
        %v4992 = vld [vmem:[%s250 + $0xc8] sm:$0xff]
        %v4993 = vld [vmem:[%s250 + $0xd0] sm:$0xff]
        %v4994 = vld [vmem:[%s250 + $0xd8] sm:$0xff]
        %v4995 = vld [vmem:[%s250 + $0xe0] sm:$0xff]
        %v4996 = vld [vmem:[%s250 + $0xe8] sm:$0xff]
        %v4997 = vld [vmem:[%s250 + $0xf0] sm:$0xff]
        %v4998 = vld [vmem:[%s250 + $0xf8] sm:$0xff]
        %v4999 = vld [vmem:[%s250 + $0x100] sm:$0xff]
        %v5000 = vld [vmem:[%s250 + $0x108] sm:$0xff]
        %v5001 = vld [vmem:[%s250 + $0x110] sm:$0xff]
        %v5002 = vld [vmem:[%s250 + $0x118] sm:$0xff]
        %v5003 = vld [vmem:[%s250 + $0x120] sm:$0xff]
        %v5004 = vld [vmem:[%s250 + $0x128] sm:$0xff]
        %v5005 = vld [vmem:[%s250 + $0x130] sm:$0xff]
        %v5006 = vld [vmem:[%s250 + $0x138] sm:$0xff]
        %v5007 = vld [vmem:[%s250 + $0x140] sm:$0xff]
        %v5008 = vld [vmem:[%s250 + $0x148] sm:$0xff]
        %v5009 = vld [vmem:[%s250 + $0x150] sm:$0xff]
        %v5010 = vld [vmem:[%s250 + $0x158] sm:$0xff]
        %v5011 = vld [vmem:[%s250 + $0x160] sm:$0xff]
        %v5012 = vld [vmem:[%s250 + $0x168] sm:$0xff]
        %v5013 = vld [vmem:[%s250 + $0x170] sm:$0xff]
        %v5014 = vld [vmem:[%s250 + $0x178] sm:$0xff]
        %5016 = vset.pattern.permute.xlu0 0
        %5017 = vperm.xlu0 %5016, %v4967
        %v5018 = vpop.permute.xlu0 %5017
        %5021 = vset.pattern.permute.xlu0 0
        %5022 = vperm.xlu0 %5021, %v4968
        %v5023 = vpop.permute.xlu0 %5022
        %5026 = vset.pattern.permute.xlu0 0
        %5027 = vperm.xlu0 %5026, %v4969
        %v5028 = vpop.permute.xlu0 %5027
        %5031 = vset.pattern.permute.xlu0 0
        %5032 = vperm.xlu0 %5031, %v4970
        %v5033 = vpop.permute.xlu0 %5032
        %5036 = vset.pattern.permute.xlu0 0
        %5037 = vperm.xlu0 %5036, %v4971
        %v5038 = vpop.permute.xlu0 %5037
        %5041 = vset.pattern.permute.xlu0 0
        %5042 = vperm.xlu0 %5041, %v4972
        %v5043 = vpop.permute.xlu0 %5042
        %5046 = vset.pattern.permute.xlu0 0
        %5047 = vperm.xlu0 %5046, %v4973
        %v5048 = vpop.permute.xlu0 %5047
        %5051 = vset.pattern.permute.xlu0 0
        %5052 = vperm.xlu0 %5051, %v4974
        %v5053 = vpop.permute.xlu0 %5052
        %5056 = vset.pattern.permute.xlu0 0
        %5057 = vperm.xlu0 %5056, %v4975
        %v5058 = vpop.permute.xlu0 %5057
        %5061 = vset.pattern.permute.xlu0 0
        %5062 = vperm.xlu0 %5061, %v4976
        %v5063 = vpop.permute.xlu0 %5062
        %5066 = vset.pattern.permute.xlu0 0
        %5067 = vperm.xlu0 %5066, %v4977
        %v5068 = vpop.permute.xlu0 %5067
        %5071 = vset.pattern.permute.xlu0 0
        %5072 = vperm.xlu0 %5071, %v4978
        %v5073 = vpop.permute.xlu0 %5072
        %5076 = vset.pattern.permute.xlu0 0
        %5077 = vperm.xlu0 %5076, %v4979
        %v5078 = vpop.permute.xlu0 %5077
        %5081 = vset.pattern.permute.xlu0 0
        %5082 = vperm.xlu0 %5081, %v4980
        %v5083 = vpop.permute.xlu0 %5082
        %5086 = vset.pattern.permute.xlu0 0
        %5087 = vperm.xlu0 %5086, %v4981
        %v5088 = vpop.permute.xlu0 %5087
        %5091 = vset.pattern.permute.xlu0 0
        %5092 = vperm.xlu0 %5091, %v4982
        %v5093 = vpop.permute.xlu0 %5092
        %5096 = vset.pattern.permute.xlu0 0
        %5097 = vperm.xlu0 %5096, %v4983
        %v5098 = vpop.permute.xlu0 %5097
        %5101 = vset.pattern.permute.xlu0 0
        %5102 = vperm.xlu0 %5101, %v4984
        %v5103 = vpop.permute.xlu0 %5102
        %5106 = vset.pattern.permute.xlu0 0
        %5107 = vperm.xlu0 %5106, %v4985
        %v5108 = vpop.permute.xlu0 %5107
        %5111 = vset.pattern.permute.xlu0 0
        %5112 = vperm.xlu0 %5111, %v4986
        %v5113 = vpop.permute.xlu0 %5112
        %5116 = vset.pattern.permute.xlu0 0
        %5117 = vperm.xlu0 %5116, %v4987
        %v5118 = vpop.permute.xlu0 %5117
        %5121 = vset.pattern.permute.xlu0 0
        %5122 = vperm.xlu0 %5121, %v4988
        %v5123 = vpop.permute.xlu0 %5122
        %5126 = vset.pattern.permute.xlu0 0
        %5127 = vperm.xlu0 %5126, %v4989
        %v5128 = vpop.permute.xlu0 %5127
        %5131 = vset.pattern.permute.xlu0 0
        %5132 = vperm.xlu0 %5131, %v4990
        %v5133 = vpop.permute.xlu0 %5132
        %5136 = vset.pattern.permute.xlu0 0
        %5137 = vperm.xlu0 %5136, %v4991
        %v5138 = vpop.permute.xlu0 %5137
        %5141 = vset.pattern.permute.xlu0 0
        %5142 = vperm.xlu0 %5141, %v4992
        %v5143 = vpop.permute.xlu0 %5142
        %5146 = vset.pattern.permute.xlu0 0
        %5147 = vperm.xlu0 %5146, %v4993
        %v5148 = vpop.permute.xlu0 %5147
        %5151 = vset.pattern.permute.xlu0 0
        %5152 = vperm.xlu0 %5151, %v4994
        %v5153 = vpop.permute.xlu0 %5152
        %5156 = vset.pattern.permute.xlu0 0
        %5157 = vperm.xlu0 %5156, %v4995
        %v5158 = vpop.permute.xlu0 %5157
        %5161 = vset.pattern.permute.xlu0 0
        %5162 = vperm.xlu0 %5161, %v4996
        %v5163 = vpop.permute.xlu0 %5162
        %5166 = vset.pattern.permute.xlu0 0
        %5167 = vperm.xlu0 %5166, %v4997
        %v5168 = vpop.permute.xlu0 %5167
        %5171 = vset.pattern.permute.xlu0 0
        %5172 = vperm.xlu0 %5171, %v4998
        %v5173 = vpop.permute.xlu0 %5172
        %5176 = vset.pattern.permute.xlu0 0
        %5177 = vperm.xlu0 %5176, %v4999
        %v5178 = vpop.permute.xlu0 %5177
        %5181 = vset.pattern.permute.xlu0 0
        %5182 = vperm.xlu0 %5181, %v5000
        %v5183 = vpop.permute.xlu0 %5182
        %5186 = vset.pattern.permute.xlu0 0
        %5187 = vperm.xlu0 %5186, %v5001
        %v5188 = vpop.permute.xlu0 %5187
        %5191 = vset.pattern.permute.xlu0 0
        %5192 = vperm.xlu0 %5191, %v5002
        %v5193 = vpop.permute.xlu0 %5192
        %5196 = vset.pattern.permute.xlu0 0
        %5197 = vperm.xlu0 %5196, %v5003
        %v5198 = vpop.permute.xlu0 %5197
        %5201 = vset.pattern.permute.xlu0 0
        %5202 = vperm.xlu0 %5201, %v5004
        %v5203 = vpop.permute.xlu0 %5202
        %5206 = vset.pattern.permute.xlu0 0
        %5207 = vperm.xlu0 %5206, %v5005
        %v5208 = vpop.permute.xlu0 %5207
        %5211 = vset.pattern.permute.xlu0 0
        %5212 = vperm.xlu0 %5211, %v5006
        %v5213 = vpop.permute.xlu0 %5212
        %5216 = vset.pattern.permute.xlu0 0
        %5217 = vperm.xlu0 %5216, %v5007
        %v5218 = vpop.permute.xlu0 %5217
        %5221 = vset.pattern.permute.xlu0 0
        %5222 = vperm.xlu0 %5221, %v5008
        %v5223 = vpop.permute.xlu0 %5222
        %5226 = vset.pattern.permute.xlu0 0
        %5227 = vperm.xlu0 %5226, %v5009
        %v5228 = vpop.permute.xlu0 %5227
        %5231 = vset.pattern.permute.xlu0 0
        %5232 = vperm.xlu0 %5231, %v5010
        %v5233 = vpop.permute.xlu0 %5232
        %5236 = vset.pattern.permute.xlu0 0
        %5237 = vperm.xlu0 %5236, %v5011
        %v5238 = vpop.permute.xlu0 %5237
        %5241 = vset.pattern.permute.xlu0 0
        %5242 = vperm.xlu0 %5241, %v5012
        %v5243 = vpop.permute.xlu0 %5242
        %5246 = vset.pattern.permute.xlu0 0
        %5247 = vperm.xlu0 %5246, %v5013
        %v5248 = vpop.permute.xlu0 %5247
        %5251 = vset.pattern.permute.xlu0 0
        %5252 = vperm.xlu0 %5251, %v5014
        %v5253 = vpop.permute.xlu0 %5252
        %v5255 = vmul.f32 %v4813, %v5018
        %v5256 = vmul.f32 %v4814, %v5023
        %v5257 = vmul.f32 %v4815, %v5028
        %v5258 = vmul.f32 %v4816, %v5033
        %v5259 = vmul.f32 %v4817, %v5038
        %v5260 = vmul.f32 %v4818, %v5043
        %v5261 = vmul.f32 %v4819, %v5048
        %v5262 = vmul.f32 %v4820, %v5053
        %v5263 = vmul.f32 %v4821, %v5058
        %v5264 = vmul.f32 %v4822, %v5063
        %v5265 = vmul.f32 %v4823, %v5068
        %v5266 = vmul.f32 %v4824, %v5073
        %v5267 = vmul.f32 %v4825, %v5078
        %v5268 = vmul.f32 %v4826, %v5083
        %v5269 = vmul.f32 %v4827, %v5088
        %v5270 = vmul.f32 %v4828, %v5093
        %v5271 = vmul.f32 %v4829, %v5098
        %v5272 = vmul.f32 %v4830, %v5103
        %v5273 = vmul.f32 %v4831, %v5108
        %v5274 = vmul.f32 %v4832, %v5113
        %v5275 = vmul.f32 %v4833, %v5118
        %v5276 = vmul.f32 %v4834, %v5123
        %v5277 = vmul.f32 %v4835, %v5128
        %v5278 = vmul.f32 %v4836, %v5133
        %v5279 = vmul.f32 %v4837, %v5138
        %v5280 = vmul.f32 %v4838, %v5143
        %v5281 = vmul.f32 %v4839, %v5148
        %v5282 = vmul.f32 %v4840, %v5153
        %v5283 = vmul.f32 %v4841, %v5158
        %v5284 = vmul.f32 %v4842, %v5163
        %v5285 = vmul.f32 %v4843, %v5168
        %v5286 = vmul.f32 %v4844, %v5173
        %v5287 = vmul.f32 %v4845, %v5178
        %v5288 = vmul.f32 %v4846, %v5183
        %v5289 = vmul.f32 %v4847, %v5188
        %v5290 = vmul.f32 %v4848, %v5193
        %v5291 = vmul.f32 %v4849, %v5198
        %v5292 = vmul.f32 %v4850, %v5203
        %v5293 = vmul.f32 %v4851, %v5208
        %v5294 = vmul.f32 %v4852, %v5213
        %v5295 = vmul.f32 %v4853, %v5218
        %v5296 = vmul.f32 %v4854, %v5223
        %v5297 = vmul.f32 %v4855, %v5228
        %v5298 = vmul.f32 %v4856, %v5233
        %v5299 = vmul.f32 %v4857, %v5238
        %v5300 = vmul.f32 %v4858, %v5243
        %v5301 = vmul.f32 %v4859, %v5248
        %v5302 = vmul.f32 %v4860, %v5253
        %v5303 = vld [vmem:[%s257] sm:$0xff]
        %v5304 = vsel %vm265, %v5255, 0.0
        %v5305 = vsel %vm265, %v5256, 0.0
        %v5306 = vadd.f32 %v5304, %v5305
        %v5307 = vsel %vm265, %v5257, 0.0
        %v5308 = vadd.f32 %v5306, %v5307
        %v5309 = vsel %vm265, %v5258, 0.0
        %v5310 = vadd.f32 %v5308, %v5309
        %v5311 = vsel %vm265, %v5259, 0.0
        %v5312 = vadd.f32 %v5310, %v5311
        %v5313 = vsel %vm265, %v5260, 0.0
        %v5314 = vadd.f32 %v5312, %v5313
        %v5315 = vsel %vm265, %v5261, 0.0
        %v5316 = vadd.f32 %v5314, %v5315
        %v5317 = vsel %vm265, %v5262, 0.0
        %v5318 = vadd.f32 %v5316, %v5317
        %v5319 = vsel %vm265, %v5263, 0.0
        %v5320 = vadd.f32 %v5318, %v5319
        %v5321 = vsel %vm265, %v5264, 0.0
        %v5322 = vadd.f32 %v5320, %v5321
        %v5323 = vsel %vm265, %v5265, 0.0
        %v5324 = vadd.f32 %v5322, %v5323
        %v5325 = vsel %vm265, %v5266, 0.0
        %v5326 = vadd.f32 %v5324, %v5325
        %v5327 = vsel %vm265, %v5267, 0.0
        %v5328 = vadd.f32 %v5326, %v5327
        %v5329 = vsel %vm265, %v5268, 0.0
        %v5330 = vadd.f32 %v5328, %v5329
        %v5331 = vsel %vm265, %v5269, 0.0
        %v5332 = vadd.f32 %v5330, %v5331
        %v5333 = vsel %vm265, %v5270, 0.0
        %v5334 = vadd.f32 %v5332, %v5333
        %v5335 = vsel %vm265, %v5271, 0.0
        %v5336 = vadd.f32 %v5334, %v5335
        %v5337 = vsel %vm265, %v5272, 0.0
        %v5338 = vadd.f32 %v5336, %v5337
        %v5339 = vsel %vm265, %v5273, 0.0
        %v5340 = vadd.f32 %v5338, %v5339
        %v5341 = vsel %vm265, %v5274, 0.0
        %v5342 = vadd.f32 %v5340, %v5341
        %v5343 = vsel %vm265, %v5275, 0.0
        %v5344 = vadd.f32 %v5342, %v5343
        %v5345 = vsel %vm265, %v5276, 0.0
        %v5346 = vadd.f32 %v5344, %v5345
        %v5347 = vsel %vm265, %v5277, 0.0
        %v5348 = vadd.f32 %v5346, %v5347
        %v5349 = vsel %vm265, %v5278, 0.0
        %v5350 = vadd.f32 %v5348, %v5349
        %v5351 = vsel %vm265, %v5279, 0.0
        %v5352 = vadd.f32 %v5350, %v5351
        %v5353 = vsel %vm265, %v5280, 0.0
        %v5354 = vadd.f32 %v5352, %v5353
        %v5355 = vsel %vm265, %v5281, 0.0
        %v5356 = vadd.f32 %v5354, %v5355
        %v5357 = vsel %vm265, %v5282, 0.0
        %v5358 = vadd.f32 %v5356, %v5357
        %v5359 = vsel %vm265, %v5283, 0.0
        %v5360 = vadd.f32 %v5358, %v5359
        %v5361 = vsel %vm265, %v5284, 0.0
        %v5362 = vadd.f32 %v5360, %v5361
        %v5363 = vsel %vm265, %v5285, 0.0
        %v5364 = vadd.f32 %v5362, %v5363
        %v5365 = vsel %vm265, %v5286, 0.0
        %v5366 = vadd.f32 %v5364, %v5365
        %v5367 = vsel %vm265, %v5287, 0.0
        %v5368 = vadd.f32 %v5366, %v5367
        %v5369 = vsel %vm265, %v5288, 0.0
        %v5370 = vadd.f32 %v5368, %v5369
        %v5371 = vsel %vm265, %v5289, 0.0
        %v5372 = vadd.f32 %v5370, %v5371
        %v5373 = vsel %vm265, %v5290, 0.0
        %v5374 = vadd.f32 %v5372, %v5373
        %v5375 = vsel %vm265, %v5291, 0.0
        %v5376 = vadd.f32 %v5374, %v5375
        %v5377 = vsel %vm265, %v5292, 0.0
        %v5378 = vadd.f32 %v5376, %v5377
        %v5379 = vsel %vm265, %v5293, 0.0
        %v5380 = vadd.f32 %v5378, %v5379
        %v5381 = vsel %vm265, %v5294, 0.0
        %v5382 = vadd.f32 %v5380, %v5381
        %v5383 = vsel %vm265, %v5295, 0.0
        %v5384 = vadd.f32 %v5382, %v5383
        %v5385 = vsel %vm265, %v5296, 0.0
        %v5386 = vadd.f32 %v5384, %v5385
        %v5387 = vsel %vm265, %v5297, 0.0
        %v5388 = vadd.f32 %v5386, %v5387
        %v5389 = vsel %vm265, %v5298, 0.0
        %v5390 = vadd.f32 %v5388, %v5389
        %v5391 = vsel %vm265, %v5299, 0.0
        %v5392 = vadd.f32 %v5390, %v5391
        %v5393 = vsel %vm265, %v5300, 0.0
        %v5394 = vadd.f32 %v5392, %v5393
        %v5395 = vsel %vm265, %v5301, 0.0
        %v5396 = vadd.f32 %v5394, %v5395
        %v5397 = vsel %vm265, %v5302, 0.0
        %v5398 = vadd.f32 %v5396, %v5397
        %v5399 = vadd.f32 %v5303, %v5398
        %5400 = vst.msk [vmem:[%s257] sm:$0xff] %vm265, %v5399
        %v5401 = vld [vmem:[%s261] sm:$0xff]
        %v5402 = vmul.f32 %v5255, %v5255
        %v5403 = vmul.f32 %v5256, %v5256
        %v5404 = vmul.f32 %v5257, %v5257
        %v5405 = vmul.f32 %v5258, %v5258
        %v5406 = vmul.f32 %v5259, %v5259
        %v5407 = vmul.f32 %v5260, %v5260
        %v5408 = vmul.f32 %v5261, %v5261
        %v5409 = vmul.f32 %v5262, %v5262
        %v5410 = vmul.f32 %v5263, %v5263
        %v5411 = vmul.f32 %v5264, %v5264
        %v5412 = vmul.f32 %v5265, %v5265
        %v5413 = vmul.f32 %v5266, %v5266
        %v5414 = vmul.f32 %v5267, %v5267
        %v5415 = vmul.f32 %v5268, %v5268
        %v5416 = vmul.f32 %v5269, %v5269
        %v5417 = vmul.f32 %v5270, %v5270
        %v5418 = vmul.f32 %v5271, %v5271
        %v5419 = vmul.f32 %v5272, %v5272
        %v5420 = vmul.f32 %v5273, %v5273
        %v5421 = vmul.f32 %v5274, %v5274
        %v5422 = vmul.f32 %v5275, %v5275
        %v5423 = vmul.f32 %v5276, %v5276
        %v5424 = vmul.f32 %v5277, %v5277
        %v5425 = vmul.f32 %v5278, %v5278
        %v5426 = vmul.f32 %v5279, %v5279
        %v5427 = vmul.f32 %v5280, %v5280
        %v5428 = vmul.f32 %v5281, %v5281
        %v5429 = vmul.f32 %v5282, %v5282
        %v5430 = vmul.f32 %v5283, %v5283
        %v5431 = vmul.f32 %v5284, %v5284
        %v5432 = vmul.f32 %v5285, %v5285
        %v5433 = vmul.f32 %v5286, %v5286
        %v5434 = vmul.f32 %v5287, %v5287
        %v5435 = vmul.f32 %v5288, %v5288
        %v5436 = vmul.f32 %v5289, %v5289
        %v5437 = vmul.f32 %v5290, %v5290
        %v5438 = vmul.f32 %v5291, %v5291
        %v5439 = vmul.f32 %v5292, %v5292
        %v5440 = vmul.f32 %v5293, %v5293
        %v5441 = vmul.f32 %v5294, %v5294
        %v5442 = vmul.f32 %v5295, %v5295
        %v5443 = vmul.f32 %v5296, %v5296
        %v5444 = vmul.f32 %v5297, %v5297
        %v5445 = vmul.f32 %v5298, %v5298
        %v5446 = vmul.f32 %v5299, %v5299
        %v5447 = vmul.f32 %v5300, %v5300
        %v5448 = vmul.f32 %v5301, %v5301
        %v5449 = vmul.f32 %v5302, %v5302
        %v5450 = vsel %vm265, %v5402, 0.0
        %v5451 = vsel %vm265, %v5403, 0.0
        %v5452 = vadd.f32 %v5450, %v5451
        %v5453 = vsel %vm265, %v5404, 0.0
        %v5454 = vadd.f32 %v5452, %v5453
        %v5455 = vsel %vm265, %v5405, 0.0
        %v5456 = vadd.f32 %v5454, %v5455
        %v5457 = vsel %vm265, %v5406, 0.0
        %v5458 = vadd.f32 %v5456, %v5457
        %v5459 = vsel %vm265, %v5407, 0.0
        %v5460 = vadd.f32 %v5458, %v5459
        %v5461 = vsel %vm265, %v5408, 0.0
        %v5462 = vadd.f32 %v5460, %v5461
        %v5463 = vsel %vm265, %v5409, 0.0
        %v5464 = vadd.f32 %v5462, %v5463
        %v5465 = vsel %vm265, %v5410, 0.0
        %v5466 = vadd.f32 %v5464, %v5465
        %v5467 = vsel %vm265, %v5411, 0.0
        %v5468 = vadd.f32 %v5466, %v5467
        %v5469 = vsel %vm265, %v5412, 0.0
        %v5470 = vadd.f32 %v5468, %v5469
        %v5471 = vsel %vm265, %v5413, 0.0
        %v5472 = vadd.f32 %v5470, %v5471
        %v5473 = vsel %vm265, %v5414, 0.0
        %v5474 = vadd.f32 %v5472, %v5473
        %v5475 = vsel %vm265, %v5415, 0.0
        %v5476 = vadd.f32 %v5474, %v5475
        %v5477 = vsel %vm265, %v5416, 0.0
        %v5478 = vadd.f32 %v5476, %v5477
        %v5479 = vsel %vm265, %v5417, 0.0
        %v5480 = vadd.f32 %v5478, %v5479
        %v5481 = vsel %vm265, %v5418, 0.0
        %v5482 = vadd.f32 %v5480, %v5481
        %v5483 = vsel %vm265, %v5419, 0.0
        %v5484 = vadd.f32 %v5482, %v5483
        %v5485 = vsel %vm265, %v5420, 0.0
        %v5486 = vadd.f32 %v5484, %v5485
        %v5487 = vsel %vm265, %v5421, 0.0
        %v5488 = vadd.f32 %v5486, %v5487
        %v5489 = vsel %vm265, %v5422, 0.0
        %v5490 = vadd.f32 %v5488, %v5489
        %v5491 = vsel %vm265, %v5423, 0.0
        %v5492 = vadd.f32 %v5490, %v5491
        %v5493 = vsel %vm265, %v5424, 0.0
        %v5494 = vadd.f32 %v5492, %v5493
        %v5495 = vsel %vm265, %v5425, 0.0
        %v5496 = vadd.f32 %v5494, %v5495
        %v5497 = vsel %vm265, %v5426, 0.0
        %v5498 = vadd.f32 %v5496, %v5497
        %v5499 = vsel %vm265, %v5427, 0.0
        %v5500 = vadd.f32 %v5498, %v5499
        %v5501 = vsel %vm265, %v5428, 0.0
        %v5502 = vadd.f32 %v5500, %v5501
        %v5503 = vsel %vm265, %v5429, 0.0
        %v5504 = vadd.f32 %v5502, %v5503
        %v5505 = vsel %vm265, %v5430, 0.0
        %v5506 = vadd.f32 %v5504, %v5505
        %v5507 = vsel %vm265, %v5431, 0.0
        %v5508 = vadd.f32 %v5506, %v5507
        %v5509 = vsel %vm265, %v5432, 0.0
        %v5510 = vadd.f32 %v5508, %v5509
        %v5511 = vsel %vm265, %v5433, 0.0
        %v5512 = vadd.f32 %v5510, %v5511
        %v5513 = vsel %vm265, %v5434, 0.0
        %v5514 = vadd.f32 %v5512, %v5513
        %v5515 = vsel %vm265, %v5435, 0.0
        %v5516 = vadd.f32 %v5514, %v5515
        %v5517 = vsel %vm265, %v5436, 0.0
        %v5518 = vadd.f32 %v5516, %v5517
        %v5519 = vsel %vm265, %v5437, 0.0
        %v5520 = vadd.f32 %v5518, %v5519
        %v5521 = vsel %vm265, %v5438, 0.0
        %v5522 = vadd.f32 %v5520, %v5521
        %v5523 = vsel %vm265, %v5439, 0.0
        %v5524 = vadd.f32 %v5522, %v5523
        %v5525 = vsel %vm265, %v5440, 0.0
        %v5526 = vadd.f32 %v5524, %v5525
        %v5527 = vsel %vm265, %v5441, 0.0
        %v5528 = vadd.f32 %v5526, %v5527
        %v5529 = vsel %vm265, %v5442, 0.0
        %v5530 = vadd.f32 %v5528, %v5529
        %v5531 = vsel %vm265, %v5443, 0.0
        %v5532 = vadd.f32 %v5530, %v5531
        %v5533 = vsel %vm265, %v5444, 0.0
        %v5534 = vadd.f32 %v5532, %v5533
        %v5535 = vsel %vm265, %v5445, 0.0
        %v5536 = vadd.f32 %v5534, %v5535
        %v5537 = vsel %vm265, %v5446, 0.0
        %v5538 = vadd.f32 %v5536, %v5537
        %v5539 = vsel %vm265, %v5447, 0.0
        %v5540 = vadd.f32 %v5538, %v5539
        %v5541 = vsel %vm265, %v5448, 0.0
        %v5542 = vadd.f32 %v5540, %v5541
        %v5543 = vsel %vm265, %v5449, 0.0
        %v5544 = vadd.f32 %v5542, %v5543
        %v5545 = vadd.f32 %v5401, %v5544
        %5546 = vst.msk [vmem:[%s261] sm:$0xff] %vm265, %v5545
        %s5547 = sand.u32 %s110, 1
        %s5548 = scalar_lea.sflag [#allocation4], %s5547
        %s5549 = sand.u32 %s110, 1
        %s5550 = smul.addr %s5549, 12
        %s5551 = scalar_lea.vmem [#allocation3], %s5550
        %p5552 = scmp.lt.s32.totalorder %s24, 1
        %s5553 = scalar_select %p5552, %s24, 1
        %s5554 = smul.addr %s5553, 8
        %s5555 = scalar_lea.vmem %s4, %s5554
        %p5556 = scmp.lt.s32.totalorder %s24, 1
        %s5557 = scalar_select %p5556, %s24, 1
        %s5558 = smul.addr %s5557, 8
        %s5559 = scalar_lea.vmem %s5, %s5558
        // Predicated region
        $region37: #{tpu_custom_call.1} parent=31 // pred_check
          %p5560 = pneg %p120
        $region38: #{tpu_custom_call.1} parent=31 // pred_check_branch
          %5562 = sbr.rel (%p5560) target = $region40
        $region39: #{tpu_custom_call.1} parent=31 // pred_region
          %s5563 = sadd.s32 %s24, %s25
          %s5564 = smul.u32 3, %s5563
          %5566 = vsyncadd %s5548, 0
          %s5567 = smul.addr %s5564, 4
          %s5568 = scalar_lea.hbm %s3, %s5567
          %s5570 = sshll.u32 %s5551, 4
          %s5571 = int_to_ptr.vmem [resolvable:$true] %s5570
          %s5572 = sshll.u32 %s5568, 4
          %s5573 = int_to_ptr.hbm [resolvable:$true] %s5572
          %5575 = dma.vmem_to_hbm [thread:$0]  %s5571, 192, %s5573, %s5548
        $region40: #{tpu_custom_call.1} parent=31 // pred_fallthru
          _
        // Predicated region
        $region41: #{tpu_custom_call.1} parent=31 // pred_check
          %p5576 = pneg %p146
        $region42: #{tpu_custom_call.1} parent=31 // pred_check_branch
          %5578 = sbr.rel (%p5576) target = $region44
        $region43: #{tpu_custom_call.1} parent=31 // pred_region
          _
        $region44: #{tpu_custom_call.1} parent=31 // pred_fallthru
          _
        // Predicated region
        $region45: #{tpu_custom_call.1} parent=31 // pred_check
          %p5579 = pneg %p172
        $region46: #{tpu_custom_call.1} parent=31 // pred_check_branch
          %5581 = sbr.rel (%p5579) target = $region48
        $region47: #{tpu_custom_call.1} parent=31 // pred_region
          _
        $region48: #{tpu_custom_call.1} parent=31 // pred_fallthru
          _
      $region32: #{tpu_custom_call.1} parent=5 // pred_fallthru
        _
      %p5582 = scmp.le.s32.totalorder 2, %s15
      // Predicated region
      $region49: #{tpu_custom_call.1} parent=5 // pred_check
        %p5583 = pneg %p5582
      $region50: #{tpu_custom_call.1} parent=5 // pred_check_branch
        %5585 = sbr.rel (%p5583) target = $region52
      $region51: #{tpu_custom_call.1} parent=5 // pred_region
        %s5586 = ssub.s32 %s15, 2
        // Predicated region
        $region53: #{tpu_custom_call.1} parent=51 // pred_check
          %p5587 = pneg %p126
        $region54: #{tpu_custom_call.1} parent=51 // pred_check_branch
          %5589 = sbr.rel (%p5587) target = $region56
        $region55: #{tpu_custom_call.1} parent=51 // pred_region
          %s5590 = sand.u32 %s111, 1
          %s5591 = scalar_lea.sflag [#allocation4], %s5590
          %s5592 = sand.u32 %s111, 1
          %s5593 = smul.addr %s5592, 12
          %s5594 = scalar_lea.vmem [#allocation3], %s5593
          %5596 = dma.done %s5591, 192
        $region56: #{tpu_custom_call.1} parent=51 // pred_fallthru
          _
        // Predicated region
        $region57: #{tpu_custom_call.1} parent=51 // pred_check
          %p5597 = pneg %p152
        $region58: #{tpu_custom_call.1} parent=51 // pred_check_branch
          %5599 = sbr.rel (%p5597) target = $region60
        $region59: #{tpu_custom_call.1} parent=51 // pred_region
          %p5600 = scmp.lt.s32.totalorder %s26, 1
          %s5601 = scalar_select %p5600, %s26, 1
          %s5602 = smul.addr %s5601, 8
          %s5603 = scalar_lea.vmem %s4, %s5602
        $region60: #{tpu_custom_call.1} parent=51 // pred_fallthru
          _
        // Predicated region
        $region61: #{tpu_custom_call.1} parent=51 // pred_check
          %p5604 = pneg %p178
        $region62: #{tpu_custom_call.1} parent=51 // pred_check_branch
          %5606 = sbr.rel (%p5604) target = $region64
        $region63: #{tpu_custom_call.1} parent=51 // pred_region
          %p5607 = scmp.lt.s32.totalorder %s26, 1
          %s5608 = scalar_select %p5607, %s26, 1
          %s5609 = smul.addr %s5608, 8
          %s5610 = scalar_lea.vmem %s5, %s5609
        $region64: #{tpu_custom_call.1} parent=51 // pred_fallthru
          _
      $region52: #{tpu_custom_call.1} parent=5 // pred_fallthru
        _
    $region6: #{tpu_custom_call.1} parent=1 // loop_footer
      %s19 = sadd.s32 1, %s15
    $region7: #{tpu_custom_call.1} parent=1 // loop_footer_branch
      %14 = sbr.rel target = $region3
    $region8: #{tpu_custom_call.1} parent=1 // loop_exit
      _
    %5611 = vsyncpa [#allocation4], 1
    %s5612 = scalar_lea.sflag [#allocation4], 1
    %5613 = vsyncpa %s5612, 1

</llo_original>
